<compile_context>
chip_gen: v7x
topology: tpu7x:2x2x1
jax: 0.10.0
libtpu: 0.0.40
codegen_flags: <defaults>
</compile_context>

<pallas_src>
import functools

import numpy as np

import jax
import jax.numpy as jnp
from jax.experimental import pallas as pl
from jax.experimental.pallas import tpu as pltpu


BACKBONE_CHANNELS = (8, 16, 32)   # from Cin=4
NECK_IN_CHANNELS = (8, 16, 32)    # FuseNeck.in_channels
NECK_OUT_CHANNELS = 16
HEAD_IN_CHANNELS = (8, 16)        # ClsHead.in_channels
NUM_CLASSES = 10
LANE = 128


def _round_up(x, m):
    return (x + m - 1) // m * m


# --------------------------- the single fused kernel ---------------------------

def _one_stage_d_kernel(
    x_ref, labels_ref,
    w1_ref, b1_ref, w2_ref, b2_ref, w3_ref, b3_ref,
    wn_ref, bn_ref, wh_ref, bh_ref,
    loss_ref, fused_ref,
    *, inv_count,
):
    f32 = jnp.float32
    bf16 = jnp.bfloat16

    def dense_relu(a_bf16, w_ref, brow_ref):
        # folded conv stage: one bf16 MXU matmul (f32 accum) + f32 bias row + ReLU
        y = jnp.dot(a_bf16, w_ref[...], preferred_element_type=f32)
        return jnp.maximum(y + brow_ref[...], 0.0)

    # ---- backbone: three folded conv stages, activations stay in vregs/VMEM ----
    f0 = dense_relu(x_ref[...].astype(bf16), w1_ref, b1_ref)      # (N, 8*8*8)  f32
    f0b = f0.astype(bf16)
    f1 = dense_relu(f0b, w2_ref, b2_ref)                          # (N, 4*4*16) f32
    f1b = f1.astype(bf16)
    f2 = dense_relu(f1b, w3_ref, b3_ref)                          # (N, 2*2*32) f32
    f2b = f2.astype(bf16)

    # Shared activation slab: lane offsets 0 / 512 / 768 are 128-aligned, so this is a clean
    # vreg-aligned concat.  The head operator has zero rows for the f2 block.
    cat = jnp.concatenate([f0b, f1b, f2b], axis=1)                # (N, 896) bf16

    # ---- neck (FuseNeck): folded [1x1 conv + avg-pool-to-2x2 + branch sum] + ReLU ----
    fused_ref[...] = jnp.maximum(
        jnp.dot(cat, wn_ref[...], preferred_element_type=f32) + bn_ref[...], 0.0)

    # ---- head (ClsHead on [f0, f1]): folded [1x1 conv + global mean pool + branch sum] ----
    logits = jnp.dot(cat, wh_ref[...], preferred_element_type=f32) + bh_ref[...]   # (N, 128)

    # ---- loss: MSE(logits, labels); padded lanes are exactly zero on both sides ----
    d = logits - labels_ref[...]
    loss_ref[0, 0] = jnp.sum(d * d) * inv_count


# ------------------------- init-time parameter packing -------------------------

def _conv3x3s2_as_matmul(h_in, w_in, c_in, c_out, weight):
    """Fold a 3x3 / stride-2 / pad-1 conv into a dense operator on NHWC-flattened activations.

    weight: (9*c_in, c_out) with rows ordered (kh, kw, ci).
    Returns op of shape (h_in*w_in*c_in, h_out*w_out*c_out).
    """
    h_out, w_out = h_in // 2, w_in // 2
    wk = np.asarray(weight, np.float32).reshape(3, 3, c_in, c_out)
    op = np.zeros((h_in * w_in * c_in, h_out * w_out * c_out), np.float32)
    for i in range(h_out):
        for j in range(w_out):
            cols = slice((i * w_out + j) * c_out, (i * w_out + j + 1) * c_out)
            for di in range(3):
                r = 2 * i + di - 1
                if not 0 <= r < h_in:
                    continue
                for dj in range(3):
                    s = 2 * j + dj - 1
                    if not 0 <= s < w_in:
                        continue
                    rows = slice((r * w_in + s) * c_in, (r * w_in + s + 1) * c_in)
                    op[rows, cols] = wk[di, dj]
    return op


def _pool1x1_as_matmul(s_in, c_in, s_out, c_out, w1x1):
    """Fold [1x1 conv then adaptive-avg-pool s_in->s_out] into one dense operator.

    (Pooling and the 1x1 conv commute; both are linear.)  Assumes square spatial dims.
    w1x1: (c_in, c_out).  Returns op of shape (s_in*s_in*c_in, s_out*s_out*c_out).
    """
    win = s_in // s_out
    wk = np.asarray(w1x1, np.float32).reshape(c_in, c_out) / float(win * win)
    op = np.zeros((s_in * s_in * c_in, s_out * s_out * c_out), np.float32)
    for hh in range(s_in):
        for ww in range(s_in):
            a, b = hh // win, ww // win
            rows = slice((hh * s_in + ww) * c_in, (hh * s_in + ww + 1) * c_in)
            cols = slice((a * s_out + b) * c_out, (a * s_out + b + 1) * c_out)
            op[rows, cols] = wk
    return op


def init_params(key, cin=4):
    """Raw parameters in the same (kh*kw*ci, co) layout as before."""
    keys = iter(jax.random.split(key, 16))

    def wb(k, kh, kw, ci, co):
        kw_, kb_ = jax.random.split(k)
        fan_in = kh * kw * ci
        w = jax.random.normal(kw_, (fan_in, co), jnp.float32) / np.sqrt(fan_in)
        b = 0.1 * jax.random.normal(kb_, (co,), jnp.float32)
        return (w, b)

    params = {"backbone": [], "neck": [], "head": []}
    c_prev = cin
    for c_out in BACKBONE_CHANNELS:
        params["backbone"].append(wb(next(keys), 3, 3, c_prev, c_out))
        c_prev = c_out
    params["neck"] = [wb(next(keys), 1, 1, c, NECK_OUT_CHANNELS) for c in NECK_IN_CHANNELS]
    params["head"] = [wb(next(keys), 1, 1, c, NUM_CLASSES) for c in HEAD_IN_CHANNELS]
    return params


def pack_params(params, *, height, width, cin):
    """One-time host-side folding of all weights into batch-independent, lane-dense bf16 operands."""
    h_in, w_in, c_in = height, width, cin
    stages = []
    for (w, b), c_out in zip(params["backbone"], BACKBONE_CHANNELS):
        op = _conv3x3s2_as_matmul(h_in, w_in, c_in, c_out, np.asarray(w))
        h_out, w_out = h_in // 2, w_in // 2
        b_row = np.tile(np.asarray(b, np.float32), h_out * w_out).reshape(1, -1)
        stages.append((jnp.asarray(op, jnp.bfloat16), jnp.asarray(b_row, jnp.float32)))
        h_in, w_in, c_in = h_out, w_out, c_out

    s = (height // 2, height // 4, height // 8)       # spatial sizes of f0, f1, f2 (square input)
    t = s[-1]                                         # neck target spatial size
    k_total = sum(sk * sk * ck for sk, ck in zip(s, NECK_IN_CHANNELS))   # concat([f0,f1,f2]) width

    # --- neck: branch operators concatenated along K, output lanes padded to a 128 multiple ---
    fused_dim = t * t * NECK_OUT_CHANNELS
    fused_pad = _round_up(fused_dim, LANE)
    wn = np.zeros((k_total, fused_pad), np.float32)
    bn_row = np.zeros((1, fused_pad), np.float32)
    bias_sum = np.zeros((NECK_OUT_CHANNELS,), np.float32)
    off = 0
    for (w, b), sk, ck in zip(params["neck"], s, NECK_IN_CHANNELS):
        wn[off:off + sk * sk * ck, :fused_dim] = _pool1x1_as_matmul(
            sk, ck, t, NECK_OUT_CHANNELS, np.asarray(w))
        bias_sum += np.asarray(b, np.float32)
        off += sk * sk * ck
    bn_row[0, :fused_dim] = np.tile(bias_sum, t * t)

    # --- head: same folding; zero rows for the f2 block so it shares the neck's concat slab ---
    cls_pad = _round_up(NUM_CLASSES, LANE)
    wh = np.zeros((k_total, cls_pad), np.float32)
    bh_row = np.zeros((1, cls_pad), np.float32)
    bias_sum = np.zeros((NUM_CLASSES,), np.float32)
    off = 0
    for (w, b), sk, ck in zip(params["head"], s[:len(HEAD_IN_CHANNELS)], HEAD_IN_CHANNELS):
        wh[off:off + sk * sk * ck, :NUM_CLASSES] = _pool1x1_as_matmul(
            sk, ck, 1, NUM_CLASSES, np.asarray(w))
        bias_sum += np.asarray(b, np.float32)
        off += sk * sk * ck
    bh_row[0, :NUM_CLASSES] = bias_sum

    return {
        "stages": stages,
        "neck": (jnp.asarray(wn, jnp.bfloat16), jnp.asarray(bn_row, jnp.float32)),
        "head": (jnp.asarray(wh, jnp.bfloat16), jnp.asarray(bh_row, jnp.float32)),
    }


# -------------------------- OneStageD forward (fused) --------------------------

def one_stage_d_forward(packed, x_nchw, labels):
    """OneStageD.forward: returns w = loss(z, labels).

    The fused neck feature (computed in the forward pass but unused by the head, exactly as in
    the module) is also returned for verification.
    """
    n, c, h, w = x_nchw.shape
    t = h // 8
    fused_dim = t * t * NECK_OUT_CHANNELS

    (w1, b1), (w2, b2), (w3, b3) = packed["stages"]
    wn, bn_row = packed["neck"]
    wh, bh_row = packed["head"]
    fused_pad = wn.shape[1]
    cls_pad = wh.shape[1]

    # NCHW (PyTorch) -> NHWC-flattened (N, H*W*C); labels zero-padded to a full 128-lane row so
    # the in-kernel logits/labels math is lane-dense (padded lanes are 0 on both sides, so the
    # MSE sum is unchanged).
    x2d = jnp.transpose(x_nchw, (0, 2, 3, 1)).reshape(n, h * w * c)
    labels_pad = jnp.pad(labels, ((0, 0), (0, cls_pad - labels.shape[1])))

    kernel = functools.partial(_one_stage_d_kernel,
                               inv_count=1.0 / float(n * NUM_CLASSES))

    vmem = pl.BlockSpec(memory_space=pltpu.MemorySpace.VMEM)
    loss2d, fused_padded = pl.pallas_call(
        kernel,
        out_shape=(
            jax.ShapeDtypeStruct((1, 1), jnp.float32),          # MSE loss scalar
            jax.ShapeDtypeStruct((n, fused_pad), jnp.float32),  # fused neck feature, lane-dense
        ),
        in_specs=[vmem] * 12,
        out_specs=(
            pl.BlockSpec(memory_space=pltpu.MemorySpace.SMEM),  # scalar -> SMEM, no masked vst
            vmem,
        ),
    )(x2d, labels_pad, w1, b1, w2, b2, w3, b3, wn, bn_row, wh, bh_row)

    return loss2d[0, 0], fused_padded[:, :fused_dim]


# ----------------------- pure-JAX reference (same config) ----------------------

def reference_forward(params, x_nchw, labels):
    """Straightforward NHWC implementation in the original op order (conv -> pool)."""
    h = jnp.transpose(x_nchw, (0, 2, 3, 1))
    feats = []
    for (w, b), c_out in zip(params["backbone"], BACKBONE_CHANNELS):
        c_in = h.shape[-1]
        h = jax.lax.conv_general_dilated(
            h, w.reshape(3, 3, c_in, c_out), window_strides=(2, 2),
            padding=((1, 1), (1, 1)), dimension_numbers=("NHWC", "HWIO", "NHWC"))
        h = jnp.maximum(h + b, 0.0)
        feats.append(h)

    th, tw = feats[-1].shape[1:3]
    acc = 0.0
    for (w, b), f in zip(params["neck"], feats):
        g = jnp.einsum("nhwc,co->nhwo", f, w) + b
        nb, hh, ww, cc = g.shape
        g = g.reshape(nb, th, hh // th, tw, ww // tw, cc).mean(axis=(2, 4))
        acc = acc + g
    fused = jnp.maximum(acc, 0.0)

    logits = 0.0
    for (w, b), f in zip(params["head"], feats[:2]):
        g = jnp.einsum("nhwc,co->nhwo", f, w) + b
        logits = logits + g.mean(axis=(1, 2))

    loss = jnp.mean((logits - labels) ** 2)
    return loss, fused


# ----------------------------------- main ------------------------------------

if __name__ == "__main__":
    key = jax.random.PRNGKey(0)
    k_param, k_x, k_lbl = jax.random.split(key, 3)

    params = init_params(k_param, cin=4)
    packed = pack_params(params, height=16, width=16, cin=4)

    x = jax.random.normal(k_x, (2, 4, 16, 16), jnp.float32)          # NCHW, like PyTorch
    labels = jax.random.normal(k_lbl, (2, NUM_CLASSES), jnp.float32)

    fwd = jax.jit(one_stage_d_forward)
    loss, fused = fwd(packed, x, labels)
    jax.block_until_ready((loss, fused))

    # correctness check against the pure-JAX reference of the same module config.
    # bf16 MXU operands (f32 accumulation) -> 5e-2 tolerances are appropriate here.
    ref_loss, ref_fused = reference_forward(params, x, labels)
    ref_fused2d = ref_fused.reshape(fused.shape)

    assert loss.shape == () and bool(jnp.isfinite(loss))
    np.testing.assert_allclose(np.asarray(loss), np.asarray(ref_loss), rtol=5e-2, atol=5e-2)
    np.testing.assert_allclose(np.asarray(fused), np.asarray(ref_fused2d), rtol=5e-2, atol=5e-2)

    print("KERNEL_OK")
</pallas_src>

<mosaic_0001>
module attributes {stable_mosaic.version = 11 : i64} {
  func.func @_one_stage_d_kernel(%arg0: memref<2x1024xf32, #tpu.memory_space<vmem>>, %arg1: memref<2x128xf32, #tpu.memory_space<vmem>>, %arg2: memref<1024x512xbf16, #tpu.memory_space<vmem>>, %arg3: memref<1x512xf32, #tpu.memory_space<vmem>>, %arg4: memref<512x256xbf16, #tpu.memory_space<vmem>>, %arg5: memref<1x256xf32, #tpu.memory_space<vmem>>, %arg6: memref<256x128xbf16, #tpu.memory_space<vmem>>, %arg7: memref<1x128xf32, #tpu.memory_space<vmem>>, %arg8: memref<896x128xbf16, #tpu.memory_space<vmem>>, %arg9: memref<1x128xf32, #tpu.memory_space<vmem>>, %arg10: memref<896x128xbf16, #tpu.memory_space<vmem>>, %arg11: memref<1x128xf32, #tpu.memory_space<vmem>>, %arg12: memref<1x1xf32, #tpu.memory_space<smem>>, %arg13: memref<2x128xf32, #tpu.memory_space<vmem>>) attributes {dimension_semantics = [], scalar_prefetch = 0 : i64, scratch_operands = 0 : i64, tpu.core_type = #tpu.core_type<tc>} {
    %c0 = arith.constant 0 : index
    %c0_0 = arith.constant 0 : index
    %0 = vector.load %arg0[%c0, %c0_0] : memref<2x1024xf32, #tpu.memory_space<vmem>>, vector<2x1024xf32>
    %1 = arith.truncf %0 : vector<2x1024xf32> to vector<2x1024xbf16>
    %c0_1 = arith.constant 0 : index
    %c0_2 = arith.constant 0 : index
    %2 = vector.load %arg2[%c0_1, %c0_2] : memref<1024x512xbf16, #tpu.memory_space<vmem>>, vector<1024x512xbf16>
    %cst = arith.constant dense<0.000000e+00> : vector<2x512xf32>
    %3 = tpu.matmul %1, %2, %cst {dimension_numbers = #tpu.dot_dimension_numbers<[1], [0], [0], [1], [0, 0, 1, 1], [], []>} : vector<2x1024xbf16>, vector<1024x512xbf16>, vector<2x512xf32> -> vector<2x512xf32>
    %c0_3 = arith.constant 0 : index
    %c0_4 = arith.constant 0 : index
    %4 = vector.load %arg3[%c0_3, %c0_4] : memref<1x512xf32, #tpu.memory_space<vmem>>, vector<1x512xf32>
    %5 = vector.broadcast %4 : vector<1x512xf32> to vector<2x512xf32>
    %6 = arith.addf %3, %5 : vector<2x512xf32>
    %cst_5 = arith.constant 0.000000e+00 : f32
    %7 = vector.broadcast %cst_5 : f32 to vector<2x512xf32>
    %8 = arith.maximumf %6, %7 : vector<2x512xf32>
    %9 = arith.truncf %8 : vector<2x512xf32> to vector<2x512xbf16>
    %c0_6 = arith.constant 0 : index
    %c0_7 = arith.constant 0 : index
    %10 = vector.load %arg4[%c0_6, %c0_7] : memref<512x256xbf16, #tpu.memory_space<vmem>>, vector<512x256xbf16>
    %cst_8 = arith.constant dense<0.000000e+00> : vector<2x256xf32>
    %11 = tpu.matmul %9, %10, %cst_8 {dimension_numbers = #tpu.dot_dimension_numbers<[1], [0], [0], [1], [0, 0, 1, 1], [], []>} : vector<2x512xbf16>, vector<512x256xbf16>, vector<2x256xf32> -> vector<2x256xf32>
    %c0_9 = arith.constant 0 : index
    %c0_10 = arith.constant 0 : index
    %12 = vector.load %arg5[%c0_9, %c0_10] : memref<1x256xf32, #tpu.memory_space<vmem>>, vector<1x256xf32>
    %13 = vector.broadcast %12 : vector<1x256xf32> to vector<2x256xf32>
    %14 = arith.addf %11, %13 : vector<2x256xf32>
    %cst_11 = arith.constant 0.000000e+00 : f32
    %15 = vector.broadcast %cst_11 : f32 to vector<2x256xf32>
    %16 = arith.maximumf %14, %15 : vector<2x256xf32>
    %17 = arith.truncf %16 : vector<2x256xf32> to vector<2x256xbf16>
    %c0_12 = arith.constant 0 : index
    %c0_13 = arith.constant 0 : index
    %18 = vector.load %arg6[%c0_12, %c0_13] : memref<256x128xbf16, #tpu.memory_space<vmem>>, vector<256x128xbf16>
    %cst_14 = arith.constant dense<0.000000e+00> : vector<2x128xf32>
    %19 = tpu.matmul %17, %18, %cst_14 {dimension_numbers = #tpu.dot_dimension_numbers<[1], [0], [0], [1], [0, 0, 1, 1], [], []>} : vector<2x256xbf16>, vector<256x128xbf16>, vector<2x128xf32> -> vector<2x128xf32>
    %c0_15 = arith.constant 0 : index
    %c0_16 = arith.constant 0 : index
    %20 = vector.load %arg7[%c0_15, %c0_16] : memref<1x128xf32, #tpu.memory_space<vmem>>, vector<1x128xf32>
    %21 = vector.broadcast %20 : vector<1x128xf32> to vector<2x128xf32>
    %22 = arith.addf %19, %21 : vector<2x128xf32>
    %cst_17 = arith.constant 0.000000e+00 : f32
    %23 = vector.broadcast %cst_17 : f32 to vector<2x128xf32>
    %24 = arith.maximumf %22, %23 : vector<2x128xf32>
    %25 = arith.truncf %24 : vector<2x128xf32> to vector<2x128xbf16>
    %26 = tpu.concatenate %9, %17, %25 in 1 : vector<2x512xbf16>, vector<2x256xbf16>, vector<2x128xbf16> -> vector<2x896xbf16>
    %c0_18 = arith.constant 0 : index
    %c0_19 = arith.constant 0 : index
    %27 = vector.load %arg8[%c0_18, %c0_19] : memref<896x128xbf16, #tpu.memory_space<vmem>>, vector<896x128xbf16>
    %cst_20 = arith.constant dense<0.000000e+00> : vector<2x128xf32>
    %28 = tpu.matmul %26, %27, %cst_20 {dimension_numbers = #tpu.dot_dimension_numbers<[1], [0], [0], [1], [0, 0, 1, 1], [], []>} : vector<2x896xbf16>, vector<896x128xbf16>, vector<2x128xf32> -> vector<2x128xf32>
    %c0_21 = arith.constant 0 : index
    %c0_22 = arith.constant 0 : index
    %29 = vector.load %arg9[%c0_21, %c0_22] : memref<1x128xf32, #tpu.memory_space<vmem>>, vector<1x128xf32>
    %30 = vector.broadcast %29 : vector<1x128xf32> to vector<2x128xf32>
    %31 = arith.addf %28, %30 : vector<2x128xf32>
    %cst_23 = arith.constant 0.000000e+00 : f32
    %32 = vector.broadcast %cst_23 : f32 to vector<2x128xf32>
    %33 = arith.maximumf %31, %32 : vector<2x128xf32>
    %c0_24 = arith.constant 0 : index
    %c0_25 = arith.constant 0 : index
    %34 = vector.load %arg13[%c0_24, %c0_25] : memref<2x128xf32, #tpu.memory_space<vmem>>, vector<2x128xf32>
    tpu.vector_store %arg13[%c0_24, %c0_25], %33 {strides = array<i32>} : memref<2x128xf32, #tpu.memory_space<vmem>>, vector<2x128xf32>,
    %c0_26 = arith.constant 0 : index
    %c0_27 = arith.constant 0 : index
    %35 = vector.load %arg10[%c0_26, %c0_27] : memref<896x128xbf16, #tpu.memory_space<vmem>>, vector<896x128xbf16>
    %cst_28 = arith.constant dense<0.000000e+00> : vector<2x128xf32>
    %36 = tpu.matmul %26, %35, %cst_28 {dimension_numbers = #tpu.dot_dimension_numbers<[1], [0], [0], [1], [0, 0, 1, 1], [], []>} : vector<2x896xbf16>, vector<896x128xbf16>, vector<2x128xf32> -> vector<2x128xf32>
    %c0_29 = arith.constant 0 : index
    %c0_30 = arith.constant 0 : index
    %37 = vector.load %arg11[%c0_29, %c0_30] : memref<1x128xf32, #tpu.memory_space<vmem>>, vector<1x128xf32>
    %38 = vector.broadcast %37 : vector<1x128xf32> to vector<2x128xf32>
    %39 = arith.addf %36, %38 : vector<2x128xf32>
    %c0_31 = arith.constant 0 : index
    %c0_32 = arith.constant 0 : index
    %40 = vector.load %arg1[%c0_31, %c0_32] : memref<2x128xf32, #tpu.memory_space<vmem>>, vector<2x128xf32>
    %41 = arith.subf %39, %40 : vector<2x128xf32>
    %42 = arith.mulf %41, %41 : vector<2x128xf32>
    %43 = vector.shape_cast %42 : vector<2x128xf32> to vector<1x2x128xf32>
    %cst_33 = arith.constant dense<0.000000e+00> : vector<1xf32>
    %44 = vector.multi_reduction <add>, %43, %cst_33 [1, 2] : vector<1x2x128xf32> to vector<1xf32>
    %45 = vector.shape_cast %44 : vector<1xf32> to vector<1x1x1xf32>
    %46 = vector.extract %45[0, 0, 0] : f32 from vector<1x1x1xf32>
    %cst_34 = arith.constant 5.000000e-02 : f32
    %47 = arith.mulf %46, %cst_34 : f32
    %c0_35 = arith.constant 0 : index
    %c0_36 = arith.constant 0 : index
    %48 = memref.load %arg12[%c0_35, %c0_36] : memref<1x1xf32, #tpu.memory_space<smem>>
    memref.store %47, %arg12[%c0_35, %c0_36] : memref<1x1xf32, #tpu.memory_space<smem>>
    return
  }
}

</mosaic_0001>

<llo_original>
// kernel: one_stage_d_forward.1
$region0: #{one_stage_d_forward.1}
  #allocation0 [shape = 'u32[]', space=smem, size = 0x4, offset = 0x4, fixed_abs, tag = 'smem constant byte address 0x4 - core index']
  #allocation1 [shape = 'u32[144,128]{1,0:T(1,128)}', space=vmem, size = 0x12000, scoped, tag = 'internal scratch']
  %s0 = inlined_call_operand.vmem [shape: f32[2,1024], index: 0, kind: input, shape index: {}]
  %s1 = inlined_call_operand.vmem [shape: f32[2,128], index: 1, kind: input, shape index: {}]
  %s2 = inlined_call_operand.hbm [shape: bf16[1024,512], index: 2, kind: input, shape index: {}]
  %s3 = inlined_call_operand.vmem [shape: f32[1,512], index: 3, kind: input, shape index: {}]
  %s4 = inlined_call_operand.vmem [shape: bf16[512,256], index: 4, kind: input, shape index: {}]
  %s5 = inlined_call_operand.vmem [shape: f32[1,256], index: 5, kind: input, shape index: {}]
  %s6 = inlined_call_operand.vmem [shape: bf16[256,128], index: 6, kind: input, shape index: {}]
  %s7 = inlined_call_operand.vmem [shape: f32[1,128], index: 7, kind: input, shape index: {}]
  %s8 = inlined_call_operand.vmem [shape: bf16[896,128], index: 8, kind: input, shape index: {}]
  %s9 = inlined_call_operand.vmem [shape: f32[1,128], index: 9, kind: input, shape index: {}]
  %s10 = inlined_call_operand.hbm [shape: bf16[896,128], index: 10, kind: input, shape index: {}]
  %s11 = inlined_call_operand.vmem [shape: f32[1,128], index: 11, kind: input, shape index: {}]
  %s12 = inlined_call_operand.hbm [shape: f32[1,1], index: 12, kind: output, shape index: {0}]
  %s13 = inlined_call_operand.hbm [shape: f32[2,128], index: 13, kind: output, shape index: {1}]
  %14 = xla_tuple %s12, %s13
  %s15 = sld [smem:[#allocation0]]
  $region74: #{one_stage_d_forward.1} parent=0
    _
  %s17 = ssub.s32 1, %s15
  %s18 = scalar_select 0, %s17, %s15
  $region1: #{one_stage_d_forward.1} parent=0
    #allocation2 [shape = 'u8[1048576]{0}', space=vmem, size = 0x100000, scoped, tag = 'input window, operand 2, single buffered']
    #allocation3 [shape = 's32[1]{0}', space=sflag, size = 0x4, scoped, tag = 'scoped memory for one_stage_d_forward.1']
    #allocation4 [shape = 's32[1]{0}', space=sflag, size = 0x4, scoped, tag = 'scoped memory for one_stage_d_forward.1']
    #allocation5 [shape = 's32[1]{0}', space=sflag, size = 0x4, scoped, tag = 'scoped memory for one_stage_d_forward.1']
    #allocation6 [shape = 'u8[229376]{0}', space=vmem, size = 0x38000, scoped, tag = 'input window, operand 10, single buffered']
    #allocation7 [shape = 's32[1]{0}', space=sflag, size = 0x4, scoped, tag = 'scoped memory for one_stage_d_forward.1']
    #allocation8 [shape = 'u8[512]{0}', space=smem, size = 0x200, scoped, tag = 'output window, operand 0, single buffered']
    #allocation9 [shape = 'u8[1024]{0}', space=vmem, size = 0x400, scoped, tag = 'output window, operand 1, single buffered']
    %19 = vsyncpa [#allocation3], 0
    %20 = vsyncpa [#allocation7], 0
    %21 = vsyncpa [#allocation5], 0
    %22 = vsyncpa [#allocation4], 0
    // Predicated region
    $region2: #{one_stage_d_forward.1} parent=1 // pred_check
      _
    $region3: #{one_stage_d_forward.1} parent=1 // pred_check_branch
      %24 = sbr.rel (0) target = $region5
    $region4: #{one_stage_d_forward.1} parent=1 // pred_region
      _
    $region5: #{one_stage_d_forward.1} parent=1 // pred_fallthru
      _
    // Predicated region
    $region6: #{one_stage_d_forward.1} parent=1 // pred_check
      _
    $region7: #{one_stage_d_forward.1} parent=1 // pred_check_branch
      %26 = sbr.rel (0) target = $region9
    $region8: #{one_stage_d_forward.1} parent=1 // pred_region
      _
    $region9: #{one_stage_d_forward.1} parent=1 // pred_fallthru
      _
    // Predicated region
    $region10: #{one_stage_d_forward.1} parent=1 // pred_check
      _
    $region11: #{one_stage_d_forward.1} parent=1 // pred_check_branch
      %28 = sbr.rel (0) target = $region13
    $region12: #{one_stage_d_forward.1} parent=1 // pred_region
      %s30 = ssub.s32 32768, 32768
      %31 = vsyncadd [#allocation3], %s30
      %s32 = sshll.u32 [#allocation2], 4
      %s33 = int_to_ptr.vmem [resolvable:$true] %s32
      %38 = dma.hbm_to_vmem [thread:$0]  %s2, 32768, %s33, [#allocation3], 256, 256, 16
    $region13: #{one_stage_d_forward.1} parent=1 // pred_fallthru
      _
    // Predicated region
    $region14: #{one_stage_d_forward.1} parent=1 // pred_check
      _
    $region15: #{one_stage_d_forward.1} parent=1 // pred_check_branch
      %40 = sbr.rel (0) target = $region17
    $region16: #{one_stage_d_forward.1} parent=1 // pred_region
      _
    $region17: #{one_stage_d_forward.1} parent=1 // pred_fallthru
      _
    // Predicated region
    $region18: #{one_stage_d_forward.1} parent=1 // pred_check
      _
    $region19: #{one_stage_d_forward.1} parent=1 // pred_check_branch
      %42 = sbr.rel (0) target = $region21
    $region20: #{one_stage_d_forward.1} parent=1 // pred_region
      _
    $region21: #{one_stage_d_forward.1} parent=1 // pred_fallthru
      _
    // Predicated region
    $region22: #{one_stage_d_forward.1} parent=1 // pred_check
      _
    $region23: #{one_stage_d_forward.1} parent=1 // pred_check_branch
      %44 = sbr.rel (0) target = $region25
    $region24: #{one_stage_d_forward.1} parent=1 // pred_region
      _
    $region25: #{one_stage_d_forward.1} parent=1 // pred_fallthru
      _
    // Predicated region
    $region26: #{one_stage_d_forward.1} parent=1 // pred_check
      _
    $region27: #{one_stage_d_forward.1} parent=1 // pred_check_branch
      %46 = sbr.rel (0) target = $region29
    $region28: #{one_stage_d_forward.1} parent=1 // pred_region
      _
    $region29: #{one_stage_d_forward.1} parent=1 // pred_fallthru
      _
    // Predicated region
    $region30: #{one_stage_d_forward.1} parent=1 // pred_check
      _
    $region31: #{one_stage_d_forward.1} parent=1 // pred_check_branch
      %48 = sbr.rel (0) target = $region33
    $region32: #{one_stage_d_forward.1} parent=1 // pred_region
      _
    $region33: #{one_stage_d_forward.1} parent=1 // pred_fallthru
      _
    // Predicated region
    $region34: #{one_stage_d_forward.1} parent=1 // pred_check
      _
    $region35: #{one_stage_d_forward.1} parent=1 // pred_check_branch
      %50 = sbr.rel (0) target = $region37
    $region36: #{one_stage_d_forward.1} parent=1 // pred_region
      _
    $region37: #{one_stage_d_forward.1} parent=1 // pred_fallthru
      _
    // Predicated region
    $region38: #{one_stage_d_forward.1} parent=1 // pred_check
      _
    $region39: #{one_stage_d_forward.1} parent=1 // pred_check_branch
      %52 = sbr.rel (0) target = $region41
    $region40: #{one_stage_d_forward.1} parent=1 // pred_region
      _
    $region41: #{one_stage_d_forward.1} parent=1 // pred_fallthru
      _
    // Predicated region
    $region42: #{one_stage_d_forward.1} parent=1 // pred_check
      _
    $region43: #{one_stage_d_forward.1} parent=1 // pred_check_branch
      %54 = sbr.rel (0) target = $region45
    $region44: #{one_stage_d_forward.1} parent=1 // pred_region
      %s56 = ssub.s32 7168, 7168
      %57 = vsyncadd [#allocation7], %s56
      %s58 = sshll.u32 [#allocation6], 4
      %s59 = int_to_ptr.vmem [resolvable:$true] %s58
      %64 = dma.hbm_to_vmem [thread:$0]  %s10, 7168, %s59, [#allocation7], 64, 64, 4
    $region45: #{one_stage_d_forward.1} parent=1 // pred_fallthru
      _
    // Predicated region
    $region46: #{one_stage_d_forward.1} parent=1 // pred_check
      _
    $region47: #{one_stage_d_forward.1} parent=1 // pred_check_branch
      %66 = sbr.rel (0) target = $region49
    $region48: #{one_stage_d_forward.1} parent=1 // pred_region
      _
    $region49: #{one_stage_d_forward.1} parent=1 // pred_fallthru
      _
    // Predicated region
    $region50: #{one_stage_d_forward.1} parent=1 // pred_check
      _
    $region51: #{one_stage_d_forward.1} parent=1 // pred_check_branch
      %68 = sbr.rel (0) target = $region53
    $region52: #{one_stage_d_forward.1} parent=1 // pred_region
      %69 = dma.done [#allocation3], 32768
    $region53: #{one_stage_d_forward.1} parent=1 // pred_fallthru
      _
    // Predicated region
    $region54: #{one_stage_d_forward.1} parent=1 // pred_check
      _
    $region55: #{one_stage_d_forward.1} parent=1 // pred_check_branch
      %71 = sbr.rel (0) target = $region57
    $region56: #{one_stage_d_forward.1} parent=1 // pred_region
      %72 = dma.done [#allocation7], 7168
    $region57: #{one_stage_d_forward.1} parent=1 // pred_fallthru
      _
    %v74 = vld [vmem:[%s0] sm:$0xff]
    %v75 = vld [vmem:[%s0 + $0x8] sm:$0xff]
    %v78 = vcombine.high %v74, %v74
    %v80 = vunpack.c.l.s4 1983009808
    %v81 = vunpack.c.0.s8 %v80
    %v82 = vlaneseq
    %v83 = vshrl.u32 %v82, 7
    %v84 = vsub.s32 %v81, %v83
    %v85 = vrot.slane %v74, %v84
    %v87 = vunpack.c.l.s4 1983009808
    %v88 = vunpack.c.0.s8 %v87
    %v89 = vlaneseq
    %v90 = vshrl.u32 %v89, 7
    %v91 = vsub.s32 %v88, %v90
    %v92 = vrot.slane %v78, %v91
    %v93 = vcombine.high %v85, %v85
    %v94 = vcombine.high %v92, %v92
    %v95 = vcombine.high %v75, %v75
    %v97 = vunpack.c.l.s4 1983009808
    %v98 = vunpack.c.0.s8 %v97
    %v99 = vlaneseq
    %v100 = vshrl.u32 %v99, 7
    %v101 = vsub.s32 %v98, %v100
    %v102 = vrot.slane %v75, %v101
    %v104 = vunpack.c.l.s4 1983009808
    %v105 = vunpack.c.0.s8 %v104
    %v106 = vlaneseq
    %v107 = vshrl.u32 %v106, 7
    %v108 = vsub.s32 %v105, %v107
    %v109 = vrot.slane %v95, %v108
    %v110 = vcombine.high %v102, %v102
    %v111 = vcombine.high %v109, %v109
    %v120 = vpack.c.bf16 %v85, %v85
    %v121 = vpack.c.bf16 %v93, %v93
    %v122 = vpack.c.bf16 %v92, %v92
    %v123 = vpack.c.bf16 %v94, %v94
    %v124 = vpack.c.bf16 %v102, %v102
    %v125 = vpack.c.bf16 %v110, %v110
    %v126 = vpack.c.bf16 %v109, %v109
    %v127 = vpack.c.bf16 %v111, %v111
    %v128 = vld [vmem:[#allocation2] sm:$0xff]
    %v129 = vld [vmem:[#allocation2 + $0x8] sm:$0xff]
    %v130 = vld [vmem:[#allocation2 + $0x10] sm:$0xff]
    %v131 = vld [vmem:[#allocation2 + $0x18] sm:$0xff]
    %v132 = vld [vmem:[#allocation2 + $0x20] sm:$0xff]
    %v133 = vld [vmem:[#allocation2 + $0x28] sm:$0xff]
    %v134 = vld [vmem:[#allocation2 + $0x30] sm:$0xff]
    %v135 = vld [vmem:[#allocation2 + $0x38] sm:$0xff]
    %v136 = vld [vmem:[#allocation2 + $0x40] sm:$0xff]
    %v137 = vld [vmem:[#allocation2 + $0x48] sm:$0xff]
    %v138 = vld [vmem:[#allocation2 + $0x50] sm:$0xff]
    %v139 = vld [vmem:[#allocation2 + $0x58] sm:$0xff]
    %v140 = vld [vmem:[#allocation2 + $0x60] sm:$0xff]
    %v141 = vld [vmem:[#allocation2 + $0x68] sm:$0xff]
    %v142 = vld [vmem:[#allocation2 + $0x70] sm:$0xff]
    %v143 = vld [vmem:[#allocation2 + $0x78] sm:$0xff]
    %v144 = vld [vmem:[#allocation2 + $0x80] sm:$0xff]
    %v145 = vld [vmem:[#allocation2 + $0x88] sm:$0xff]
    %v146 = vld [vmem:[#allocation2 + $0x90] sm:$0xff]
    %v147 = vld [vmem:[#allocation2 + $0x98] sm:$0xff]
    %v148 = vld [vmem:[#allocation2 + $0xa0] sm:$0xff]
    %v149 = vld [vmem:[#allocation2 + $0xa8] sm:$0xff]
    %v150 = vld [vmem:[#allocation2 + $0xb0] sm:$0xff]
    %v151 = vld [vmem:[#allocation2 + $0xb8] sm:$0xff]
    %v152 = vld [vmem:[#allocation2 + $0xc0] sm:$0xff]
    %v153 = vld [vmem:[#allocation2 + $0xc8] sm:$0xff]
    %v154 = vld [vmem:[#allocation2 + $0xd0] sm:$0xff]
    %v155 = vld [vmem:[#allocation2 + $0xd8] sm:$0xff]
    %v156 = vld [vmem:[#allocation2 + $0xe0] sm:$0xff]
    %v157 = vld [vmem:[#allocation2 + $0xe8] sm:$0xff]
    %v158 = vld [vmem:[#allocation2 + $0xf0] sm:$0xff]
    %v159 = vld [vmem:[#allocation2 + $0xf8] sm:$0xff]
    %v160 = vld [vmem:[#allocation2 + $0x100] sm:$0xff]
    %v161 = vld [vmem:[#allocation2 + $0x108] sm:$0xff]
    %v162 = vld [vmem:[#allocation2 + $0x110] sm:$0xff]
    %v163 = vld [vmem:[#allocation2 + $0x118] sm:$0xff]
    %v164 = vld [vmem:[#allocation2 + $0x120] sm:$0xff]
    %v165 = vld [vmem:[#allocation2 + $0x128] sm:$0xff]
    %v166 = vld [vmem:[#allocation2 + $0x130] sm:$0xff]
    %v167 = vld [vmem:[#allocation2 + $0x138] sm:$0xff]
    %v168 = vld [vmem:[#allocation2 + $0x140] sm:$0xff]
    %v169 = vld [vmem:[#allocation2 + $0x148] sm:$0xff]
    %v170 = vld [vmem:[#allocation2 + $0x150] sm:$0xff]
    %v171 = vld [vmem:[#allocation2 + $0x158] sm:$0xff]
    %v172 = vld [vmem:[#allocation2 + $0x160] sm:$0xff]
    %v173 = vld [vmem:[#allocation2 + $0x168] sm:$0xff]
    %v174 = vld [vmem:[#allocation2 + $0x170] sm:$0xff]
    %v175 = vld [vmem:[#allocation2 + $0x178] sm:$0xff]
    %v176 = vld [vmem:[#allocation2 + $0x180] sm:$0xff]
    %v177 = vld [vmem:[#allocation2 + $0x188] sm:$0xff]
    %v178 = vld [vmem:[#allocation2 + $0x190] sm:$0xff]
    %v179 = vld [vmem:[#allocation2 + $0x198] sm:$0xff]
    %v180 = vld [vmem:[#allocation2 + $0x1a0] sm:$0xff]
    %v181 = vld [vmem:[#allocation2 + $0x1a8] sm:$0xff]
    %v182 = vld [vmem:[#allocation2 + $0x1b0] sm:$0xff]
    %v183 = vld [vmem:[#allocation2 + $0x1b8] sm:$0xff]
    %v184 = vld [vmem:[#allocation2 + $0x1c0] sm:$0xff]
    %v185 = vld [vmem:[#allocation2 + $0x1c8] sm:$0xff]
    %v186 = vld [vmem:[#allocation2 + $0x1d0] sm:$0xff]
    %v187 = vld [vmem:[#allocation2 + $0x1d8] sm:$0xff]
    %v188 = vld [vmem:[#allocation2 + $0x1e0] sm:$0xff]
    %v189 = vld [vmem:[#allocation2 + $0x1e8] sm:$0xff]
    %v190 = vld [vmem:[#allocation2 + $0x1f0] sm:$0xff]
    %v191 = vld [vmem:[#allocation2 + $0x1f8] sm:$0xff]
    %v192 = vld [vmem:[#allocation2 + $0x200] sm:$0xff]
    %v193 = vld [vmem:[#allocation2 + $0x208] sm:$0xff]
    %v194 = vld [vmem:[#allocation2 + $0x210] sm:$0xff]
    %v195 = vld [vmem:[#allocation2 + $0x218] sm:$0xff]
    %v196 = vld [vmem:[#allocation2 + $0x220] sm:$0xff]
    %v197 = vld [vmem:[#allocation2 + $0x228] sm:$0xff]
    %v198 = vld [vmem:[#allocation2 + $0x230] sm:$0xff]
    %v199 = vld [vmem:[#allocation2 + $0x238] sm:$0xff]
    %v200 = vld [vmem:[#allocation2 + $0x240] sm:$0xff]
    %v201 = vld [vmem:[#allocation2 + $0x248] sm:$0xff]
    %v202 = vld [vmem:[#allocation2 + $0x250] sm:$0xff]
    %v203 = vld [vmem:[#allocation2 + $0x258] sm:$0xff]
    %v204 = vld [vmem:[#allocation2 + $0x260] sm:$0xff]
    %v205 = vld [vmem:[#allocation2 + $0x268] sm:$0xff]
    %v206 = vld [vmem:[#allocation2 + $0x270] sm:$0xff]
    %v207 = vld [vmem:[#allocation2 + $0x278] sm:$0xff]
    %v208 = vld [vmem:[#allocation2 + $0x280] sm:$0xff]
    %v209 = vld [vmem:[#allocation2 + $0x288] sm:$0xff]
    %v210 = vld [vmem:[#allocation2 + $0x290] sm:$0xff]
    %v211 = vld [vmem:[#allocation2 + $0x298] sm:$0xff]
    %v212 = vld [vmem:[#allocation2 + $0x2a0] sm:$0xff]
    %v213 = vld [vmem:[#allocation2 + $0x2a8] sm:$0xff]
    %v214 = vld [vmem:[#allocation2 + $0x2b0] sm:$0xff]
    %v215 = vld [vmem:[#allocation2 + $0x2b8] sm:$0xff]
    %v216 = vld [vmem:[#allocation2 + $0x2c0] sm:$0xff]
    %v217 = vld [vmem:[#allocation2 + $0x2c8] sm:$0xff]
    %v218 = vld [vmem:[#allocation2 + $0x2d0] sm:$0xff]
    %v219 = vld [vmem:[#allocation2 + $0x2d8] sm:$0xff]
    %v220 = vld [vmem:[#allocation2 + $0x2e0] sm:$0xff]
    %v221 = vld [vmem:[#allocation2 + $0x2e8] sm:$0xff]
    %v222 = vld [vmem:[#allocation2 + $0x2f0] sm:$0xff]
    %v223 = vld [vmem:[#allocation2 + $0x2f8] sm:$0xff]
    %v224 = vld [vmem:[#allocation2 + $0x300] sm:$0xff]
    %v225 = vld [vmem:[#allocation2 + $0x308] sm:$0xff]
    %v226 = vld [vmem:[#allocation2 + $0x310] sm:$0xff]
    %v227 = vld [vmem:[#allocation2 + $0x318] sm:$0xff]
    %v228 = vld [vmem:[#allocation2 + $0x320] sm:$0xff]
    %v229 = vld [vmem:[#allocation2 + $0x328] sm:$0xff]
    %v230 = vld [vmem:[#allocation2 + $0x330] sm:$0xff]
    %v231 = vld [vmem:[#allocation2 + $0x338] sm:$0xff]
    %v232 = vld [vmem:[#allocation2 + $0x340] sm:$0xff]
    %v233 = vld [vmem:[#allocation2 + $0x348] sm:$0xff]
    %v234 = vld [vmem:[#allocation2 + $0x350] sm:$0xff]
    %v235 = vld [vmem:[#allocation2 + $0x358] sm:$0xff]
    %v236 = vld [vmem:[#allocation2 + $0x360] sm:$0xff]
    %v237 = vld [vmem:[#allocation2 + $0x368] sm:$0xff]
    %v238 = vld [vmem:[#allocation2 + $0x370] sm:$0xff]
    %v239 = vld [vmem:[#allocation2 + $0x378] sm:$0xff]
    %v240 = vld [vmem:[#allocation2 + $0x380] sm:$0xff]
    %v241 = vld [vmem:[#allocation2 + $0x388] sm:$0xff]
    %v242 = vld [vmem:[#allocation2 + $0x390] sm:$0xff]
    %v243 = vld [vmem:[#allocation2 + $0x398] sm:$0xff]
    %v244 = vld [vmem:[#allocation2 + $0x3a0] sm:$0xff]
    %v245 = vld [vmem:[#allocation2 + $0x3a8] sm:$0xff]
    %v246 = vld [vmem:[#allocation2 + $0x3b0] sm:$0xff]
    %v247 = vld [vmem:[#allocation2 + $0x3b8] sm:$0xff]
    %v248 = vld [vmem:[#allocation2 + $0x3c0] sm:$0xff]
    %v249 = vld [vmem:[#allocation2 + $0x3c8] sm:$0xff]
    %v250 = vld [vmem:[#allocation2 + $0x3d0] sm:$0xff]
    %v251 = vld [vmem:[#allocation2 + $0x3d8] sm:$0xff]
    %v252 = vld [vmem:[#allocation2 + $0x3e0] sm:$0xff]
    %v253 = vld [vmem:[#allocation2 + $0x3e8] sm:$0xff]
    %v254 = vld [vmem:[#allocation2 + $0x3f0] sm:$0xff]
    %v255 = vld [vmem:[#allocation2 + $0x3f8] sm:$0xff]
    %v256 = vld [vmem:[#allocation2 + $0x400] sm:$0xff]
    %v257 = vld [vmem:[#allocation2 + $0x408] sm:$0xff]
    %v258 = vld [vmem:[#allocation2 + $0x410] sm:$0xff]
    %v259 = vld [vmem:[#allocation2 + $0x418] sm:$0xff]
    %v260 = vld [vmem:[#allocation2 + $0x420] sm:$0xff]
    %v261 = vld [vmem:[#allocation2 + $0x428] sm:$0xff]
    %v262 = vld [vmem:[#allocation2 + $0x430] sm:$0xff]
    %v263 = vld [vmem:[#allocation2 + $0x438] sm:$0xff]
    %v264 = vld [vmem:[#allocation2 + $0x440] sm:$0xff]
    %v265 = vld [vmem:[#allocation2 + $0x448] sm:$0xff]
    %v266 = vld [vmem:[#allocation2 + $0x450] sm:$0xff]
    %v267 = vld [vmem:[#allocation2 + $0x458] sm:$0xff]
    %v268 = vld [vmem:[#allocation2 + $0x460] sm:$0xff]
    %v269 = vld [vmem:[#allocation2 + $0x468] sm:$0xff]
    %v270 = vld [vmem:[#allocation2 + $0x470] sm:$0xff]
    %v271 = vld [vmem:[#allocation2 + $0x478] sm:$0xff]
    %v272 = vld [vmem:[#allocation2 + $0x480] sm:$0xff]
    %v273 = vld [vmem:[#allocation2 + $0x488] sm:$0xff]
    %v274 = vld [vmem:[#allocation2 + $0x490] sm:$0xff]
    %v275 = vld [vmem:[#allocation2 + $0x498] sm:$0xff]
    %v276 = vld [vmem:[#allocation2 + $0x4a0] sm:$0xff]
    %v277 = vld [vmem:[#allocation2 + $0x4a8] sm:$0xff]
    %v278 = vld [vmem:[#allocation2 + $0x4b0] sm:$0xff]
    %v279 = vld [vmem:[#allocation2 + $0x4b8] sm:$0xff]
    %v280 = vld [vmem:[#allocation2 + $0x4c0] sm:$0xff]
    %v281 = vld [vmem:[#allocation2 + $0x4c8] sm:$0xff]
    %v282 = vld [vmem:[#allocation2 + $0x4d0] sm:$0xff]
    %v283 = vld [vmem:[#allocation2 + $0x4d8] sm:$0xff]
    %v284 = vld [vmem:[#allocation2 + $0x4e0] sm:$0xff]
    %v285 = vld [vmem:[#allocation2 + $0x4e8] sm:$0xff]
    %v286 = vld [vmem:[#allocation2 + $0x4f0] sm:$0xff]
    %v287 = vld [vmem:[#allocation2 + $0x4f8] sm:$0xff]
    %v288 = vld [vmem:[#allocation2 + $0x500] sm:$0xff]
    %v289 = vld [vmem:[#allocation2 + $0x508] sm:$0xff]
    %v290 = vld [vmem:[#allocation2 + $0x510] sm:$0xff]
    %v291 = vld [vmem:[#allocation2 + $0x518] sm:$0xff]
    %v292 = vld [vmem:[#allocation2 + $0x520] sm:$0xff]
    %v293 = vld [vmem:[#allocation2 + $0x528] sm:$0xff]
    %v294 = vld [vmem:[#allocation2 + $0x530] sm:$0xff]
    %v295 = vld [vmem:[#allocation2 + $0x538] sm:$0xff]
    %v296 = vld [vmem:[#allocation2 + $0x540] sm:$0xff]
    %v297 = vld [vmem:[#allocation2 + $0x548] sm:$0xff]
    %v298 = vld [vmem:[#allocation2 + $0x550] sm:$0xff]
    %v299 = vld [vmem:[#allocation2 + $0x558] sm:$0xff]
    %v300 = vld [vmem:[#allocation2 + $0x560] sm:$0xff]
    %v301 = vld [vmem:[#allocation2 + $0x568] sm:$0xff]
    %v302 = vld [vmem:[#allocation2 + $0x570] sm:$0xff]
    %v303 = vld [vmem:[#allocation2 + $0x578] sm:$0xff]
    %v304 = vld [vmem:[#allocation2 + $0x580] sm:$0xff]
    %v305 = vld [vmem:[#allocation2 + $0x588] sm:$0xff]
    %v306 = vld [vmem:[#allocation2 + $0x590] sm:$0xff]
    %v307 = vld [vmem:[#allocation2 + $0x598] sm:$0xff]
    %v308 = vld [vmem:[#allocation2 + $0x5a0] sm:$0xff]
    %v309 = vld [vmem:[#allocation2 + $0x5a8] sm:$0xff]
    %v310 = vld [vmem:[#allocation2 + $0x5b0] sm:$0xff]
    %v311 = vld [vmem:[#allocation2 + $0x5b8] sm:$0xff]
    %v312 = vld [vmem:[#allocation2 + $0x5c0] sm:$0xff]
    %v313 = vld [vmem:[#allocation2 + $0x5c8] sm:$0xff]
    %v314 = vld [vmem:[#allocation2 + $0x5d0] sm:$0xff]
    %v315 = vld [vmem:[#allocation2 + $0x5d8] sm:$0xff]
    %v316 = vld [vmem:[#allocation2 + $0x5e0] sm:$0xff]
    %v317 = vld [vmem:[#allocation2 + $0x5e8] sm:$0xff]
    %v318 = vld [vmem:[#allocation2 + $0x5f0] sm:$0xff]
    %v319 = vld [vmem:[#allocation2 + $0x5f8] sm:$0xff]
    %v320 = vld [vmem:[#allocation2 + $0x600] sm:$0xff]
    %v321 = vld [vmem:[#allocation2 + $0x608] sm:$0xff]
    %v322 = vld [vmem:[#allocation2 + $0x610] sm:$0xff]
    %v323 = vld [vmem:[#allocation2 + $0x618] sm:$0xff]
    %v324 = vld [vmem:[#allocation2 + $0x620] sm:$0xff]
    %v325 = vld [vmem:[#allocation2 + $0x628] sm:$0xff]
    %v326 = vld [vmem:[#allocation2 + $0x630] sm:$0xff]
    %v327 = vld [vmem:[#allocation2 + $0x638] sm:$0xff]
    %v328 = vld [vmem:[#allocation2 + $0x640] sm:$0xff]
    %v329 = vld [vmem:[#allocation2 + $0x648] sm:$0xff]
    %v330 = vld [vmem:[#allocation2 + $0x650] sm:$0xff]
    %v331 = vld [vmem:[#allocation2 + $0x658] sm:$0xff]
    %v332 = vld [vmem:[#allocation2 + $0x660] sm:$0xff]
    %v333 = vld [vmem:[#allocation2 + $0x668] sm:$0xff]
    %v334 = vld [vmem:[#allocation2 + $0x670] sm:$0xff]
    %v335 = vld [vmem:[#allocation2 + $0x678] sm:$0xff]
    %v336 = vld [vmem:[#allocation2 + $0x680] sm:$0xff]
    %v337 = vld [vmem:[#allocation2 + $0x688] sm:$0xff]
    %v338 = vld [vmem:[#allocation2 + $0x690] sm:$0xff]
    %v339 = vld [vmem:[#allocation2 + $0x698] sm:$0xff]
    %v340 = vld [vmem:[#allocation2 + $0x6a0] sm:$0xff]
    %v341 = vld [vmem:[#allocation2 + $0x6a8] sm:$0xff]
    %v342 = vld [vmem:[#allocation2 + $0x6b0] sm:$0xff]
    %v343 = vld [vmem:[#allocation2 + $0x6b8] sm:$0xff]
    %v344 = vld [vmem:[#allocation2 + $0x6c0] sm:$0xff]
    %v345 = vld [vmem:[#allocation2 + $0x6c8] sm:$0xff]
    %v346 = vld [vmem:[#allocation2 + $0x6d0] sm:$0xff]
    %v347 = vld [vmem:[#allocation2 + $0x6d8] sm:$0xff]
    %v348 = vld [vmem:[#allocation2 + $0x6e0] sm:$0xff]
    %v349 = vld [vmem:[#allocation2 + $0x6e8] sm:$0xff]
    %v350 = vld [vmem:[#allocation2 + $0x6f0] sm:$0xff]
    %v351 = vld [vmem:[#allocation2 + $0x6f8] sm:$0xff]
    %v352 = vld [vmem:[#allocation2 + $0x700] sm:$0xff]
    %v353 = vld [vmem:[#allocation2 + $0x708] sm:$0xff]
    %v354 = vld [vmem:[#allocation2 + $0x710] sm:$0xff]
    %v355 = vld [vmem:[#allocation2 + $0x718] sm:$0xff]
    %v356 = vld [vmem:[#allocation2 + $0x720] sm:$0xff]
    %v357 = vld [vmem:[#allocation2 + $0x728] sm:$0xff]
    %v358 = vld [vmem:[#allocation2 + $0x730] sm:$0xff]
    %v359 = vld [vmem:[#allocation2 + $0x738] sm:$0xff]
    %v360 = vld [vmem:[#allocation2 + $0x740] sm:$0xff]
    %v361 = vld [vmem:[#allocation2 + $0x748] sm:$0xff]
    %v362 = vld [vmem:[#allocation2 + $0x750] sm:$0xff]
    %v363 = vld [vmem:[#allocation2 + $0x758] sm:$0xff]
    %v364 = vld [vmem:[#allocation2 + $0x760] sm:$0xff]
    %v365 = vld [vmem:[#allocation2 + $0x768] sm:$0xff]
    %v366 = vld [vmem:[#allocation2 + $0x770] sm:$0xff]
    %v367 = vld [vmem:[#allocation2 + $0x778] sm:$0xff]
    %v368 = vld [vmem:[#allocation2 + $0x780] sm:$0xff]
    %v369 = vld [vmem:[#allocation2 + $0x788] sm:$0xff]
    %v370 = vld [vmem:[#allocation2 + $0x790] sm:$0xff]
    %v371 = vld [vmem:[#allocation2 + $0x798] sm:$0xff]
    %v372 = vld [vmem:[#allocation2 + $0x7a0] sm:$0xff]
    %v373 = vld [vmem:[#allocation2 + $0x7a8] sm:$0xff]
    %v374 = vld [vmem:[#allocation2 + $0x7b0] sm:$0xff]
    %v375 = vld [vmem:[#allocation2 + $0x7b8] sm:$0xff]
    %v376 = vld [vmem:[#allocation2 + $0x7c0] sm:$0xff]
    %v377 = vld [vmem:[#allocation2 + $0x7c8] sm:$0xff]
    %v378 = vld [vmem:[#allocation2 + $0x7d0] sm:$0xff]
    %v379 = vld [vmem:[#allocation2 + $0x7d8] sm:$0xff]
    %v380 = vld [vmem:[#allocation2 + $0x7e0] sm:$0xff]
    %v381 = vld [vmem:[#allocation2 + $0x7e8] sm:$0xff]
    %v382 = vld [vmem:[#allocation2 + $0x7f0] sm:$0xff]
    %v383 = vld [vmem:[#allocation2 + $0x7f8] sm:$0xff]
    %v384 = vld [vmem:[%s3] sm:$0xf]
    %v386 = vlaneseq
    %v387 = vshrl.u32 %v386, 7
    %v388 = vsub.s32 0, %v387
    %v389 = vrot.slane %v384, %v388
    %v390 = vlaneseq
    %v391 = vshrl.u32 %v390, 7
    %v392 = vsub.s32 1, %v391
    %v393 = vrot.slane %v384, %v392
    %v394 = vlaneseq
    %v395 = vshrl.u32 %v394, 7
    %v396 = vsub.s32 2, %v395
    %v397 = vrot.slane %v384, %v396
    %v398 = vlaneseq
    %v399 = vshrl.u32 %v398, 7
    %v400 = vsub.s32 3, %v399
    %v401 = vrot.slane %v384, %v400
    %v662 = vunpack.c.l.b16 %v128
    %v663 = vunpack.c.h.b16 %v128
    %v664 = vunpack.c.l.b16 %v129
    %v665 = vunpack.c.h.b16 %v129
    %v666 = vunpack.c.l.b16 %v130
    %v667 = vunpack.c.h.b16 %v130
    %v668 = vunpack.c.l.b16 %v131
    %v669 = vunpack.c.h.b16 %v131
    %v670 = vunpack.c.l.b16 %v132
    %v671 = vunpack.c.h.b16 %v132
    %v672 = vunpack.c.l.b16 %v133
    %v673 = vunpack.c.h.b16 %v133
    %v674 = vunpack.c.l.b16 %v134
    %v675 = vunpack.c.h.b16 %v134
    %v676 = vunpack.c.l.b16 %v135
    %v677 = vunpack.c.h.b16 %v135
    %v678 = vunpack.c.l.b16 %v136
    %v679 = vunpack.c.h.b16 %v136
    %v680 = vunpack.c.l.b16 %v137
    %v681 = vunpack.c.h.b16 %v137
    %v682 = vunpack.c.l.b16 %v138
    %v683 = vunpack.c.h.b16 %v138
    %v684 = vunpack.c.l.b16 %v139
    %v685 = vunpack.c.h.b16 %v139
    %v686 = vunpack.c.l.b16 %v140
    %v687 = vunpack.c.h.b16 %v140
    %v688 = vunpack.c.l.b16 %v141
    %v689 = vunpack.c.h.b16 %v141
    %v690 = vunpack.c.l.b16 %v142
    %v691 = vunpack.c.h.b16 %v142
    %v692 = vunpack.c.l.b16 %v143
    %v693 = vunpack.c.h.b16 %v143
    %v694 = vunpack.c.l.b16 %v144
    %v695 = vunpack.c.h.b16 %v144
    %v696 = vunpack.c.l.b16 %v145
    %v697 = vunpack.c.h.b16 %v145
    %v698 = vunpack.c.l.b16 %v146
    %v699 = vunpack.c.h.b16 %v146
    %v700 = vunpack.c.l.b16 %v147
    %v701 = vunpack.c.h.b16 %v147
    %v702 = vunpack.c.l.b16 %v148
    %v703 = vunpack.c.h.b16 %v148
    %v704 = vunpack.c.l.b16 %v149
    %v705 = vunpack.c.h.b16 %v149
    %v706 = vunpack.c.l.b16 %v150
    %v707 = vunpack.c.h.b16 %v150
    %v708 = vunpack.c.l.b16 %v151
    %v709 = vunpack.c.h.b16 %v151
    %v710 = vunpack.c.l.b16 %v152
    %v711 = vunpack.c.h.b16 %v152
    %v712 = vunpack.c.l.b16 %v153
    %v713 = vunpack.c.h.b16 %v153
    %v714 = vunpack.c.l.b16 %v154
    %v715 = vunpack.c.h.b16 %v154
    %v716 = vunpack.c.l.b16 %v155
    %v717 = vunpack.c.h.b16 %v155
    %v718 = vunpack.c.l.b16 %v156
    %v719 = vunpack.c.h.b16 %v156
    %v720 = vunpack.c.l.b16 %v157
    %v721 = vunpack.c.h.b16 %v157
    %v722 = vunpack.c.l.b16 %v158
    %v723 = vunpack.c.h.b16 %v158
    %v724 = vunpack.c.l.b16 %v159
    %v725 = vunpack.c.h.b16 %v159
    %v726 = vunpack.c.l.b16 %v160
    %v727 = vunpack.c.h.b16 %v160
    %v728 = vunpack.c.l.b16 %v161
    %v729 = vunpack.c.h.b16 %v161
    %v730 = vunpack.c.l.b16 %v162
    %v731 = vunpack.c.h.b16 %v162
    %v732 = vunpack.c.l.b16 %v163
    %v733 = vunpack.c.h.b16 %v163
    %v734 = vunpack.c.l.b16 %v164
    %v735 = vunpack.c.h.b16 %v164
    %v736 = vunpack.c.l.b16 %v165
    %v737 = vunpack.c.h.b16 %v165
    %v738 = vunpack.c.l.b16 %v166
    %v739 = vunpack.c.h.b16 %v166
    %v740 = vunpack.c.l.b16 %v167
    %v741 = vunpack.c.h.b16 %v167
    %v742 = vunpack.c.l.b16 %v168
    %v743 = vunpack.c.h.b16 %v168
    %v744 = vunpack.c.l.b16 %v169
    %v745 = vunpack.c.h.b16 %v169
    %v746 = vunpack.c.l.b16 %v170
    %v747 = vunpack.c.h.b16 %v170
    %v748 = vunpack.c.l.b16 %v171
    %v749 = vunpack.c.h.b16 %v171
    %v750 = vunpack.c.l.b16 %v172
    %v751 = vunpack.c.h.b16 %v172
    %v752 = vunpack.c.l.b16 %v173
    %v753 = vunpack.c.h.b16 %v173
    %v754 = vunpack.c.l.b16 %v174
    %v755 = vunpack.c.h.b16 %v174
    %v756 = vunpack.c.l.b16 %v175
    %v757 = vunpack.c.h.b16 %v175
    %v758 = vunpack.c.l.b16 %v176
    %v759 = vunpack.c.h.b16 %v176
    %v760 = vunpack.c.l.b16 %v177
    %v761 = vunpack.c.h.b16 %v177
    %v762 = vunpack.c.l.b16 %v178
    %v763 = vunpack.c.h.b16 %v178
    %v764 = vunpack.c.l.b16 %v179
    %v765 = vunpack.c.h.b16 %v179
    %v766 = vunpack.c.l.b16 %v180
    %v767 = vunpack.c.h.b16 %v180
    %v768 = vunpack.c.l.b16 %v181
    %v769 = vunpack.c.h.b16 %v181
    %v770 = vunpack.c.l.b16 %v182
    %v771 = vunpack.c.h.b16 %v182
    %v772 = vunpack.c.l.b16 %v183
    %v773 = vunpack.c.h.b16 %v183
    %v774 = vunpack.c.l.b16 %v184
    %v775 = vunpack.c.h.b16 %v184
    %v776 = vunpack.c.l.b16 %v185
    %v777 = vunpack.c.h.b16 %v185
    %v778 = vunpack.c.l.b16 %v186
    %v779 = vunpack.c.h.b16 %v186
    %v780 = vunpack.c.l.b16 %v187
    %v781 = vunpack.c.h.b16 %v187
    %v782 = vunpack.c.l.b16 %v188
    %v783 = vunpack.c.h.b16 %v188
    %v784 = vunpack.c.l.b16 %v189
    %v785 = vunpack.c.h.b16 %v189
    %v786 = vunpack.c.l.b16 %v190
    %v787 = vunpack.c.h.b16 %v190
    %v788 = vunpack.c.l.b16 %v191
    %v789 = vunpack.c.h.b16 %v191
    %v790 = vunpack.c.l.b16 %v192
    %v791 = vunpack.c.h.b16 %v192
    %v792 = vunpack.c.l.b16 %v193
    %v793 = vunpack.c.h.b16 %v193
    %v794 = vunpack.c.l.b16 %v194
    %v795 = vunpack.c.h.b16 %v194
    %v796 = vunpack.c.l.b16 %v195
    %v797 = vunpack.c.h.b16 %v195
    %v798 = vunpack.c.l.b16 %v196
    %v799 = vunpack.c.h.b16 %v196
    %v800 = vunpack.c.l.b16 %v197
    %v801 = vunpack.c.h.b16 %v197
    %v802 = vunpack.c.l.b16 %v198
    %v803 = vunpack.c.h.b16 %v198
    %v804 = vunpack.c.l.b16 %v199
    %v805 = vunpack.c.h.b16 %v199
    %v806 = vunpack.c.l.b16 %v200
    %v807 = vunpack.c.h.b16 %v200
    %v808 = vunpack.c.l.b16 %v201
    %v809 = vunpack.c.h.b16 %v201
    %v810 = vunpack.c.l.b16 %v202
    %v811 = vunpack.c.h.b16 %v202
    %v812 = vunpack.c.l.b16 %v203
    %v813 = vunpack.c.h.b16 %v203
    %v814 = vunpack.c.l.b16 %v204
    %v815 = vunpack.c.h.b16 %v204
    %v816 = vunpack.c.l.b16 %v205
    %v817 = vunpack.c.h.b16 %v205
    %v818 = vunpack.c.l.b16 %v206
    %v819 = vunpack.c.h.b16 %v206
    %v820 = vunpack.c.l.b16 %v207
    %v821 = vunpack.c.h.b16 %v207
    %v822 = vunpack.c.l.b16 %v208
    %v823 = vunpack.c.h.b16 %v208
    %v824 = vunpack.c.l.b16 %v209
    %v825 = vunpack.c.h.b16 %v209
    %v826 = vunpack.c.l.b16 %v210
    %v827 = vunpack.c.h.b16 %v210
    %v828 = vunpack.c.l.b16 %v211
    %v829 = vunpack.c.h.b16 %v211
    %v830 = vunpack.c.l.b16 %v212
    %v831 = vunpack.c.h.b16 %v212
    %v832 = vunpack.c.l.b16 %v213
    %v833 = vunpack.c.h.b16 %v213
    %v834 = vunpack.c.l.b16 %v214
    %v835 = vunpack.c.h.b16 %v214
    %v836 = vunpack.c.l.b16 %v215
    %v837 = vunpack.c.h.b16 %v215
    %v838 = vunpack.c.l.b16 %v216
    %v839 = vunpack.c.h.b16 %v216
    %v840 = vunpack.c.l.b16 %v217
    %v841 = vunpack.c.h.b16 %v217
    %v842 = vunpack.c.l.b16 %v218
    %v843 = vunpack.c.h.b16 %v218
    %v844 = vunpack.c.l.b16 %v219
    %v845 = vunpack.c.h.b16 %v219
    %v846 = vunpack.c.l.b16 %v220
    %v847 = vunpack.c.h.b16 %v220
    %v848 = vunpack.c.l.b16 %v221
    %v849 = vunpack.c.h.b16 %v221
    %v850 = vunpack.c.l.b16 %v222
    %v851 = vunpack.c.h.b16 %v222
    %v852 = vunpack.c.l.b16 %v223
    %v853 = vunpack.c.h.b16 %v223
    %v854 = vunpack.c.l.b16 %v224
    %v855 = vunpack.c.h.b16 %v224
    %v856 = vunpack.c.l.b16 %v225
    %v857 = vunpack.c.h.b16 %v225
    %v858 = vunpack.c.l.b16 %v226
    %v859 = vunpack.c.h.b16 %v226
    %v860 = vunpack.c.l.b16 %v227
    %v861 = vunpack.c.h.b16 %v227
    %v862 = vunpack.c.l.b16 %v228
    %v863 = vunpack.c.h.b16 %v228
    %v864 = vunpack.c.l.b16 %v229
    %v865 = vunpack.c.h.b16 %v229
    %v866 = vunpack.c.l.b16 %v230
    %v867 = vunpack.c.h.b16 %v230
    %v868 = vunpack.c.l.b16 %v231
    %v869 = vunpack.c.h.b16 %v231
    %v870 = vunpack.c.l.b16 %v232
    %v871 = vunpack.c.h.b16 %v232
    %v872 = vunpack.c.l.b16 %v233
    %v873 = vunpack.c.h.b16 %v233
    %v874 = vunpack.c.l.b16 %v234
    %v875 = vunpack.c.h.b16 %v234
    %v876 = vunpack.c.l.b16 %v235
    %v877 = vunpack.c.h.b16 %v235
    %v878 = vunpack.c.l.b16 %v236
    %v879 = vunpack.c.h.b16 %v236
    %v880 = vunpack.c.l.b16 %v237
    %v881 = vunpack.c.h.b16 %v237
    %v882 = vunpack.c.l.b16 %v238
    %v883 = vunpack.c.h.b16 %v238
    %v884 = vunpack.c.l.b16 %v239
    %v885 = vunpack.c.h.b16 %v239
    %v886 = vunpack.c.l.b16 %v240
    %v887 = vunpack.c.h.b16 %v240
    %v888 = vunpack.c.l.b16 %v241
    %v889 = vunpack.c.h.b16 %v241
    %v890 = vunpack.c.l.b16 %v242
    %v891 = vunpack.c.h.b16 %v242
    %v892 = vunpack.c.l.b16 %v243
    %v893 = vunpack.c.h.b16 %v243
    %v894 = vunpack.c.l.b16 %v244
    %v895 = vunpack.c.h.b16 %v244
    %v896 = vunpack.c.l.b16 %v245
    %v897 = vunpack.c.h.b16 %v245
    %v898 = vunpack.c.l.b16 %v246
    %v899 = vunpack.c.h.b16 %v246
    %v900 = vunpack.c.l.b16 %v247
    %v901 = vunpack.c.h.b16 %v247
    %v902 = vunpack.c.l.b16 %v248
    %v903 = vunpack.c.h.b16 %v248
    %v904 = vunpack.c.l.b16 %v249
    %v905 = vunpack.c.h.b16 %v249
    %v906 = vunpack.c.l.b16 %v250
    %v907 = vunpack.c.h.b16 %v250
    %v908 = vunpack.c.l.b16 %v251
    %v909 = vunpack.c.h.b16 %v251
    %v910 = vunpack.c.l.b16 %v252
    %v911 = vunpack.c.h.b16 %v252
    %v912 = vunpack.c.l.b16 %v253
    %v913 = vunpack.c.h.b16 %v253
    %v914 = vunpack.c.l.b16 %v254
    %v915 = vunpack.c.h.b16 %v254
    %v916 = vunpack.c.l.b16 %v255
    %v917 = vunpack.c.h.b16 %v255
    %v918 = vunpack.c.l.b16 %v256
    %v919 = vunpack.c.h.b16 %v256
    %v920 = vunpack.c.l.b16 %v257
    %v921 = vunpack.c.h.b16 %v257
    %v922 = vunpack.c.l.b16 %v258
    %v923 = vunpack.c.h.b16 %v258
    %v924 = vunpack.c.l.b16 %v259
    %v925 = vunpack.c.h.b16 %v259
    %v926 = vunpack.c.l.b16 %v260
    %v927 = vunpack.c.h.b16 %v260
    %v928 = vunpack.c.l.b16 %v261
    %v929 = vunpack.c.h.b16 %v261
    %v930 = vunpack.c.l.b16 %v262
    %v931 = vunpack.c.h.b16 %v262
    %v932 = vunpack.c.l.b16 %v263
    %v933 = vunpack.c.h.b16 %v263
    %v934 = vunpack.c.l.b16 %v264
    %v935 = vunpack.c.h.b16 %v264
    %v936 = vunpack.c.l.b16 %v265
    %v937 = vunpack.c.h.b16 %v265
    %v938 = vunpack.c.l.b16 %v266
    %v939 = vunpack.c.h.b16 %v266
    %v940 = vunpack.c.l.b16 %v267
    %v941 = vunpack.c.h.b16 %v267
    %v942 = vunpack.c.l.b16 %v268
    %v943 = vunpack.c.h.b16 %v268
    %v944 = vunpack.c.l.b16 %v269
    %v945 = vunpack.c.h.b16 %v269
    %v946 = vunpack.c.l.b16 %v270
    %v947 = vunpack.c.h.b16 %v270
    %v948 = vunpack.c.l.b16 %v271
    %v949 = vunpack.c.h.b16 %v271
    %v950 = vunpack.c.l.b16 %v272
    %v951 = vunpack.c.h.b16 %v272
    %v952 = vunpack.c.l.b16 %v273
    %v953 = vunpack.c.h.b16 %v273
    %v954 = vunpack.c.l.b16 %v274
    %v955 = vunpack.c.h.b16 %v274
    %v956 = vunpack.c.l.b16 %v275
    %v957 = vunpack.c.h.b16 %v275
    %v958 = vunpack.c.l.b16 %v276
    %v959 = vunpack.c.h.b16 %v276
    %v960 = vunpack.c.l.b16 %v277
    %v961 = vunpack.c.h.b16 %v277
    %v962 = vunpack.c.l.b16 %v278
    %v963 = vunpack.c.h.b16 %v278
    %v964 = vunpack.c.l.b16 %v279
    %v965 = vunpack.c.h.b16 %v279
    %v966 = vunpack.c.l.b16 %v280
    %v967 = vunpack.c.h.b16 %v280
    %v968 = vunpack.c.l.b16 %v281
    %v969 = vunpack.c.h.b16 %v281
    %v970 = vunpack.c.l.b16 %v282
    %v971 = vunpack.c.h.b16 %v282
    %v972 = vunpack.c.l.b16 %v283
    %v973 = vunpack.c.h.b16 %v283
    %v974 = vunpack.c.l.b16 %v284
    %v975 = vunpack.c.h.b16 %v284
    %v976 = vunpack.c.l.b16 %v285
    %v977 = vunpack.c.h.b16 %v285
    %v978 = vunpack.c.l.b16 %v286
    %v979 = vunpack.c.h.b16 %v286
    %v980 = vunpack.c.l.b16 %v287
    %v981 = vunpack.c.h.b16 %v287
    %v982 = vunpack.c.l.b16 %v288
    %v983 = vunpack.c.h.b16 %v288
    %v984 = vunpack.c.l.b16 %v289
    %v985 = vunpack.c.h.b16 %v289
    %v986 = vunpack.c.l.b16 %v290
    %v987 = vunpack.c.h.b16 %v290
    %v988 = vunpack.c.l.b16 %v291
    %v989 = vunpack.c.h.b16 %v291
    %v990 = vunpack.c.l.b16 %v292
    %v991 = vunpack.c.h.b16 %v292
    %v992 = vunpack.c.l.b16 %v293
    %v993 = vunpack.c.h.b16 %v293
    %v994 = vunpack.c.l.b16 %v294
    %v995 = vunpack.c.h.b16 %v294
    %v996 = vunpack.c.l.b16 %v295
    %v997 = vunpack.c.h.b16 %v295
    %v998 = vunpack.c.l.b16 %v296
    %v999 = vunpack.c.h.b16 %v296
    %v1000 = vunpack.c.l.b16 %v297
    %v1001 = vunpack.c.h.b16 %v297
    %v1002 = vunpack.c.l.b16 %v298
    %v1003 = vunpack.c.h.b16 %v298
    %v1004 = vunpack.c.l.b16 %v299
    %v1005 = vunpack.c.h.b16 %v299
    %v1006 = vunpack.c.l.b16 %v300
    %v1007 = vunpack.c.h.b16 %v300
    %v1008 = vunpack.c.l.b16 %v301
    %v1009 = vunpack.c.h.b16 %v301
    %v1010 = vunpack.c.l.b16 %v302
    %v1011 = vunpack.c.h.b16 %v302
    %v1012 = vunpack.c.l.b16 %v303
    %v1013 = vunpack.c.h.b16 %v303
    %v1014 = vunpack.c.l.b16 %v304
    %v1015 = vunpack.c.h.b16 %v304
    %v1016 = vunpack.c.l.b16 %v305
    %v1017 = vunpack.c.h.b16 %v305
    %v1018 = vunpack.c.l.b16 %v306
    %v1019 = vunpack.c.h.b16 %v306
    %v1020 = vunpack.c.l.b16 %v307
    %v1021 = vunpack.c.h.b16 %v307
    %v1022 = vunpack.c.l.b16 %v308
    %v1023 = vunpack.c.h.b16 %v308
    %v1024 = vunpack.c.l.b16 %v309
    %v1025 = vunpack.c.h.b16 %v309
    %v1026 = vunpack.c.l.b16 %v310
    %v1027 = vunpack.c.h.b16 %v310
    %v1028 = vunpack.c.l.b16 %v311
    %v1029 = vunpack.c.h.b16 %v311
    %v1030 = vunpack.c.l.b16 %v312
    %v1031 = vunpack.c.h.b16 %v312
    %v1032 = vunpack.c.l.b16 %v313
    %v1033 = vunpack.c.h.b16 %v313
    %v1034 = vunpack.c.l.b16 %v314
    %v1035 = vunpack.c.h.b16 %v314
    %v1036 = vunpack.c.l.b16 %v315
    %v1037 = vunpack.c.h.b16 %v315
    %v1038 = vunpack.c.l.b16 %v316
    %v1039 = vunpack.c.h.b16 %v316
    %v1040 = vunpack.c.l.b16 %v317
    %v1041 = vunpack.c.h.b16 %v317
    %v1042 = vunpack.c.l.b16 %v318
    %v1043 = vunpack.c.h.b16 %v318
    %v1044 = vunpack.c.l.b16 %v319
    %v1045 = vunpack.c.h.b16 %v319
    %v1046 = vunpack.c.l.b16 %v320
    %v1047 = vunpack.c.h.b16 %v320
    %v1048 = vunpack.c.l.b16 %v321
    %v1049 = vunpack.c.h.b16 %v321
    %v1050 = vunpack.c.l.b16 %v322
    %v1051 = vunpack.c.h.b16 %v322
    %v1052 = vunpack.c.l.b16 %v323
    %v1053 = vunpack.c.h.b16 %v323
    %v1054 = vunpack.c.l.b16 %v324
    %v1055 = vunpack.c.h.b16 %v324
    %v1056 = vunpack.c.l.b16 %v325
    %v1057 = vunpack.c.h.b16 %v325
    %v1058 = vunpack.c.l.b16 %v326
    %v1059 = vunpack.c.h.b16 %v326
    %v1060 = vunpack.c.l.b16 %v327
    %v1061 = vunpack.c.h.b16 %v327
    %v1062 = vunpack.c.l.b16 %v328
    %v1063 = vunpack.c.h.b16 %v328
    %v1064 = vunpack.c.l.b16 %v329
    %v1065 = vunpack.c.h.b16 %v329
    %v1066 = vunpack.c.l.b16 %v330
    %v1067 = vunpack.c.h.b16 %v330
    %v1068 = vunpack.c.l.b16 %v331
    %v1069 = vunpack.c.h.b16 %v331
    %v1070 = vunpack.c.l.b16 %v332
    %v1071 = vunpack.c.h.b16 %v332
    %v1072 = vunpack.c.l.b16 %v333
    %v1073 = vunpack.c.h.b16 %v333
    %v1074 = vunpack.c.l.b16 %v334
    %v1075 = vunpack.c.h.b16 %v334
    %v1076 = vunpack.c.l.b16 %v335
    %v1077 = vunpack.c.h.b16 %v335
    %v1078 = vunpack.c.l.b16 %v336
    %v1079 = vunpack.c.h.b16 %v336
    %v1080 = vunpack.c.l.b16 %v337
    %v1081 = vunpack.c.h.b16 %v337
    %v1082 = vunpack.c.l.b16 %v338
    %v1083 = vunpack.c.h.b16 %v338
    %v1084 = vunpack.c.l.b16 %v339
    %v1085 = vunpack.c.h.b16 %v339
    %v1086 = vunpack.c.l.b16 %v340
    %v1087 = vunpack.c.h.b16 %v340
    %v1088 = vunpack.c.l.b16 %v341
    %v1089 = vunpack.c.h.b16 %v341
    %v1090 = vunpack.c.l.b16 %v342
    %v1091 = vunpack.c.h.b16 %v342
    %v1092 = vunpack.c.l.b16 %v343
    %v1093 = vunpack.c.h.b16 %v343
    %v1094 = vunpack.c.l.b16 %v344
    %v1095 = vunpack.c.h.b16 %v344
    %v1096 = vunpack.c.l.b16 %v345
    %v1097 = vunpack.c.h.b16 %v345
    %v1098 = vunpack.c.l.b16 %v346
    %v1099 = vunpack.c.h.b16 %v346
    %v1100 = vunpack.c.l.b16 %v347
    %v1101 = vunpack.c.h.b16 %v347
    %v1102 = vunpack.c.l.b16 %v348
    %v1103 = vunpack.c.h.b16 %v348
    %v1104 = vunpack.c.l.b16 %v349
    %v1105 = vunpack.c.h.b16 %v349
    %v1106 = vunpack.c.l.b16 %v350
    %v1107 = vunpack.c.h.b16 %v350
    %v1108 = vunpack.c.l.b16 %v351
    %v1109 = vunpack.c.h.b16 %v351
    %v1110 = vunpack.c.l.b16 %v352
    %v1111 = vunpack.c.h.b16 %v352
    %v1112 = vunpack.c.l.b16 %v353
    %v1113 = vunpack.c.h.b16 %v353
    %v1114 = vunpack.c.l.b16 %v354
    %v1115 = vunpack.c.h.b16 %v354
    %v1116 = vunpack.c.l.b16 %v355
    %v1117 = vunpack.c.h.b16 %v355
    %v1118 = vunpack.c.l.b16 %v356
    %v1119 = vunpack.c.h.b16 %v356
    %v1120 = vunpack.c.l.b16 %v357
    %v1121 = vunpack.c.h.b16 %v357
    %v1122 = vunpack.c.l.b16 %v358
    %v1123 = vunpack.c.h.b16 %v358
    %v1124 = vunpack.c.l.b16 %v359
    %v1125 = vunpack.c.h.b16 %v359
    %v1126 = vunpack.c.l.b16 %v360
    %v1127 = vunpack.c.h.b16 %v360
    %v1128 = vunpack.c.l.b16 %v361
    %v1129 = vunpack.c.h.b16 %v361
    %v1130 = vunpack.c.l.b16 %v362
    %v1131 = vunpack.c.h.b16 %v362
    %v1132 = vunpack.c.l.b16 %v363
    %v1133 = vunpack.c.h.b16 %v363
    %v1134 = vunpack.c.l.b16 %v364
    %v1135 = vunpack.c.h.b16 %v364
    %v1136 = vunpack.c.l.b16 %v365
    %v1137 = vunpack.c.h.b16 %v365
    %v1138 = vunpack.c.l.b16 %v366
    %v1139 = vunpack.c.h.b16 %v366
    %v1140 = vunpack.c.l.b16 %v367
    %v1141 = vunpack.c.h.b16 %v367
    %v1142 = vunpack.c.l.b16 %v368
    %v1143 = vunpack.c.h.b16 %v368
    %v1144 = vunpack.c.l.b16 %v369
    %v1145 = vunpack.c.h.b16 %v369
    %v1146 = vunpack.c.l.b16 %v370
    %v1147 = vunpack.c.h.b16 %v370
    %v1148 = vunpack.c.l.b16 %v371
    %v1149 = vunpack.c.h.b16 %v371
    %v1150 = vunpack.c.l.b16 %v372
    %v1151 = vunpack.c.h.b16 %v372
    %v1152 = vunpack.c.l.b16 %v373
    %v1153 = vunpack.c.h.b16 %v373
    %v1154 = vunpack.c.l.b16 %v374
    %v1155 = vunpack.c.h.b16 %v374
    %v1156 = vunpack.c.l.b16 %v375
    %v1157 = vunpack.c.h.b16 %v375
    %v1158 = vunpack.c.l.b16 %v376
    %v1159 = vunpack.c.h.b16 %v376
    %v1160 = vunpack.c.l.b16 %v377
    %v1161 = vunpack.c.h.b16 %v377
    %v1162 = vunpack.c.l.b16 %v378
    %v1163 = vunpack.c.h.b16 %v378
    %v1164 = vunpack.c.l.b16 %v379
    %v1165 = vunpack.c.h.b16 %v379
    %v1166 = vunpack.c.l.b16 %v380
    %v1167 = vunpack.c.h.b16 %v380
    %v1168 = vunpack.c.l.b16 %v381
    %v1169 = vunpack.c.h.b16 %v381
    %v1170 = vunpack.c.l.b16 %v382
    %v1171 = vunpack.c.h.b16 %v382
    %v1172 = vunpack.c.l.b16 %v383
    %v1173 = vunpack.c.h.b16 %v383
    %v1174 = vpack.c.b16 %v666, %v662
    %v1175 = vpack.c.b16 %v667, %v663
    %v1176 = vpack.c.b16 %v668, %v664
    %v1177 = vpack.c.b16 %v669, %v665
    %v1178 = vpack.c.b16 %v674, %v670
    %v1179 = vpack.c.b16 %v675, %v671
    %v1180 = vpack.c.b16 %v676, %v672
    %v1181 = vpack.c.b16 %v677, %v673
    %v1182 = vpack.c.b16 %v682, %v678
    %v1183 = vpack.c.b16 %v683, %v679
    %v1184 = vpack.c.b16 %v684, %v680
    %v1185 = vpack.c.b16 %v685, %v681
    %v1186 = vpack.c.b16 %v690, %v686
    %v1187 = vpack.c.b16 %v691, %v687
    %v1188 = vpack.c.b16 %v692, %v688
    %v1189 = vpack.c.b16 %v693, %v689
    %v1190 = vpack.c.b16 %v698, %v694
    %v1191 = vpack.c.b16 %v699, %v695
    %v1192 = vpack.c.b16 %v700, %v696
    %v1193 = vpack.c.b16 %v701, %v697
    %v1194 = vpack.c.b16 %v706, %v702
    %v1195 = vpack.c.b16 %v707, %v703
    %v1196 = vpack.c.b16 %v708, %v704
    %v1197 = vpack.c.b16 %v709, %v705
    %v1198 = vpack.c.b16 %v714, %v710
    %v1199 = vpack.c.b16 %v715, %v711
    %v1200 = vpack.c.b16 %v716, %v712
    %v1201 = vpack.c.b16 %v717, %v713
    %v1202 = vpack.c.b16 %v722, %v718
    %v1203 = vpack.c.b16 %v723, %v719
    %v1204 = vpack.c.b16 %v724, %v720
    %v1205 = vpack.c.b16 %v725, %v721
    %v1206 = vpack.c.b16 %v730, %v726
    %v1207 = vpack.c.b16 %v731, %v727
    %v1208 = vpack.c.b16 %v732, %v728
    %v1209 = vpack.c.b16 %v733, %v729
    %v1210 = vpack.c.b16 %v738, %v734
    %v1211 = vpack.c.b16 %v739, %v735
    %v1212 = vpack.c.b16 %v740, %v736
    %v1213 = vpack.c.b16 %v741, %v737
    %v1214 = vpack.c.b16 %v746, %v742
    %v1215 = vpack.c.b16 %v747, %v743
    %v1216 = vpack.c.b16 %v748, %v744
    %v1217 = vpack.c.b16 %v749, %v745
    %v1218 = vpack.c.b16 %v754, %v750
    %v1219 = vpack.c.b16 %v755, %v751
    %v1220 = vpack.c.b16 %v756, %v752
    %v1221 = vpack.c.b16 %v757, %v753
    %v1222 = vpack.c.b16 %v762, %v758
    %v1223 = vpack.c.b16 %v763, %v759
    %v1224 = vpack.c.b16 %v764, %v760
    %v1225 = vpack.c.b16 %v765, %v761
    %v1226 = vpack.c.b16 %v770, %v766
    %v1227 = vpack.c.b16 %v771, %v767
    %v1228 = vpack.c.b16 %v772, %v768
    %v1229 = vpack.c.b16 %v773, %v769
    %v1230 = vpack.c.b16 %v778, %v774
    %v1231 = vpack.c.b16 %v779, %v775
    %v1232 = vpack.c.b16 %v780, %v776
    %v1233 = vpack.c.b16 %v781, %v777
    %v1234 = vpack.c.b16 %v786, %v782
    %v1235 = vpack.c.b16 %v787, %v783
    %v1236 = vpack.c.b16 %v788, %v784
    %v1237 = vpack.c.b16 %v789, %v785
    %v1238 = vpack.c.b16 %v794, %v790
    %v1239 = vpack.c.b16 %v795, %v791
    %v1240 = vpack.c.b16 %v796, %v792
    %v1241 = vpack.c.b16 %v797, %v793
    %v1242 = vpack.c.b16 %v802, %v798
    %v1243 = vpack.c.b16 %v803, %v799
    %v1244 = vpack.c.b16 %v804, %v800
    %v1245 = vpack.c.b16 %v805, %v801
    %v1246 = vpack.c.b16 %v810, %v806
    %v1247 = vpack.c.b16 %v811, %v807
    %v1248 = vpack.c.b16 %v812, %v808
    %v1249 = vpack.c.b16 %v813, %v809
    %v1250 = vpack.c.b16 %v818, %v814
    %v1251 = vpack.c.b16 %v819, %v815
    %v1252 = vpack.c.b16 %v820, %v816
    %v1253 = vpack.c.b16 %v821, %v817
    %v1254 = vpack.c.b16 %v826, %v822
    %v1255 = vpack.c.b16 %v827, %v823
    %v1256 = vpack.c.b16 %v828, %v824
    %v1257 = vpack.c.b16 %v829, %v825
    %v1258 = vpack.c.b16 %v834, %v830
    %v1259 = vpack.c.b16 %v835, %v831
    %v1260 = vpack.c.b16 %v836, %v832
    %v1261 = vpack.c.b16 %v837, %v833
    %v1262 = vpack.c.b16 %v842, %v838
    %v1263 = vpack.c.b16 %v843, %v839
    %v1264 = vpack.c.b16 %v844, %v840
    %v1265 = vpack.c.b16 %v845, %v841
    %v1266 = vpack.c.b16 %v850, %v846
    %v1267 = vpack.c.b16 %v851, %v847
    %v1268 = vpack.c.b16 %v852, %v848
    %v1269 = vpack.c.b16 %v853, %v849
    %v1270 = vpack.c.b16 %v858, %v854
    %v1271 = vpack.c.b16 %v859, %v855
    %v1272 = vpack.c.b16 %v860, %v856
    %v1273 = vpack.c.b16 %v861, %v857
    %v1274 = vpack.c.b16 %v866, %v862
    %v1275 = vpack.c.b16 %v867, %v863
    %v1276 = vpack.c.b16 %v868, %v864
    %v1277 = vpack.c.b16 %v869, %v865
    %v1278 = vpack.c.b16 %v874, %v870
    %v1279 = vpack.c.b16 %v875, %v871
    %v1280 = vpack.c.b16 %v876, %v872
    %v1281 = vpack.c.b16 %v877, %v873
    %v1282 = vpack.c.b16 %v882, %v878
    %v1283 = vpack.c.b16 %v883, %v879
    %v1284 = vpack.c.b16 %v884, %v880
    %v1285 = vpack.c.b16 %v885, %v881
    %v1286 = vpack.c.b16 %v890, %v886
    %v1287 = vpack.c.b16 %v891, %v887
    %v1288 = vpack.c.b16 %v892, %v888
    %v1289 = vpack.c.b16 %v893, %v889
    %v1290 = vpack.c.b16 %v898, %v894
    %v1291 = vpack.c.b16 %v899, %v895
    %v1292 = vpack.c.b16 %v900, %v896
    %v1293 = vpack.c.b16 %v901, %v897
    %v1294 = vpack.c.b16 %v906, %v902
    %v1295 = vpack.c.b16 %v907, %v903
    %v1296 = vpack.c.b16 %v908, %v904
    %v1297 = vpack.c.b16 %v909, %v905
    %v1298 = vpack.c.b16 %v914, %v910
    %v1299 = vpack.c.b16 %v915, %v911
    %v1300 = vpack.c.b16 %v916, %v912
    %v1301 = vpack.c.b16 %v917, %v913
    %v1302 = vpack.c.b16 %v922, %v918
    %v1303 = vpack.c.b16 %v923, %v919
    %v1304 = vpack.c.b16 %v924, %v920
    %v1305 = vpack.c.b16 %v925, %v921
    %v1306 = vpack.c.b16 %v930, %v926
    %v1307 = vpack.c.b16 %v931, %v927
    %v1308 = vpack.c.b16 %v932, %v928
    %v1309 = vpack.c.b16 %v933, %v929
    %v1310 = vpack.c.b16 %v938, %v934
    %v1311 = vpack.c.b16 %v939, %v935
    %v1312 = vpack.c.b16 %v940, %v936
    %v1313 = vpack.c.b16 %v941, %v937
    %v1314 = vpack.c.b16 %v946, %v942
    %v1315 = vpack.c.b16 %v947, %v943
    %v1316 = vpack.c.b16 %v948, %v944
    %v1317 = vpack.c.b16 %v949, %v945
    %v1318 = vpack.c.b16 %v954, %v950
    %v1319 = vpack.c.b16 %v955, %v951
    %v1320 = vpack.c.b16 %v956, %v952
    %v1321 = vpack.c.b16 %v957, %v953
    %v1322 = vpack.c.b16 %v962, %v958
    %v1323 = vpack.c.b16 %v963, %v959
    %v1324 = vpack.c.b16 %v964, %v960
    %v1325 = vpack.c.b16 %v965, %v961
    %v1326 = vpack.c.b16 %v970, %v966
    %v1327 = vpack.c.b16 %v971, %v967
    %v1328 = vpack.c.b16 %v972, %v968
    %v1329 = vpack.c.b16 %v973, %v969
    %v1330 = vpack.c.b16 %v978, %v974
    %v1331 = vpack.c.b16 %v979, %v975
    %v1332 = vpack.c.b16 %v980, %v976
    %v1333 = vpack.c.b16 %v981, %v977
    %v1334 = vpack.c.b16 %v986, %v982
    %v1335 = vpack.c.b16 %v987, %v983
    %v1336 = vpack.c.b16 %v988, %v984
    %v1337 = vpack.c.b16 %v989, %v985
    %v1338 = vpack.c.b16 %v994, %v990
    %v1339 = vpack.c.b16 %v995, %v991
    %v1340 = vpack.c.b16 %v996, %v992
    %v1341 = vpack.c.b16 %v997, %v993
    %v1342 = vpack.c.b16 %v1002, %v998
    %v1343 = vpack.c.b16 %v1003, %v999
    %v1344 = vpack.c.b16 %v1004, %v1000
    %v1345 = vpack.c.b16 %v1005, %v1001
    %v1346 = vpack.c.b16 %v1010, %v1006
    %v1347 = vpack.c.b16 %v1011, %v1007
    %v1348 = vpack.c.b16 %v1012, %v1008
    %v1349 = vpack.c.b16 %v1013, %v1009
    %v1350 = vpack.c.b16 %v1018, %v1014
    %v1351 = vpack.c.b16 %v1019, %v1015
    %v1352 = vpack.c.b16 %v1020, %v1016
    %v1353 = vpack.c.b16 %v1021, %v1017
    %v1354 = vpack.c.b16 %v1026, %v1022
    %v1355 = vpack.c.b16 %v1027, %v1023
    %v1356 = vpack.c.b16 %v1028, %v1024
    %v1357 = vpack.c.b16 %v1029, %v1025
    %v1358 = vpack.c.b16 %v1034, %v1030
    %v1359 = vpack.c.b16 %v1035, %v1031
    %v1360 = vpack.c.b16 %v1036, %v1032
    %v1361 = vpack.c.b16 %v1037, %v1033
    %v1362 = vpack.c.b16 %v1042, %v1038
    %v1363 = vpack.c.b16 %v1043, %v1039
    %v1364 = vpack.c.b16 %v1044, %v1040
    %v1365 = vpack.c.b16 %v1045, %v1041
    %v1366 = vpack.c.b16 %v1050, %v1046
    %v1367 = vpack.c.b16 %v1051, %v1047
    %v1368 = vpack.c.b16 %v1052, %v1048
    %v1369 = vpack.c.b16 %v1053, %v1049
    %v1370 = vpack.c.b16 %v1058, %v1054
    %v1371 = vpack.c.b16 %v1059, %v1055
    %v1372 = vpack.c.b16 %v1060, %v1056
    %v1373 = vpack.c.b16 %v1061, %v1057
    %v1374 = vpack.c.b16 %v1066, %v1062
    %v1375 = vpack.c.b16 %v1067, %v1063
    %v1376 = vpack.c.b16 %v1068, %v1064
    %v1377 = vpack.c.b16 %v1069, %v1065
    %v1378 = vpack.c.b16 %v1074, %v1070
    %v1379 = vpack.c.b16 %v1075, %v1071
    %v1380 = vpack.c.b16 %v1076, %v1072
    %v1381 = vpack.c.b16 %v1077, %v1073
    %v1382 = vpack.c.b16 %v1082, %v1078
    %v1383 = vpack.c.b16 %v1083, %v1079
    %v1384 = vpack.c.b16 %v1084, %v1080
    %v1385 = vpack.c.b16 %v1085, %v1081
    %v1386 = vpack.c.b16 %v1090, %v1086
    %v1387 = vpack.c.b16 %v1091, %v1087
    %v1388 = vpack.c.b16 %v1092, %v1088
    %v1389 = vpack.c.b16 %v1093, %v1089
    %v1390 = vpack.c.b16 %v1098, %v1094
    %v1391 = vpack.c.b16 %v1099, %v1095
    %v1392 = vpack.c.b16 %v1100, %v1096
    %v1393 = vpack.c.b16 %v1101, %v1097
    %v1394 = vpack.c.b16 %v1106, %v1102
    %v1395 = vpack.c.b16 %v1107, %v1103
    %v1396 = vpack.c.b16 %v1108, %v1104
    %v1397 = vpack.c.b16 %v1109, %v1105
    %v1398 = vpack.c.b16 %v1114, %v1110
    %v1399 = vpack.c.b16 %v1115, %v1111
    %v1400 = vpack.c.b16 %v1116, %v1112
    %v1401 = vpack.c.b16 %v1117, %v1113
    %v1402 = vpack.c.b16 %v1122, %v1118
    %v1403 = vpack.c.b16 %v1123, %v1119
    %v1404 = vpack.c.b16 %v1124, %v1120
    %v1405 = vpack.c.b16 %v1125, %v1121
    %v1406 = vpack.c.b16 %v1130, %v1126
    %v1407 = vpack.c.b16 %v1131, %v1127
    %v1408 = vpack.c.b16 %v1132, %v1128
    %v1409 = vpack.c.b16 %v1133, %v1129
    %v1410 = vpack.c.b16 %v1138, %v1134
    %v1411 = vpack.c.b16 %v1139, %v1135
    %v1412 = vpack.c.b16 %v1140, %v1136
    %v1413 = vpack.c.b16 %v1141, %v1137
    %v1414 = vpack.c.b16 %v1146, %v1142
    %v1415 = vpack.c.b16 %v1147, %v1143
    %v1416 = vpack.c.b16 %v1148, %v1144
    %v1417 = vpack.c.b16 %v1149, %v1145
    %v1418 = vpack.c.b16 %v1154, %v1150
    %v1419 = vpack.c.b16 %v1155, %v1151
    %v1420 = vpack.c.b16 %v1156, %v1152
    %v1421 = vpack.c.b16 %v1157, %v1153
    %v1422 = vpack.c.b16 %v1162, %v1158
    %v1423 = vpack.c.b16 %v1163, %v1159
    %v1424 = vpack.c.b16 %v1164, %v1160
    %v1425 = vpack.c.b16 %v1165, %v1161
    %v1426 = vpack.c.b16 %v1170, %v1166
    %v1427 = vpack.c.b16 %v1171, %v1167
    %v1428 = vpack.c.b16 %v1172, %v1168
    %v1429 = vpack.c.b16 %v1173, %v1169
    %1686 = vmatprep.subr.bf16.mxu0 %v1175
    %1687 = vmatpush1.bf16.msra.mxu0 %v1174
    %1688 = vmatprep.subr.bf16.mxu0 %v1179
    %1689 = vmatpush1.bf16.msra.mxu0 %v1178
    %1690 = vmatprep.subr.bf16.mxu0 %v1183
    %1691 = vmatpush1.bf16.msra.mxu0 %v1182
    %1692 = vmatprep.subr.bf16.mxu0 %v1187
    %1693 = vmatpush1.bf16.msra.mxu0 %v1186
    %1694 = vmatprep.subr.bf16.mxu0 %v1191
    %1695 = vmatpush1.bf16.msra.mxu0 %v1190
    %1696 = vmatprep.subr.bf16.mxu0 %v1195
    %1697 = vmatpush1.bf16.msra.mxu0 %v1194
    %1698 = vmatprep.subr.bf16.mxu0 %v1199
    %1699 = vmatpush1.bf16.msra.mxu0 %v1198
    %1700 = vmatprep.subr.bf16.mxu0 %v1203
    %1701 = vmatpush1.bf16.msra.mxu0 %v1202
    %1702 = vmatprep.subr.bf16.mxu0 %v1207
    %1703 = vmatpush1.bf16.msra.mxu0 %v1206
    %1704 = vmatprep.subr.bf16.mxu0 %v1211
    %1705 = vmatpush1.bf16.msra.mxu0 %v1210
    %1706 = vmatprep.subr.bf16.mxu0 %v1215
    %1707 = vmatpush1.bf16.msra.mxu0 %v1214
    %1708 = vmatprep.subr.bf16.mxu0 %v1219
    %1709 = vmatpush1.bf16.msra.mxu0 %v1218
    %1710 = vmatprep.subr.bf16.mxu0 %v1223
    %1711 = vmatpush1.bf16.msra.mxu0 %v1222
    %1712 = vmatprep.subr.bf16.mxu0 %v1227
    %1713 = vmatpush1.bf16.msra.mxu0 %v1226
    %1714 = vmatprep.subr.bf16.mxu0 %v1231
    %1715 = vmatpush1.bf16.msra.mxu0 %v1230
    %1716 = vmatprep.subr.bf16.mxu0 %v1235
    %1717 = vmatpush1.bf16.msra.mxu0 %v1234
    %1718 = vmatprep.mubr.bf16.mxu0 %v121
    %1719 = vmatmul.mubr.bf16.gmra.mrb[0].mxu0 %v120
    %v1720 = vpop.f32.mrb[0].mxu0
    %v1721 = vadd.f32 %v389, %v1720
    %v1722 = vpop.f32.mrb[0].mxu0
    %v1723 = vadd.f32 %v393, %v1722
    %v1724 = vpop.f32.mrb[0].mxu0
    %v1725 = vpop.f32.mrb[0].mxu0
    %1726 = vdwg.mxu0
    %1727 = vmatprep.subr.bf16.mxu0 %v1239
    %1728 = vmatpush1.bf16.msra.mxu0 %v1238
    %1729 = vmatprep.subr.bf16.mxu0 %v1243
    %1730 = vmatpush1.bf16.msra.mxu0 %v1242
    %1731 = vmatprep.subr.bf16.mxu0 %v1247
    %1732 = vmatpush1.bf16.msra.mxu0 %v1246
    %1733 = vmatprep.subr.bf16.mxu0 %v1251
    %1734 = vmatpush1.bf16.msra.mxu0 %v1250
    %1735 = vmatprep.subr.bf16.mxu0 %v1255
    %1736 = vmatpush1.bf16.msra.mxu0 %v1254
    %1737 = vmatprep.subr.bf16.mxu0 %v1259
    %1738 = vmatpush1.bf16.msra.mxu0 %v1258
    %1739 = vmatprep.subr.bf16.mxu0 %v1263
    %1740 = vmatpush1.bf16.msra.mxu0 %v1262
    %1741 = vmatprep.subr.bf16.mxu0 %v1267
    %1742 = vmatpush1.bf16.msra.mxu0 %v1266
    %1743 = vmatprep.subr.bf16.mxu0 %v1271
    %1744 = vmatpush1.bf16.msra.mxu0 %v1270
    %1745 = vmatprep.subr.bf16.mxu0 %v1275
    %1746 = vmatpush1.bf16.msra.mxu0 %v1274
    %1747 = vmatprep.subr.bf16.mxu0 %v1279
    %1748 = vmatpush1.bf16.msra.mxu0 %v1278
    %1749 = vmatprep.subr.bf16.mxu0 %v1283
    %1750 = vmatpush1.bf16.msra.mxu0 %v1282
    %1751 = vmatprep.subr.bf16.mxu0 %v1287
    %1752 = vmatpush1.bf16.msra.mxu0 %v1286
    %1753 = vmatprep.subr.bf16.mxu0 %v1291
    %1754 = vmatpush1.bf16.msra.mxu0 %v1290
    %1755 = vmatprep.subr.bf16.mxu0 %v1295
    %1756 = vmatpush1.bf16.msra.mxu0 %v1294
    %1757 = vmatprep.subr.bf16.mxu0 %v1299
    %1758 = vmatpush1.bf16.msra.mxu0 %v1298
    %1759 = vmatprep.mubr.bf16.mxu0 %v123
    %1760 = vmatmul.mubr.bf16.gmra.mrb[0].mxu0 %v122
    %v1761 = vpop.f32.mrb[0].mxu0
    %v1762 = vadd.f32 %v1721, %v1761
    %v1763 = vpop.f32.mrb[0].mxu0
    %v1764 = vadd.f32 %v1723, %v1763
    %v1765 = vpop.f32.mrb[0].mxu0
    %v1766 = vpop.f32.mrb[0].mxu0
    %1767 = vdwg.mxu0
    %1768 = vmatprep.subr.bf16.mxu0 %v1303
    %1769 = vmatpush1.bf16.msra.mxu0 %v1302
    %1770 = vmatprep.subr.bf16.mxu0 %v1307
    %1771 = vmatpush1.bf16.msra.mxu0 %v1306
    %1772 = vmatprep.subr.bf16.mxu0 %v1311
    %1773 = vmatpush1.bf16.msra.mxu0 %v1310
    %1774 = vmatprep.subr.bf16.mxu0 %v1315
    %1775 = vmatpush1.bf16.msra.mxu0 %v1314
    %1776 = vmatprep.subr.bf16.mxu0 %v1319
    %1777 = vmatpush1.bf16.msra.mxu0 %v1318
    %1778 = vmatprep.subr.bf16.mxu0 %v1323
    %1779 = vmatpush1.bf16.msra.mxu0 %v1322
    %1780 = vmatprep.subr.bf16.mxu0 %v1327
    %1781 = vmatpush1.bf16.msra.mxu0 %v1326
    %1782 = vmatprep.subr.bf16.mxu0 %v1331
    %1783 = vmatpush1.bf16.msra.mxu0 %v1330
    %1784 = vmatprep.subr.bf16.mxu0 %v1335
    %1785 = vmatpush1.bf16.msra.mxu0 %v1334
    %1786 = vmatprep.subr.bf16.mxu0 %v1339
    %1787 = vmatpush1.bf16.msra.mxu0 %v1338
    %1788 = vmatprep.subr.bf16.mxu0 %v1343
    %1789 = vmatpush1.bf16.msra.mxu0 %v1342
    %1790 = vmatprep.subr.bf16.mxu0 %v1347
    %1791 = vmatpush1.bf16.msra.mxu0 %v1346
    %1792 = vmatprep.subr.bf16.mxu0 %v1351
    %1793 = vmatpush1.bf16.msra.mxu0 %v1350
    %1794 = vmatprep.subr.bf16.mxu0 %v1355
    %1795 = vmatpush1.bf16.msra.mxu0 %v1354
    %1796 = vmatprep.subr.bf16.mxu0 %v1359
    %1797 = vmatpush1.bf16.msra.mxu0 %v1358
    %1798 = vmatprep.subr.bf16.mxu0 %v1363
    %1799 = vmatpush1.bf16.msra.mxu0 %v1362
    %1800 = vmatprep.mubr.bf16.mxu0 %v125
    %1801 = vmatmul.mubr.bf16.gmra.mrb[0].mxu0 %v124
    %v1802 = vpop.f32.mrb[0].mxu0
    %v1803 = vadd.f32 %v1762, %v1802
    %v1804 = vpop.f32.mrb[0].mxu0
    %v1805 = vadd.f32 %v1764, %v1804
    %v1806 = vpop.f32.mrb[0].mxu0
    %v1807 = vpop.f32.mrb[0].mxu0
    %1808 = vdwg.mxu0
    %1809 = vmatprep.subr.bf16.mxu0 %v1367
    %1810 = vmatpush1.bf16.msra.mxu0 %v1366
    %1811 = vmatprep.subr.bf16.mxu0 %v1371
    %1812 = vmatpush1.bf16.msra.mxu0 %v1370
    %1813 = vmatprep.subr.bf16.mxu0 %v1375
    %1814 = vmatpush1.bf16.msra.mxu0 %v1374
    %1815 = vmatprep.subr.bf16.mxu0 %v1379
    %1816 = vmatpush1.bf16.msra.mxu0 %v1378
    %1817 = vmatprep.subr.bf16.mxu0 %v1383
    %1818 = vmatpush1.bf16.msra.mxu0 %v1382
    %1819 = vmatprep.subr.bf16.mxu0 %v1387
    %1820 = vmatpush1.bf16.msra.mxu0 %v1386
    %1821 = vmatprep.subr.bf16.mxu0 %v1391
    %1822 = vmatpush1.bf16.msra.mxu0 %v1390
    %1823 = vmatprep.subr.bf16.mxu0 %v1395
    %1824 = vmatpush1.bf16.msra.mxu0 %v1394
    %1825 = vmatprep.subr.bf16.mxu0 %v1399
    %1826 = vmatpush1.bf16.msra.mxu0 %v1398
    %1827 = vmatprep.subr.bf16.mxu0 %v1403
    %1828 = vmatpush1.bf16.msra.mxu0 %v1402
    %1829 = vmatprep.subr.bf16.mxu0 %v1407
    %1830 = vmatpush1.bf16.msra.mxu0 %v1406
    %1831 = vmatprep.subr.bf16.mxu0 %v1411
    %1832 = vmatpush1.bf16.msra.mxu0 %v1410
    %1833 = vmatprep.subr.bf16.mxu0 %v1415
    %1834 = vmatpush1.bf16.msra.mxu0 %v1414
    %1835 = vmatprep.subr.bf16.mxu0 %v1419
    %1836 = vmatpush1.bf16.msra.mxu0 %v1418
    %1837 = vmatprep.subr.bf16.mxu0 %v1423
    %1838 = vmatpush1.bf16.msra.mxu0 %v1422
    %1839 = vmatprep.subr.bf16.mxu0 %v1427
    %1840 = vmatpush1.bf16.msra.mxu0 %v1426
    %1841 = vmatprep.mubr.bf16.mxu0 %v127
    %1842 = vmatmul.mubr.bf16.gmra.mrb[0].mxu0 %v126
    %v1843 = vpop.f32.mrb[0].mxu0
    %v1844 = vadd.f32 %v1803, %v1843
    %v1845 = vpop.f32.mrb[0].mxu0
    %v1846 = vadd.f32 %v1805, %v1845
    %v1847 = vpop.f32.mrb[0].mxu0
    %v1848 = vpop.f32.mrb[0].mxu0
    %1849 = vdwg.mxu0
    %1850 = vmatprep.subr.bf16.mxu0 %v1177
    %1851 = vmatpush1.bf16.msra.mxu0 %v1176
    %1852 = vmatprep.subr.bf16.mxu0 %v1181
    %1853 = vmatpush1.bf16.msra.mxu0 %v1180
    %1854 = vmatprep.subr.bf16.mxu0 %v1185
    %1855 = vmatpush1.bf16.msra.mxu0 %v1184
    %1856 = vmatprep.subr.bf16.mxu0 %v1189
    %1857 = vmatpush1.bf16.msra.mxu0 %v1188
    %1858 = vmatprep.subr.bf16.mxu0 %v1193
    %1859 = vmatpush1.bf16.msra.mxu0 %v1192
    %1860 = vmatprep.subr.bf16.mxu0 %v1197
    %1861 = vmatpush1.bf16.msra.mxu0 %v1196
    %1862 = vmatprep.subr.bf16.mxu0 %v1201
    %1863 = vmatpush1.bf16.msra.mxu0 %v1200
    %1864 = vmatprep.subr.bf16.mxu0 %v1205
    %1865 = vmatpush1.bf16.msra.mxu0 %v1204
    %1866 = vmatprep.subr.bf16.mxu0 %v1209
    %1867 = vmatpush1.bf16.msra.mxu0 %v1208
    %1868 = vmatprep.subr.bf16.mxu0 %v1213
    %1869 = vmatpush1.bf16.msra.mxu0 %v1212
    %1870 = vmatprep.subr.bf16.mxu0 %v1217
    %1871 = vmatpush1.bf16.msra.mxu0 %v1216
    %1872 = vmatprep.subr.bf16.mxu0 %v1221
    %1873 = vmatpush1.bf16.msra.mxu0 %v1220
    %1874 = vmatprep.subr.bf16.mxu0 %v1225
    %1875 = vmatpush1.bf16.msra.mxu0 %v1224
    %1876 = vmatprep.subr.bf16.mxu0 %v1229
    %1877 = vmatpush1.bf16.msra.mxu0 %v1228
    %1878 = vmatprep.subr.bf16.mxu0 %v1233
    %1879 = vmatpush1.bf16.msra.mxu0 %v1232
    %1880 = vmatprep.subr.bf16.mxu0 %v1237
    %1881 = vmatpush1.bf16.msra.mxu0 %v1236
    %1882 = vmatprep.mubr.bf16.mxu0 %v121
    %1883 = vmatmul.mubr.bf16.gmra.mrb[0].mxu0 %v120
    %v1884 = vpop.f32.mrb[0].mxu0
    %v1885 = vadd.f32 %v397, %v1884
    %v1886 = vpop.f32.mrb[0].mxu0
    %v1887 = vadd.f32 %v401, %v1886
    %v1888 = vpop.f32.mrb[0].mxu0
    %v1889 = vpop.f32.mrb[0].mxu0
    %1890 = vdwg.mxu0
    %1891 = vmatprep.subr.bf16.mxu0 %v1241
    %1892 = vmatpush1.bf16.msra.mxu0 %v1240
    %1893 = vmatprep.subr.bf16.mxu0 %v1245
    %1894 = vmatpush1.bf16.msra.mxu0 %v1244
    %1895 = vmatprep.subr.bf16.mxu0 %v1249
    %1896 = vmatpush1.bf16.msra.mxu0 %v1248
    %1897 = vmatprep.subr.bf16.mxu0 %v1253
    %1898 = vmatpush1.bf16.msra.mxu0 %v1252
    %1899 = vmatprep.subr.bf16.mxu0 %v1257
    %1900 = vmatpush1.bf16.msra.mxu0 %v1256
    %1901 = vmatprep.subr.bf16.mxu0 %v1261
    %1902 = vmatpush1.bf16.msra.mxu0 %v1260
    %1903 = vmatprep.subr.bf16.mxu0 %v1265
    %1904 = vmatpush1.bf16.msra.mxu0 %v1264
    %1905 = vmatprep.subr.bf16.mxu0 %v1269
    %1906 = vmatpush1.bf16.msra.mxu0 %v1268
    %1907 = vmatprep.subr.bf16.mxu0 %v1273
    %1908 = vmatpush1.bf16.msra.mxu0 %v1272
    %1909 = vmatprep.subr.bf16.mxu0 %v1277
    %1910 = vmatpush1.bf16.msra.mxu0 %v1276
    %1911 = vmatprep.subr.bf16.mxu0 %v1281
    %1912 = vmatpush1.bf16.msra.mxu0 %v1280
    %1913 = vmatprep.subr.bf16.mxu0 %v1285
    %1914 = vmatpush1.bf16.msra.mxu0 %v1284
    %1915 = vmatprep.subr.bf16.mxu0 %v1289
    %1916 = vmatpush1.bf16.msra.mxu0 %v1288
    %1917 = vmatprep.subr.bf16.mxu0 %v1293
    %1918 = vmatpush1.bf16.msra.mxu0 %v1292
    %1919 = vmatprep.subr.bf16.mxu0 %v1297
    %1920 = vmatpush1.bf16.msra.mxu0 %v1296
    %1921 = vmatprep.subr.bf16.mxu0 %v1301
    %1922 = vmatpush1.bf16.msra.mxu0 %v1300
    %1923 = vmatprep.mubr.bf16.mxu0 %v123
    %1924 = vmatmul.mubr.bf16.gmra.mrb[0].mxu0 %v122
    %v1925 = vpop.f32.mrb[0].mxu0
    %v1926 = vadd.f32 %v1885, %v1925
    %v1927 = vpop.f32.mrb[0].mxu0
    %v1928 = vadd.f32 %v1887, %v1927
    %v1929 = vpop.f32.mrb[0].mxu0
    %v1930 = vpop.f32.mrb[0].mxu0
    %1931 = vdwg.mxu0
    %1932 = vmatprep.subr.bf16.mxu0 %v1305
    %1933 = vmatpush1.bf16.msra.mxu0 %v1304
    %1934 = vmatprep.subr.bf16.mxu0 %v1309
    %1935 = vmatpush1.bf16.msra.mxu0 %v1308
    %1936 = vmatprep.subr.bf16.mxu0 %v1313
    %1937 = vmatpush1.bf16.msra.mxu0 %v1312
    %1938 = vmatprep.subr.bf16.mxu0 %v1317
    %1939 = vmatpush1.bf16.msra.mxu0 %v1316
    %1940 = vmatprep.subr.bf16.mxu0 %v1321
    %1941 = vmatpush1.bf16.msra.mxu0 %v1320
    %1942 = vmatprep.subr.bf16.mxu0 %v1325
    %1943 = vmatpush1.bf16.msra.mxu0 %v1324
    %1944 = vmatprep.subr.bf16.mxu0 %v1329
    %1945 = vmatpush1.bf16.msra.mxu0 %v1328
    %1946 = vmatprep.subr.bf16.mxu0 %v1333
    %1947 = vmatpush1.bf16.msra.mxu0 %v1332
    %1948 = vmatprep.subr.bf16.mxu0 %v1337
    %1949 = vmatpush1.bf16.msra.mxu0 %v1336
    %1950 = vmatprep.subr.bf16.mxu0 %v1341
    %1951 = vmatpush1.bf16.msra.mxu0 %v1340
    %1952 = vmatprep.subr.bf16.mxu0 %v1345
    %1953 = vmatpush1.bf16.msra.mxu0 %v1344
    %1954 = vmatprep.subr.bf16.mxu0 %v1349
    %1955 = vmatpush1.bf16.msra.mxu0 %v1348
    %1956 = vmatprep.subr.bf16.mxu0 %v1353
    %1957 = vmatpush1.bf16.msra.mxu0 %v1352
    %1958 = vmatprep.subr.bf16.mxu0 %v1357
    %1959 = vmatpush1.bf16.msra.mxu0 %v1356
    %1960 = vmatprep.subr.bf16.mxu0 %v1361
    %1961 = vmatpush1.bf16.msra.mxu0 %v1360
    %1962 = vmatprep.subr.bf16.mxu0 %v1365
    %1963 = vmatpush1.bf16.msra.mxu0 %v1364
    %1964 = vmatprep.mubr.bf16.mxu0 %v125
    %1965 = vmatmul.mubr.bf16.gmra.mrb[0].mxu0 %v124
    %v1966 = vpop.f32.mrb[0].mxu0
    %v1967 = vadd.f32 %v1926, %v1966
    %v1968 = vpop.f32.mrb[0].mxu0
    %v1969 = vadd.f32 %v1928, %v1968
    %v1970 = vpop.f32.mrb[0].mxu0
    %v1971 = vpop.f32.mrb[0].mxu0
    %1972 = vdwg.mxu0
    %1973 = vmatprep.subr.bf16.mxu0 %v1369
    %1974 = vmatpush1.bf16.msra.mxu0 %v1368
    %1975 = vmatprep.subr.bf16.mxu0 %v1373
    %1976 = vmatpush1.bf16.msra.mxu0 %v1372
    %1977 = vmatprep.subr.bf16.mxu0 %v1377
    %1978 = vmatpush1.bf16.msra.mxu0 %v1376
    %1979 = vmatprep.subr.bf16.mxu0 %v1381
    %1980 = vmatpush1.bf16.msra.mxu0 %v1380
    %1981 = vmatprep.subr.bf16.mxu0 %v1385
    %1982 = vmatpush1.bf16.msra.mxu0 %v1384
    %1983 = vmatprep.subr.bf16.mxu0 %v1389
    %1984 = vmatpush1.bf16.msra.mxu0 %v1388
    %1985 = vmatprep.subr.bf16.mxu0 %v1393
    %1986 = vmatpush1.bf16.msra.mxu0 %v1392
    %1987 = vmatprep.subr.bf16.mxu0 %v1397
    %1988 = vmatpush1.bf16.msra.mxu0 %v1396
    %1989 = vmatprep.subr.bf16.mxu0 %v1401
    %1990 = vmatpush1.bf16.msra.mxu0 %v1400
    %1991 = vmatprep.subr.bf16.mxu0 %v1405
    %1992 = vmatpush1.bf16.msra.mxu0 %v1404
    %1993 = vmatprep.subr.bf16.mxu0 %v1409
    %1994 = vmatpush1.bf16.msra.mxu0 %v1408
    %1995 = vmatprep.subr.bf16.mxu0 %v1413
    %1996 = vmatpush1.bf16.msra.mxu0 %v1412
    %1997 = vmatprep.subr.bf16.mxu0 %v1417
    %1998 = vmatpush1.bf16.msra.mxu0 %v1416
    %1999 = vmatprep.subr.bf16.mxu0 %v1421
    %2000 = vmatpush1.bf16.msra.mxu0 %v1420
    %2001 = vmatprep.subr.bf16.mxu0 %v1425
    %2002 = vmatpush1.bf16.msra.mxu0 %v1424
    %2003 = vmatprep.subr.bf16.mxu0 %v1429
    %2004 = vmatpush1.bf16.msra.mxu0 %v1428
    %2005 = vmatprep.mubr.bf16.mxu0 %v127
    %2006 = vmatmul.mubr.bf16.gmra.mrb[0].mxu0 %v126
    %v2007 = vpop.f32.mrb[0].mxu0
    %v2008 = vadd.f32 %v1967, %v2007
    %v2009 = vpop.f32.mrb[0].mxu0
    %v2010 = vadd.f32 %v1969, %v2009
    %v2011 = vpop.f32.mrb[0].mxu0
    %v2012 = vpop.f32.mrb[0].mxu0
    %2013 = vdwg.mxu0
    %v2014 = vmax.f32 %v1844, 0.0
    %v2015 = vmax.f32 %v1846, 0.0
    %v2016 = vmax.f32 %v2008, 0.0
    %v2017 = vmax.f32 %v2010, 0.0
    %v2018 = vpack.c.bf16 %v2014, %v2014
    %v2019 = vpack.c.bf16 %v2015, %v2015
    %v2020 = vpack.c.bf16 %v2016, %v2016
    %v2021 = vpack.c.bf16 %v2017, %v2017
    %v2022 = vld [vmem:[%s4] sm:$0xff]
    %v2023 = vld [vmem:[%s4 + $0x8] sm:$0xff]
    %v2024 = vld [vmem:[%s4 + $0x10] sm:$0xff]
    %v2025 = vld [vmem:[%s4 + $0x18] sm:$0xff]
    %v2026 = vld [vmem:[%s4 + $0x20] sm:$0xff]
    %v2027 = vld [vmem:[%s4 + $0x28] sm:$0xff]
    %v2028 = vld [vmem:[%s4 + $0x30] sm:$0xff]
    %v2029 = vld [vmem:[%s4 + $0x38] sm:$0xff]
    %v2030 = vld [vmem:[%s4 + $0x40] sm:$0xff]
    %v2031 = vld [vmem:[%s4 + $0x48] sm:$0xff]
    %v2032 = vld [vmem:[%s4 + $0x50] sm:$0xff]
    %v2033 = vld [vmem:[%s4 + $0x58] sm:$0xff]
    %v2034 = vld [vmem:[%s4 + $0x60] sm:$0xff]
    %v2035 = vld [vmem:[%s4 + $0x68] sm:$0xff]
    %v2036 = vld [vmem:[%s4 + $0x70] sm:$0xff]
    %v2037 = vld [vmem:[%s4 + $0x78] sm:$0xff]
    %v2038 = vld [vmem:[%s4 + $0x80] sm:$0xff]
    %v2039 = vld [vmem:[%s4 + $0x88] sm:$0xff]
    %v2040 = vld [vmem:[%s4 + $0x90] sm:$0xff]
    %v2041 = vld [vmem:[%s4 + $0x98] sm:$0xff]
    %v2042 = vld [vmem:[%s4 + $0xa0] sm:$0xff]
    %v2043 = vld [vmem:[%s4 + $0xa8] sm:$0xff]
    %v2044 = vld [vmem:[%s4 + $0xb0] sm:$0xff]
    %v2045 = vld [vmem:[%s4 + $0xb8] sm:$0xff]
    %v2046 = vld [vmem:[%s4 + $0xc0] sm:$0xff]
    %v2047 = vld [vmem:[%s4 + $0xc8] sm:$0xff]
    %v2048 = vld [vmem:[%s4 + $0xd0] sm:$0xff]
    %v2049 = vld [vmem:[%s4 + $0xd8] sm:$0xff]
    %v2050 = vld [vmem:[%s4 + $0xe0] sm:$0xff]
    %v2051 = vld [vmem:[%s4 + $0xe8] sm:$0xff]
    %v2052 = vld [vmem:[%s4 + $0xf0] sm:$0xff]
    %v2053 = vld [vmem:[%s4 + $0xf8] sm:$0xff]
    %v2054 = vld [vmem:[%s4 + $0x100] sm:$0xff]
    %v2055 = vld [vmem:[%s4 + $0x108] sm:$0xff]
    %v2056 = vld [vmem:[%s4 + $0x110] sm:$0xff]
    %v2057 = vld [vmem:[%s4 + $0x118] sm:$0xff]
    %v2058 = vld [vmem:[%s4 + $0x120] sm:$0xff]
    %v2059 = vld [vmem:[%s4 + $0x128] sm:$0xff]
    %v2060 = vld [vmem:[%s4 + $0x130] sm:$0xff]
    %v2061 = vld [vmem:[%s4 + $0x138] sm:$0xff]
    %v2062 = vld [vmem:[%s4 + $0x140] sm:$0xff]
    %v2063 = vld [vmem:[%s4 + $0x148] sm:$0xff]
    %v2064 = vld [vmem:[%s4 + $0x150] sm:$0xff]
    %v2065 = vld [vmem:[%s4 + $0x158] sm:$0xff]
    %v2066 = vld [vmem:[%s4 + $0x160] sm:$0xff]
    %v2067 = vld [vmem:[%s4 + $0x168] sm:$0xff]
    %v2068 = vld [vmem:[%s4 + $0x170] sm:$0xff]
    %v2069 = vld [vmem:[%s4 + $0x178] sm:$0xff]
    %v2070 = vld [vmem:[%s4 + $0x180] sm:$0xff]
    %v2071 = vld [vmem:[%s4 + $0x188] sm:$0xff]
    %v2072 = vld [vmem:[%s4 + $0x190] sm:$0xff]
    %v2073 = vld [vmem:[%s4 + $0x198] sm:$0xff]
    %v2074 = vld [vmem:[%s4 + $0x1a0] sm:$0xff]
    %v2075 = vld [vmem:[%s4 + $0x1a8] sm:$0xff]
    %v2076 = vld [vmem:[%s4 + $0x1b0] sm:$0xff]
    %v2077 = vld [vmem:[%s4 + $0x1b8] sm:$0xff]
    %v2078 = vld [vmem:[%s4 + $0x1c0] sm:$0xff]
    %v2079 = vld [vmem:[%s4 + $0x1c8] sm:$0xff]
    %v2080 = vld [vmem:[%s4 + $0x1d0] sm:$0xff]
    %v2081 = vld [vmem:[%s4 + $0x1d8] sm:$0xff]
    %v2082 = vld [vmem:[%s4 + $0x1e0] sm:$0xff]
    %v2083 = vld [vmem:[%s4 + $0x1e8] sm:$0xff]
    %v2084 = vld [vmem:[%s4 + $0x1f0] sm:$0xff]
    %v2085 = vld [vmem:[%s4 + $0x1f8] sm:$0xff]
    %v2086 = vld [vmem:[%s5] sm:$0x3]
    %v2088 = vlaneseq
    %v2089 = vshrl.u32 %v2088, 7
    %v2090 = vsub.s32 0, %v2089
    %v2091 = vrot.slane %v2086, %v2090
    %v2092 = vlaneseq
    %v2093 = vshrl.u32 %v2092, 7
    %v2094 = vsub.s32 1, %v2093
    %v2095 = vrot.slane %v2086, %v2094
    %v2162 = vunpack.c.l.b16 %v2022
    %v2163 = vunpack.c.h.b16 %v2022
    %v2164 = vunpack.c.l.b16 %v2023
    %v2165 = vunpack.c.h.b16 %v2023
    %v2166 = vunpack.c.l.b16 %v2024
    %v2167 = vunpack.c.h.b16 %v2024
    %v2168 = vunpack.c.l.b16 %v2025
    %v2169 = vunpack.c.h.b16 %v2025
    %v2170 = vunpack.c.l.b16 %v2026
    %v2171 = vunpack.c.h.b16 %v2026
    %v2172 = vunpack.c.l.b16 %v2027
    %v2173 = vunpack.c.h.b16 %v2027
    %v2174 = vunpack.c.l.b16 %v2028
    %v2175 = vunpack.c.h.b16 %v2028
    %v2176 = vunpack.c.l.b16 %v2029
    %v2177 = vunpack.c.h.b16 %v2029
    %v2178 = vunpack.c.l.b16 %v2030
    %v2179 = vunpack.c.h.b16 %v2030
    %v2180 = vunpack.c.l.b16 %v2031
    %v2181 = vunpack.c.h.b16 %v2031
    %v2182 = vunpack.c.l.b16 %v2032
    %v2183 = vunpack.c.h.b16 %v2032
    %v2184 = vunpack.c.l.b16 %v2033
    %v2185 = vunpack.c.h.b16 %v2033
    %v2186 = vunpack.c.l.b16 %v2034
    %v2187 = vunpack.c.h.b16 %v2034
    %v2188 = vunpack.c.l.b16 %v2035
    %v2189 = vunpack.c.h.b16 %v2035
    %v2190 = vunpack.c.l.b16 %v2036
    %v2191 = vunpack.c.h.b16 %v2036
    %v2192 = vunpack.c.l.b16 %v2037
    %v2193 = vunpack.c.h.b16 %v2037
    %v2194 = vunpack.c.l.b16 %v2038
    %v2195 = vunpack.c.h.b16 %v2038
    %v2196 = vunpack.c.l.b16 %v2039
    %v2197 = vunpack.c.h.b16 %v2039
    %v2198 = vunpack.c.l.b16 %v2040
    %v2199 = vunpack.c.h.b16 %v2040
    %v2200 = vunpack.c.l.b16 %v2041
    %v2201 = vunpack.c.h.b16 %v2041
    %v2202 = vunpack.c.l.b16 %v2042
    %v2203 = vunpack.c.h.b16 %v2042
    %v2204 = vunpack.c.l.b16 %v2043
    %v2205 = vunpack.c.h.b16 %v2043
    %v2206 = vunpack.c.l.b16 %v2044
    %v2207 = vunpack.c.h.b16 %v2044
    %v2208 = vunpack.c.l.b16 %v2045
    %v2209 = vunpack.c.h.b16 %v2045
    %v2210 = vunpack.c.l.b16 %v2046
    %v2211 = vunpack.c.h.b16 %v2046
    %v2212 = vunpack.c.l.b16 %v2047
    %v2213 = vunpack.c.h.b16 %v2047
    %v2214 = vunpack.c.l.b16 %v2048
    %v2215 = vunpack.c.h.b16 %v2048
    %v2216 = vunpack.c.l.b16 %v2049
    %v2217 = vunpack.c.h.b16 %v2049
    %v2218 = vunpack.c.l.b16 %v2050
    %v2219 = vunpack.c.h.b16 %v2050
    %v2220 = vunpack.c.l.b16 %v2051
    %v2221 = vunpack.c.h.b16 %v2051
    %v2222 = vunpack.c.l.b16 %v2052
    %v2223 = vunpack.c.h.b16 %v2052
    %v2224 = vunpack.c.l.b16 %v2053
    %v2225 = vunpack.c.h.b16 %v2053
    %v2226 = vunpack.c.l.b16 %v2054
    %v2227 = vunpack.c.h.b16 %v2054
    %v2228 = vunpack.c.l.b16 %v2055
    %v2229 = vunpack.c.h.b16 %v2055
    %v2230 = vunpack.c.l.b16 %v2056
    %v2231 = vunpack.c.h.b16 %v2056
    %v2232 = vunpack.c.l.b16 %v2057
    %v2233 = vunpack.c.h.b16 %v2057
    %v2234 = vunpack.c.l.b16 %v2058
    %v2235 = vunpack.c.h.b16 %v2058
    %v2236 = vunpack.c.l.b16 %v2059
    %v2237 = vunpack.c.h.b16 %v2059
    %v2238 = vunpack.c.l.b16 %v2060
    %v2239 = vunpack.c.h.b16 %v2060
    %v2240 = vunpack.c.l.b16 %v2061
    %v2241 = vunpack.c.h.b16 %v2061
    %v2242 = vunpack.c.l.b16 %v2062
    %v2243 = vunpack.c.h.b16 %v2062
    %v2244 = vunpack.c.l.b16 %v2063
    %v2245 = vunpack.c.h.b16 %v2063
    %v2246 = vunpack.c.l.b16 %v2064
    %v2247 = vunpack.c.h.b16 %v2064
    %v2248 = vunpack.c.l.b16 %v2065
    %v2249 = vunpack.c.h.b16 %v2065
    %v2250 = vunpack.c.l.b16 %v2066
    %v2251 = vunpack.c.h.b16 %v2066
    %v2252 = vunpack.c.l.b16 %v2067
    %v2253 = vunpack.c.h.b16 %v2067
    %v2254 = vunpack.c.l.b16 %v2068
    %v2255 = vunpack.c.h.b16 %v2068
    %v2256 = vunpack.c.l.b16 %v2069
    %v2257 = vunpack.c.h.b16 %v2069
    %v2258 = vunpack.c.l.b16 %v2070
    %v2259 = vunpack.c.h.b16 %v2070
    %v2260 = vunpack.c.l.b16 %v2071
    %v2261 = vunpack.c.h.b16 %v2071
    %v2262 = vunpack.c.l.b16 %v2072
    %v2263 = vunpack.c.h.b16 %v2072
    %v2264 = vunpack.c.l.b16 %v2073
    %v2265 = vunpack.c.h.b16 %v2073
    %v2266 = vunpack.c.l.b16 %v2074
    %v2267 = vunpack.c.h.b16 %v2074
    %v2268 = vunpack.c.l.b16 %v2075
    %v2269 = vunpack.c.h.b16 %v2075
    %v2270 = vunpack.c.l.b16 %v2076
    %v2271 = vunpack.c.h.b16 %v2076
    %v2272 = vunpack.c.l.b16 %v2077
    %v2273 = vunpack.c.h.b16 %v2077
    %v2274 = vunpack.c.l.b16 %v2078
    %v2275 = vunpack.c.h.b16 %v2078
    %v2276 = vunpack.c.l.b16 %v2079
    %v2277 = vunpack.c.h.b16 %v2079
    %v2278 = vunpack.c.l.b16 %v2080
    %v2279 = vunpack.c.h.b16 %v2080
    %v2280 = vunpack.c.l.b16 %v2081
    %v2281 = vunpack.c.h.b16 %v2081
    %v2282 = vunpack.c.l.b16 %v2082
    %v2283 = vunpack.c.h.b16 %v2082
    %v2284 = vunpack.c.l.b16 %v2083
    %v2285 = vunpack.c.h.b16 %v2083
    %v2286 = vunpack.c.l.b16 %v2084
    %v2287 = vunpack.c.h.b16 %v2084
    %v2288 = vunpack.c.l.b16 %v2085
    %v2289 = vunpack.c.h.b16 %v2085
    %v2290 = vpack.c.b16 %v2164, %v2162
    %v2291 = vpack.c.b16 %v2165, %v2163
    %v2292 = vpack.c.b16 %v2168, %v2166
    %v2293 = vpack.c.b16 %v2169, %v2167
    %v2294 = vpack.c.b16 %v2172, %v2170
    %v2295 = vpack.c.b16 %v2173, %v2171
    %v2296 = vpack.c.b16 %v2176, %v2174
    %v2297 = vpack.c.b16 %v2177, %v2175
    %v2298 = vpack.c.b16 %v2180, %v2178
    %v2299 = vpack.c.b16 %v2181, %v2179
    %v2300 = vpack.c.b16 %v2184, %v2182
    %v2301 = vpack.c.b16 %v2185, %v2183
    %v2302 = vpack.c.b16 %v2188, %v2186
    %v2303 = vpack.c.b16 %v2189, %v2187
    %v2304 = vpack.c.b16 %v2192, %v2190
    %v2305 = vpack.c.b16 %v2193, %v2191
    %v2306 = vpack.c.b16 %v2196, %v2194
    %v2307 = vpack.c.b16 %v2197, %v2195
    %v2308 = vpack.c.b16 %v2200, %v2198
    %v2309 = vpack.c.b16 %v2201, %v2199
    %v2310 = vpack.c.b16 %v2204, %v2202
    %v2311 = vpack.c.b16 %v2205, %v2203
    %v2312 = vpack.c.b16 %v2208, %v2206
    %v2313 = vpack.c.b16 %v2209, %v2207
    %v2314 = vpack.c.b16 %v2212, %v2210
    %v2315 = vpack.c.b16 %v2213, %v2211
    %v2316 = vpack.c.b16 %v2216, %v2214
    %v2317 = vpack.c.b16 %v2217, %v2215
    %v2318 = vpack.c.b16 %v2220, %v2218
    %v2319 = vpack.c.b16 %v2221, %v2219
    %v2320 = vpack.c.b16 %v2224, %v2222
    %v2321 = vpack.c.b16 %v2225, %v2223
    %v2322 = vpack.c.b16 %v2228, %v2226
    %v2323 = vpack.c.b16 %v2229, %v2227
    %v2324 = vpack.c.b16 %v2232, %v2230
    %v2325 = vpack.c.b16 %v2233, %v2231
    %v2326 = vpack.c.b16 %v2236, %v2234
    %v2327 = vpack.c.b16 %v2237, %v2235
    %v2328 = vpack.c.b16 %v2240, %v2238
    %v2329 = vpack.c.b16 %v2241, %v2239
    %v2330 = vpack.c.b16 %v2244, %v2242
    %v2331 = vpack.c.b16 %v2245, %v2243
    %v2332 = vpack.c.b16 %v2248, %v2246
    %v2333 = vpack.c.b16 %v2249, %v2247
    %v2334 = vpack.c.b16 %v2252, %v2250
    %v2335 = vpack.c.b16 %v2253, %v2251
    %v2336 = vpack.c.b16 %v2256, %v2254
    %v2337 = vpack.c.b16 %v2257, %v2255
    %v2338 = vpack.c.b16 %v2260, %v2258
    %v2339 = vpack.c.b16 %v2261, %v2259
    %v2340 = vpack.c.b16 %v2264, %v2262
    %v2341 = vpack.c.b16 %v2265, %v2263
    %v2342 = vpack.c.b16 %v2268, %v2266
    %v2343 = vpack.c.b16 %v2269, %v2267
    %v2344 = vpack.c.b16 %v2272, %v2270
    %v2345 = vpack.c.b16 %v2273, %v2271
    %v2346 = vpack.c.b16 %v2276, %v2274
    %v2347 = vpack.c.b16 %v2277, %v2275
    %v2348 = vpack.c.b16 %v2280, %v2278
    %v2349 = vpack.c.b16 %v2281, %v2279
    %v2350 = vpack.c.b16 %v2284, %v2282
    %v2351 = vpack.c.b16 %v2285, %v2283
    %v2352 = vpack.c.b16 %v2288, %v2286
    %v2353 = vpack.c.b16 %v2289, %v2287
    %2418 = vmatprep.subr.bf16.mxu0 %v2291
    %2419 = vmatpush1.bf16.msra.mxu0 %v2290
    %2420 = vmatprep.subr.bf16.mxu0 %v2293
    %2421 = vmatpush1.bf16.msra.mxu0 %v2292
    %2422 = vmatprep.subr.bf16.mxu0 %v2295
    %2423 = vmatpush1.bf16.msra.mxu0 %v2294
    %2424 = vmatprep.subr.bf16.mxu0 %v2297
    %2425 = vmatpush1.bf16.msra.mxu0 %v2296
    %2426 = vmatprep.subr.bf16.mxu0 %v2299
    %2427 = vmatpush1.bf16.msra.mxu0 %v2298
    %2428 = vmatprep.subr.bf16.mxu0 %v2301
    %2429 = vmatpush1.bf16.msra.mxu0 %v2300
    %2430 = vmatprep.subr.bf16.mxu0 %v2303
    %2431 = vmatpush1.bf16.msra.mxu0 %v2302
    %2432 = vmatprep.subr.bf16.mxu0 %v2305
    %2433 = vmatpush1.bf16.msra.mxu0 %v2304
    %2434 = vmatprep.subr.bf16.mxu0 %v2307
    %2435 = vmatpush1.bf16.msra.mxu0 %v2306
    %2436 = vmatprep.subr.bf16.mxu0 %v2309
    %2437 = vmatpush1.bf16.msra.mxu0 %v2308
    %2438 = vmatprep.subr.bf16.mxu0 %v2311
    %2439 = vmatpush1.bf16.msra.mxu0 %v2310
    %2440 = vmatprep.subr.bf16.mxu0 %v2313
    %2441 = vmatpush1.bf16.msra.mxu0 %v2312
    %2442 = vmatprep.subr.bf16.mxu0 %v2315
    %2443 = vmatpush1.bf16.msra.mxu0 %v2314
    %2444 = vmatprep.subr.bf16.mxu0 %v2317
    %2445 = vmatpush1.bf16.msra.mxu0 %v2316
    %2446 = vmatprep.subr.bf16.mxu0 %v2319
    %2447 = vmatpush1.bf16.msra.mxu0 %v2318
    %2448 = vmatprep.subr.bf16.mxu0 %v2321
    %2449 = vmatpush1.bf16.msra.mxu0 %v2320
    %2450 = vmatprep.mubr.bf16.mxu0 %v2019
    %2451 = vmatmul.mubr.bf16.gmra.mrb[0].mxu0 %v2018
    %v2452 = vpop.f32.mrb[0].mxu0
    %v2453 = vadd.f32 %v2091, %v2452
    %v2454 = vpop.f32.mrb[0].mxu0
    %v2455 = vadd.f32 %v2095, %v2454
    %v2456 = vpop.f32.mrb[0].mxu0
    %v2457 = vpop.f32.mrb[0].mxu0
    %2458 = vdwg.mxu0
    %2459 = vmatprep.subr.bf16.mxu0 %v2323
    %2460 = vmatpush1.bf16.msra.mxu0 %v2322
    %2461 = vmatprep.subr.bf16.mxu0 %v2325
    %2462 = vmatpush1.bf16.msra.mxu0 %v2324
    %2463 = vmatprep.subr.bf16.mxu0 %v2327
    %2464 = vmatpush1.bf16.msra.mxu0 %v2326
    %2465 = vmatprep.subr.bf16.mxu0 %v2329
    %2466 = vmatpush1.bf16.msra.mxu0 %v2328
    %2467 = vmatprep.subr.bf16.mxu0 %v2331
    %2468 = vmatpush1.bf16.msra.mxu0 %v2330
    %2469 = vmatprep.subr.bf16.mxu0 %v2333
    %2470 = vmatpush1.bf16.msra.mxu0 %v2332
    %2471 = vmatprep.subr.bf16.mxu0 %v2335
    %2472 = vmatpush1.bf16.msra.mxu0 %v2334
    %2473 = vmatprep.subr.bf16.mxu0 %v2337
    %2474 = vmatpush1.bf16.msra.mxu0 %v2336
    %2475 = vmatprep.subr.bf16.mxu0 %v2339
    %2476 = vmatpush1.bf16.msra.mxu0 %v2338
    %2477 = vmatprep.subr.bf16.mxu0 %v2341
    %2478 = vmatpush1.bf16.msra.mxu0 %v2340
    %2479 = vmatprep.subr.bf16.mxu0 %v2343
    %2480 = vmatpush1.bf16.msra.mxu0 %v2342
    %2481 = vmatprep.subr.bf16.mxu0 %v2345
    %2482 = vmatpush1.bf16.msra.mxu0 %v2344
    %2483 = vmatprep.subr.bf16.mxu0 %v2347
    %2484 = vmatpush1.bf16.msra.mxu0 %v2346
    %2485 = vmatprep.subr.bf16.mxu0 %v2349
    %2486 = vmatpush1.bf16.msra.mxu0 %v2348
    %2487 = vmatprep.subr.bf16.mxu0 %v2351
    %2488 = vmatpush1.bf16.msra.mxu0 %v2350
    %2489 = vmatprep.subr.bf16.mxu0 %v2353
    %2490 = vmatpush1.bf16.msra.mxu0 %v2352
    %2491 = vmatprep.mubr.bf16.mxu0 %v2021
    %2492 = vmatmul.mubr.bf16.gmra.mrb[0].mxu0 %v2020
    %v2493 = vpop.f32.mrb[0].mxu0
    %v2494 = vadd.f32 %v2453, %v2493
    %v2495 = vpop.f32.mrb[0].mxu0
    %v2496 = vadd.f32 %v2455, %v2495
    %v2497 = vpop.f32.mrb[0].mxu0
    %v2498 = vpop.f32.mrb[0].mxu0
    %2499 = vdwg.mxu0
    %v2500 = vmax.f32 %v2494, 0.0
    %v2501 = vmax.f32 %v2496, 0.0
    %v2502 = vpack.c.bf16 %v2500, %v2500
    %v2503 = vpack.c.bf16 %v2501, %v2501
    %v2504 = vld [vmem:[%s6] sm:$0xf]
    %v2505 = vld [vmem:[%s6 + $0x4] sm:$0xf]
    %v2506 = vld [vmem:[%s6 + $0x8] sm:$0xf]
    %v2507 = vld [vmem:[%s6 + $0xc] sm:$0xf]
    %v2508 = vld [vmem:[%s6 + $0x10] sm:$0xf]
    %v2509 = vld [vmem:[%s6 + $0x14] sm:$0xf]
    %v2510 = vld [vmem:[%s6 + $0x18] sm:$0xf]
    %v2511 = vld [vmem:[%s6 + $0x1c] sm:$0xf]
    %v2512 = vld [vmem:[%s6 + $0x20] sm:$0xf]
    %v2513 = vld [vmem:[%s6 + $0x24] sm:$0xf]
    %v2514 = vld [vmem:[%s6 + $0x28] sm:$0xf]
    %v2515 = vld [vmem:[%s6 + $0x2c] sm:$0xf]
    %v2516 = vld [vmem:[%s6 + $0x30] sm:$0xf]
    %v2517 = vld [vmem:[%s6 + $0x34] sm:$0xf]
    %v2518 = vld [vmem:[%s6 + $0x38] sm:$0xf]
    %v2519 = vld [vmem:[%s6 + $0x3c] sm:$0xf]
    %v2520 = vld [vmem:[%s6 + $0x40] sm:$0xf]
    %v2521 = vld [vmem:[%s6 + $0x44] sm:$0xf]
    %v2522 = vld [vmem:[%s6 + $0x48] sm:$0xf]
    %v2523 = vld [vmem:[%s6 + $0x4c] sm:$0xf]
    %v2524 = vld [vmem:[%s6 + $0x50] sm:$0xf]
    %v2525 = vld [vmem:[%s6 + $0x54] sm:$0xf]
    %v2526 = vld [vmem:[%s6 + $0x58] sm:$0xf]
    %v2527 = vld [vmem:[%s6 + $0x5c] sm:$0xf]
    %v2528 = vld [vmem:[%s6 + $0x60] sm:$0xf]
    %v2529 = vld [vmem:[%s6 + $0x64] sm:$0xf]
    %v2530 = vld [vmem:[%s6 + $0x68] sm:$0xf]
    %v2531 = vld [vmem:[%s6 + $0x6c] sm:$0xf]
    %v2532 = vld [vmem:[%s6 + $0x70] sm:$0xf]
    %v2533 = vld [vmem:[%s6 + $0x74] sm:$0xf]
    %v2534 = vld [vmem:[%s6 + $0x78] sm:$0xf]
    %v2535 = vld [vmem:[%s6 + $0x7c] sm:$0xf]
    %v2536 = vld [vmem:[%s7] sm:$0x1]
    %v2538 = vlaneseq
    %v2539 = vshrl.u32 %v2538, 7
    %v2540 = vsub.s32 0, %v2539
    %v2541 = vrot.slane %v2536, %v2540
    %v2575 = vunpack.c.l.b16 %v2504
    %v2576 = vunpack.c.l.b16 %v2505
    %v2577 = vunpack.c.l.b16 %v2506
    %v2578 = vunpack.c.l.b16 %v2507
    %v2579 = vunpack.c.l.b16 %v2508
    %v2580 = vunpack.c.l.b16 %v2509
    %v2581 = vunpack.c.l.b16 %v2510
    %v2582 = vunpack.c.l.b16 %v2511
    %v2583 = vunpack.c.l.b16 %v2512
    %v2584 = vunpack.c.l.b16 %v2513
    %v2585 = vunpack.c.l.b16 %v2514
    %v2586 = vunpack.c.l.b16 %v2515
    %v2587 = vunpack.c.l.b16 %v2516
    %v2588 = vunpack.c.l.b16 %v2517
    %v2589 = vunpack.c.l.b16 %v2518
    %v2590 = vunpack.c.l.b16 %v2519
    %v2591 = vunpack.c.l.b16 %v2520
    %v2592 = vunpack.c.l.b16 %v2521
    %v2593 = vunpack.c.l.b16 %v2522
    %v2594 = vunpack.c.l.b16 %v2523
    %v2595 = vunpack.c.l.b16 %v2524
    %v2596 = vunpack.c.l.b16 %v2525
    %v2597 = vunpack.c.l.b16 %v2526
    %v2598 = vunpack.c.l.b16 %v2527
    %v2599 = vunpack.c.l.b16 %v2528
    %v2600 = vunpack.c.l.b16 %v2529
    %v2601 = vunpack.c.l.b16 %v2530
    %v2602 = vunpack.c.l.b16 %v2531
    %v2603 = vunpack.c.l.b16 %v2532
    %v2604 = vunpack.c.l.b16 %v2533
    %v2605 = vunpack.c.l.b16 %v2534
    %v2606 = vunpack.c.l.b16 %v2535
    %v2607 = vpack.c.b16 %v2576, %v2575
    %v2608 = vpack.c.b16 %v2578, %v2577
    %v2609 = vpack.c.b16 %v2580, %v2579
    %v2610 = vpack.c.b16 %v2582, %v2581
    %v2611 = vpack.c.b16 %v2584, %v2583
    %v2612 = vpack.c.b16 %v2586, %v2585
    %v2613 = vpack.c.b16 %v2588, %v2587
    %v2614 = vpack.c.b16 %v2590, %v2589
    %v2615 = vpack.c.b16 %v2592, %v2591
    %v2616 = vpack.c.b16 %v2594, %v2593
    %v2617 = vpack.c.b16 %v2596, %v2595
    %v2618 = vpack.c.b16 %v2598, %v2597
    %v2619 = vpack.c.b16 %v2600, %v2599
    %v2620 = vpack.c.b16 %v2602, %v2601
    %v2621 = vpack.c.b16 %v2604, %v2603
    %v2622 = vpack.c.b16 %v2606, %v2605
    %2639 = vmatprep.subr.bf16.mxu0 0
    %2640 = vmatpush1.bf16.msra.mxu0 %v2607
    %2641 = vmatprep.subr.bf16.mxu0 0
    %2642 = vmatpush1.bf16.msra.mxu0 %v2608
    %2643 = vmatprep.subr.bf16.mxu0 0
    %2644 = vmatpush1.bf16.msra.mxu0 %v2609
    %2645 = vmatprep.subr.bf16.mxu0 0
    %2646 = vmatpush1.bf16.msra.mxu0 %v2610
    %2647 = vmatprep.subr.bf16.mxu0 0
    %2648 = vmatpush1.bf16.msra.mxu0 %v2611
    %2649 = vmatprep.subr.bf16.mxu0 0
    %2650 = vmatpush1.bf16.msra.mxu0 %v2612
    %2651 = vmatprep.subr.bf16.mxu0 0
    %2652 = vmatpush1.bf16.msra.mxu0 %v2613
    %2653 = vmatprep.subr.bf16.mxu0 0
    %2654 = vmatpush1.bf16.msra.mxu0 %v2614
    %2655 = vmatprep.subr.bf16.mxu0 0
    %2656 = vmatpush1.bf16.msra.mxu0 %v2615
    %2657 = vmatprep.subr.bf16.mxu0 0
    %2658 = vmatpush1.bf16.msra.mxu0 %v2616
    %2659 = vmatprep.subr.bf16.mxu0 0
    %2660 = vmatpush1.bf16.msra.mxu0 %v2617
    %2661 = vmatprep.subr.bf16.mxu0 0
    %2662 = vmatpush1.bf16.msra.mxu0 %v2618
    %2663 = vmatprep.subr.bf16.mxu0 0
    %2664 = vmatpush1.bf16.msra.mxu0 %v2619
    %2665 = vmatprep.subr.bf16.mxu0 0
    %2666 = vmatpush1.bf16.msra.mxu0 %v2620
    %2667 = vmatprep.subr.bf16.mxu0 0
    %2668 = vmatpush1.bf16.msra.mxu0 %v2621
    %2669 = vmatprep.subr.bf16.mxu0 0
    %2670 = vmatpush1.bf16.msra.mxu0 %v2622
    %2671 = vmatprep.mubr.bf16.mxu0 %v2503
    %2672 = vmatmul.mubr.bf16.gmra.mrb[0].mxu0 %v2502
    %v2673 = vpop.f32.mrb[0].mxu0
    %v2674 = vadd.f32 %v2541, %v2673
    %v2675 = vpop.f32.mrb[0].mxu0
    %v2676 = vpop.f32.mrb[0].mxu0
    %v2677 = vpop.f32.mrb[0].mxu0
    %2678 = vdwg.mxu0
    %v2679 = vmax.f32 %v2674, 0.0
    %v2680 = vpack.c.bf16 %v2679, %v2679
    %v2681 = vld [vmem:[%s8] sm:$0xf]
    %v2682 = vld [vmem:[%s8 + $0x4] sm:$0xf]
    %v2683 = vld [vmem:[%s8 + $0x8] sm:$0xf]
    %v2684 = vld [vmem:[%s8 + $0xc] sm:$0xf]
    %v2685 = vld [vmem:[%s8 + $0x10] sm:$0xf]
    %v2686 = vld [vmem:[%s8 + $0x14] sm:$0xf]
    %v2687 = vld [vmem:[%s8 + $0x18] sm:$0xf]
    %v2688 = vld [vmem:[%s8 + $0x1c] sm:$0xf]
    %v2689 = vld [vmem:[%s8 + $0x20] sm:$0xf]
    %v2690 = vld [vmem:[%s8 + $0x24] sm:$0xf]
    %v2691 = vld [vmem:[%s8 + $0x28] sm:$0xf]
    %v2692 = vld [vmem:[%s8 + $0x2c] sm:$0xf]
    %v2693 = vld [vmem:[%s8 + $0x30] sm:$0xf]
    %v2694 = vld [vmem:[%s8 + $0x34] sm:$0xf]
    %v2695 = vld [vmem:[%s8 + $0x38] sm:$0xf]
    %v2696 = vld [vmem:[%s8 + $0x3c] sm:$0xf]
    %v2697 = vld [vmem:[%s8 + $0x40] sm:$0xf]
    %v2698 = vld [vmem:[%s8 + $0x44] sm:$0xf]
    %v2699 = vld [vmem:[%s8 + $0x48] sm:$0xf]
    %v2700 = vld [vmem:[%s8 + $0x4c] sm:$0xf]
    %v2701 = vld [vmem:[%s8 + $0x50] sm:$0xf]
    %v2702 = vld [vmem:[%s8 + $0x54] sm:$0xf]
    %v2703 = vld [vmem:[%s8 + $0x58] sm:$0xf]
    %v2704 = vld [vmem:[%s8 + $0x5c] sm:$0xf]
    %v2705 = vld [vmem:[%s8 + $0x60] sm:$0xf]
    %v2706 = vld [vmem:[%s8 + $0x64] sm:$0xf]
    %v2707 = vld [vmem:[%s8 + $0x68] sm:$0xf]
    %v2708 = vld [vmem:[%s8 + $0x6c] sm:$0xf]
    %v2709 = vld [vmem:[%s8 + $0x70] sm:$0xf]
    %v2710 = vld [vmem:[%s8 + $0x74] sm:$0xf]
    %v2711 = vld [vmem:[%s8 + $0x78] sm:$0xf]
    %v2712 = vld [vmem:[%s8 + $0x7c] sm:$0xf]
    %v2713 = vld [vmem:[%s8 + $0x80] sm:$0xf]
    %v2714 = vld [vmem:[%s8 + $0x84] sm:$0xf]
    %v2715 = vld [vmem:[%s8 + $0x88] sm:$0xf]
    %v2716 = vld [vmem:[%s8 + $0x8c] sm:$0xf]
    %v2717 = vld [vmem:[%s8 + $0x90] sm:$0xf]
    %v2718 = vld [vmem:[%s8 + $0x94] sm:$0xf]
    %v2719 = vld [vmem:[%s8 + $0x98] sm:$0xf]
    %v2720 = vld [vmem:[%s8 + $0x9c] sm:$0xf]
    %v2721 = vld [vmem:[%s8 + $0xa0] sm:$0xf]
    %v2722 = vld [vmem:[%s8 + $0xa4] sm:$0xf]
    %v2723 = vld [vmem:[%s8 + $0xa8] sm:$0xf]
    %v2724 = vld [vmem:[%s8 + $0xac] sm:$0xf]
    %v2725 = vld [vmem:[%s8 + $0xb0] sm:$0xf]
    %v2726 = vld [vmem:[%s8 + $0xb4] sm:$0xf]
    %v2727 = vld [vmem:[%s8 + $0xb8] sm:$0xf]
    %v2728 = vld [vmem:[%s8 + $0xbc] sm:$0xf]
    %v2729 = vld [vmem:[%s8 + $0xc0] sm:$0xf]
    %v2730 = vld [vmem:[%s8 + $0xc4] sm:$0xf]
    %v2731 = vld [vmem:[%s8 + $0xc8] sm:$0xf]
    %v2732 = vld [vmem:[%s8 + $0xcc] sm:$0xf]
    %v2733 = vld [vmem:[%s8 + $0xd0] sm:$0xf]
    %v2734 = vld [vmem:[%s8 + $0xd4] sm:$0xf]
    %v2735 = vld [vmem:[%s8 + $0xd8] sm:$0xf]
    %v2736 = vld [vmem:[%s8 + $0xdc] sm:$0xf]
    %v2737 = vld [vmem:[%s8 + $0xe0] sm:$0xf]
    %v2738 = vld [vmem:[%s8 + $0xe4] sm:$0xf]
    %v2739 = vld [vmem:[%s8 + $0xe8] sm:$0xf]
    %v2740 = vld [vmem:[%s8 + $0xec] sm:$0xf]
    %v2741 = vld [vmem:[%s8 + $0xf0] sm:$0xf]
    %v2742 = vld [vmem:[%s8 + $0xf4] sm:$0xf]
    %v2743 = vld [vmem:[%s8 + $0xf8] sm:$0xf]
    %v2744 = vld [vmem:[%s8 + $0xfc] sm:$0xf]
    %v2745 = vld [vmem:[%s8 + $0x100] sm:$0xf]
    %v2746 = vld [vmem:[%s8 + $0x104] sm:$0xf]
    %v2747 = vld [vmem:[%s8 + $0x108] sm:$0xf]
    %v2748 = vld [vmem:[%s8 + $0x10c] sm:$0xf]
    %v2749 = vld [vmem:[%s8 + $0x110] sm:$0xf]
    %v2750 = vld [vmem:[%s8 + $0x114] sm:$0xf]
    %v2751 = vld [vmem:[%s8 + $0x118] sm:$0xf]
    %v2752 = vld [vmem:[%s8 + $0x11c] sm:$0xf]
    %v2753 = vld [vmem:[%s8 + $0x120] sm:$0xf]
    %v2754 = vld [vmem:[%s8 + $0x124] sm:$0xf]
    %v2755 = vld [vmem:[%s8 + $0x128] sm:$0xf]
    %v2756 = vld [vmem:[%s8 + $0x12c] sm:$0xf]
    %v2757 = vld [vmem:[%s8 + $0x130] sm:$0xf]
    %v2758 = vld [vmem:[%s8 + $0x134] sm:$0xf]
    %v2759 = vld [vmem:[%s8 + $0x138] sm:$0xf]
    %v2760 = vld [vmem:[%s8 + $0x13c] sm:$0xf]
    %v2761 = vld [vmem:[%s8 + $0x140] sm:$0xf]
    %v2762 = vld [vmem:[%s8 + $0x144] sm:$0xf]
    %v2763 = vld [vmem:[%s8 + $0x148] sm:$0xf]
    %v2764 = vld [vmem:[%s8 + $0x14c] sm:$0xf]
    %v2765 = vld [vmem:[%s8 + $0x150] sm:$0xf]
    %v2766 = vld [vmem:[%s8 + $0x154] sm:$0xf]
    %v2767 = vld [vmem:[%s8 + $0x158] sm:$0xf]
    %v2768 = vld [vmem:[%s8 + $0x15c] sm:$0xf]
    %v2769 = vld [vmem:[%s8 + $0x160] sm:$0xf]
    %v2770 = vld [vmem:[%s8 + $0x164] sm:$0xf]
    %v2771 = vld [vmem:[%s8 + $0x168] sm:$0xf]
    %v2772 = vld [vmem:[%s8 + $0x16c] sm:$0xf]
    %v2773 = vld [vmem:[%s8 + $0x170] sm:$0xf]
    %v2774 = vld [vmem:[%s8 + $0x174] sm:$0xf]
    %v2775 = vld [vmem:[%s8 + $0x178] sm:$0xf]
    %v2776 = vld [vmem:[%s8 + $0x17c] sm:$0xf]
    %v2777 = vld [vmem:[%s8 + $0x180] sm:$0xf]
    %v2778 = vld [vmem:[%s8 + $0x184] sm:$0xf]
    %v2779 = vld [vmem:[%s8 + $0x188] sm:$0xf]
    %v2780 = vld [vmem:[%s8 + $0x18c] sm:$0xf]
    %v2781 = vld [vmem:[%s8 + $0x190] sm:$0xf]
    %v2782 = vld [vmem:[%s8 + $0x194] sm:$0xf]
    %v2783 = vld [vmem:[%s8 + $0x198] sm:$0xf]
    %v2784 = vld [vmem:[%s8 + $0x19c] sm:$0xf]
    %v2785 = vld [vmem:[%s8 + $0x1a0] sm:$0xf]
    %v2786 = vld [vmem:[%s8 + $0x1a4] sm:$0xf]
    %v2787 = vld [vmem:[%s8 + $0x1a8] sm:$0xf]
    %v2788 = vld [vmem:[%s8 + $0x1ac] sm:$0xf]
    %v2789 = vld [vmem:[%s8 + $0x1b0] sm:$0xf]
    %v2790 = vld [vmem:[%s8 + $0x1b4] sm:$0xf]
    %v2791 = vld [vmem:[%s8 + $0x1b8] sm:$0xf]
    %v2792 = vld [vmem:[%s8 + $0x1bc] sm:$0xf]
    %v2793 = vld [vmem:[%s9] sm:$0x1]
    %v2795 = vlaneseq
    %v2796 = vshrl.u32 %v2795, 7
    %v2797 = vsub.s32 0, %v2796
    %v2798 = vrot.slane %v2793, %v2797
    %v2912 = vunpack.c.l.b16 %v2681
    %v2913 = vunpack.c.l.b16 %v2682
    %v2914 = vunpack.c.l.b16 %v2683
    %v2915 = vunpack.c.l.b16 %v2684
    %v2916 = vunpack.c.l.b16 %v2685
    %v2917 = vunpack.c.l.b16 %v2686
    %v2918 = vunpack.c.l.b16 %v2687
    %v2919 = vunpack.c.l.b16 %v2688
    %v2920 = vunpack.c.l.b16 %v2689
    %v2921 = vunpack.c.l.b16 %v2690
    %v2922 = vunpack.c.l.b16 %v2691
    %v2923 = vunpack.c.l.b16 %v2692
    %v2924 = vunpack.c.l.b16 %v2693
    %v2925 = vunpack.c.l.b16 %v2694
    %v2926 = vunpack.c.l.b16 %v2695
    %v2927 = vunpack.c.l.b16 %v2696
    %v2928 = vunpack.c.l.b16 %v2697
    %v2929 = vunpack.c.l.b16 %v2698
    %v2930 = vunpack.c.l.b16 %v2699
    %v2931 = vunpack.c.l.b16 %v2700
    %v2932 = vunpack.c.l.b16 %v2701
    %v2933 = vunpack.c.l.b16 %v2702
    %v2934 = vunpack.c.l.b16 %v2703
    %v2935 = vunpack.c.l.b16 %v2704
    %v2936 = vunpack.c.l.b16 %v2705
    %v2937 = vunpack.c.l.b16 %v2706
    %v2938 = vunpack.c.l.b16 %v2707
    %v2939 = vunpack.c.l.b16 %v2708
    %v2940 = vunpack.c.l.b16 %v2709
    %v2941 = vunpack.c.l.b16 %v2710
    %v2942 = vunpack.c.l.b16 %v2711
    %v2943 = vunpack.c.l.b16 %v2712
    %v2944 = vunpack.c.l.b16 %v2713
    %v2945 = vunpack.c.l.b16 %v2714
    %v2946 = vunpack.c.l.b16 %v2715
    %v2947 = vunpack.c.l.b16 %v2716
    %v2948 = vunpack.c.l.b16 %v2717
    %v2949 = vunpack.c.l.b16 %v2718
    %v2950 = vunpack.c.l.b16 %v2719
    %v2951 = vunpack.c.l.b16 %v2720
    %v2952 = vunpack.c.l.b16 %v2721
    %v2953 = vunpack.c.l.b16 %v2722
    %v2954 = vunpack.c.l.b16 %v2723
    %v2955 = vunpack.c.l.b16 %v2724
    %v2956 = vunpack.c.l.b16 %v2725
    %v2957 = vunpack.c.l.b16 %v2726
    %v2958 = vunpack.c.l.b16 %v2727
    %v2959 = vunpack.c.l.b16 %v2728
    %v2960 = vunpack.c.l.b16 %v2729
    %v2961 = vunpack.c.l.b16 %v2730
    %v2962 = vunpack.c.l.b16 %v2731
    %v2963 = vunpack.c.l.b16 %v2732
    %v2964 = vunpack.c.l.b16 %v2733
    %v2965 = vunpack.c.l.b16 %v2734
    %v2966 = vunpack.c.l.b16 %v2735
    %v2967 = vunpack.c.l.b16 %v2736
    %v2968 = vunpack.c.l.b16 %v2737
    %v2969 = vunpack.c.l.b16 %v2738
    %v2970 = vunpack.c.l.b16 %v2739
    %v2971 = vunpack.c.l.b16 %v2740
    %v2972 = vunpack.c.l.b16 %v2741
    %v2973 = vunpack.c.l.b16 %v2742
    %v2974 = vunpack.c.l.b16 %v2743
    %v2975 = vunpack.c.l.b16 %v2744
    %v2976 = vunpack.c.l.b16 %v2745
    %v2977 = vunpack.c.l.b16 %v2746
    %v2978 = vunpack.c.l.b16 %v2747
    %v2979 = vunpack.c.l.b16 %v2748
    %v2980 = vunpack.c.l.b16 %v2749
    %v2981 = vunpack.c.l.b16 %v2750
    %v2982 = vunpack.c.l.b16 %v2751
    %v2983 = vunpack.c.l.b16 %v2752
    %v2984 = vunpack.c.l.b16 %v2753
    %v2985 = vunpack.c.l.b16 %v2754
    %v2986 = vunpack.c.l.b16 %v2755
    %v2987 = vunpack.c.l.b16 %v2756
    %v2988 = vunpack.c.l.b16 %v2757
    %v2989 = vunpack.c.l.b16 %v2758
    %v2990 = vunpack.c.l.b16 %v2759
    %v2991 = vunpack.c.l.b16 %v2760
    %v2992 = vunpack.c.l.b16 %v2761
    %v2993 = vunpack.c.l.b16 %v2762
    %v2994 = vunpack.c.l.b16 %v2763
    %v2995 = vunpack.c.l.b16 %v2764
    %v2996 = vunpack.c.l.b16 %v2765
    %v2997 = vunpack.c.l.b16 %v2766
    %v2998 = vunpack.c.l.b16 %v2767
    %v2999 = vunpack.c.l.b16 %v2768
    %v3000 = vunpack.c.l.b16 %v2769
    %v3001 = vunpack.c.l.b16 %v2770
    %v3002 = vunpack.c.l.b16 %v2771
    %v3003 = vunpack.c.l.b16 %v2772
    %v3004 = vunpack.c.l.b16 %v2773
    %v3005 = vunpack.c.l.b16 %v2774
    %v3006 = vunpack.c.l.b16 %v2775
    %v3007 = vunpack.c.l.b16 %v2776
    %v3008 = vunpack.c.l.b16 %v2777
    %v3009 = vunpack.c.l.b16 %v2778
    %v3010 = vunpack.c.l.b16 %v2779
    %v3011 = vunpack.c.l.b16 %v2780
    %v3012 = vunpack.c.l.b16 %v2781
    %v3013 = vunpack.c.l.b16 %v2782
    %v3014 = vunpack.c.l.b16 %v2783
    %v3015 = vunpack.c.l.b16 %v2784
    %v3016 = vunpack.c.l.b16 %v2785
    %v3017 = vunpack.c.l.b16 %v2786
    %v3018 = vunpack.c.l.b16 %v2787
    %v3019 = vunpack.c.l.b16 %v2788
    %v3020 = vunpack.c.l.b16 %v2789
    %v3021 = vunpack.c.l.b16 %v2790
    %v3022 = vunpack.c.l.b16 %v2791
    %v3023 = vunpack.c.l.b16 %v2792
    %v3024 = vpack.c.b16 %v2913, %v2912
    %v3025 = vpack.c.b16 %v2915, %v2914
    %v3026 = vpack.c.b16 %v2917, %v2916
    %v3027 = vpack.c.b16 %v2919, %v2918
    %v3028 = vpack.c.b16 %v2921, %v2920
    %v3029 = vpack.c.b16 %v2923, %v2922
    %v3030 = vpack.c.b16 %v2925, %v2924
    %v3031 = vpack.c.b16 %v2927, %v2926
    %v3032 = vpack.c.b16 %v2929, %v2928
    %v3033 = vpack.c.b16 %v2931, %v2930
    %v3034 = vpack.c.b16 %v2933, %v2932
    %v3035 = vpack.c.b16 %v2935, %v2934
    %v3036 = vpack.c.b16 %v2937, %v2936
    %v3037 = vpack.c.b16 %v2939, %v2938
    %v3038 = vpack.c.b16 %v2941, %v2940
    %v3039 = vpack.c.b16 %v2943, %v2942
    %v3040 = vpack.c.b16 %v2945, %v2944
    %v3041 = vpack.c.b16 %v2947, %v2946
    %v3042 = vpack.c.b16 %v2949, %v2948
    %v3043 = vpack.c.b16 %v2951, %v2950
    %v3044 = vpack.c.b16 %v2953, %v2952
    %v3045 = vpack.c.b16 %v2955, %v2954
    %v3046 = vpack.c.b16 %v2957, %v2956
    %v3047 = vpack.c.b16 %v2959, %v2958
    %v3048 = vpack.c.b16 %v2961, %v2960
    %v3049 = vpack.c.b16 %v2963, %v2962
    %v3050 = vpack.c.b16 %v2965, %v2964
    %v3051 = vpack.c.b16 %v2967, %v2966
    %v3052 = vpack.c.b16 %v2969, %v2968
    %v3053 = vpack.c.b16 %v2971, %v2970
    %v3054 = vpack.c.b16 %v2973, %v2972
    %v3055 = vpack.c.b16 %v2975, %v2974
    %v3056 = vpack.c.b16 %v2977, %v2976
    %v3057 = vpack.c.b16 %v2979, %v2978
    %v3058 = vpack.c.b16 %v2981, %v2980
    %v3059 = vpack.c.b16 %v2983, %v2982
    %v3060 = vpack.c.b16 %v2985, %v2984
    %v3061 = vpack.c.b16 %v2987, %v2986
    %v3062 = vpack.c.b16 %v2989, %v2988
    %v3063 = vpack.c.b16 %v2991, %v2990
    %v3064 = vpack.c.b16 %v2993, %v2992
    %v3065 = vpack.c.b16 %v2995, %v2994
    %v3066 = vpack.c.b16 %v2997, %v2996
    %v3067 = vpack.c.b16 %v2999, %v2998
    %v3068 = vpack.c.b16 %v3001, %v3000
    %v3069 = vpack.c.b16 %v3003, %v3002
    %v3070 = vpack.c.b16 %v3005, %v3004
    %v3071 = vpack.c.b16 %v3007, %v3006
    %v3072 = vpack.c.b16 %v3009, %v3008
    %v3073 = vpack.c.b16 %v3011, %v3010
    %v3074 = vpack.c.b16 %v3013, %v3012
    %v3075 = vpack.c.b16 %v3015, %v3014
    %v3076 = vpack.c.b16 %v3017, %v3016
    %v3077 = vpack.c.b16 %v3019, %v3018
    %v3078 = vpack.c.b16 %v3021, %v3020
    %v3079 = vpack.c.b16 %v3023, %v3022
    %3136 = vmatprep.subr.bf16.mxu0 0
    %3137 = vmatpush1.bf16.msra.mxu0 %v3024
    %3138 = vmatprep.subr.bf16.mxu0 0
    %3139 = vmatpush1.bf16.msra.mxu0 %v3025
    %3140 = vmatprep.subr.bf16.mxu0 0
    %3141 = vmatpush1.bf16.msra.mxu0 %v3026
    %3142 = vmatprep.subr.bf16.mxu0 0
    %3143 = vmatpush1.bf16.msra.mxu0 %v3027
    %3144 = vmatprep.subr.bf16.mxu0 0
    %3145 = vmatpush1.bf16.msra.mxu0 %v3028
    %3146 = vmatprep.subr.bf16.mxu0 0
    %3147 = vmatpush1.bf16.msra.mxu0 %v3029
    %3148 = vmatprep.subr.bf16.mxu0 0
    %3149 = vmatpush1.bf16.msra.mxu0 %v3030
    %3150 = vmatprep.subr.bf16.mxu0 0
    %3151 = vmatpush1.bf16.msra.mxu0 %v3031
    %3152 = vmatprep.subr.bf16.mxu0 0
    %3153 = vmatpush1.bf16.msra.mxu0 %v3032
    %3154 = vmatprep.subr.bf16.mxu0 0
    %3155 = vmatpush1.bf16.msra.mxu0 %v3033
    %3156 = vmatprep.subr.bf16.mxu0 0
    %3157 = vmatpush1.bf16.msra.mxu0 %v3034
    %3158 = vmatprep.subr.bf16.mxu0 0
    %3159 = vmatpush1.bf16.msra.mxu0 %v3035
    %3160 = vmatprep.subr.bf16.mxu0 0
    %3161 = vmatpush1.bf16.msra.mxu0 %v3036
    %3162 = vmatprep.subr.bf16.mxu0 0
    %3163 = vmatpush1.bf16.msra.mxu0 %v3037
    %3164 = vmatprep.subr.bf16.mxu0 0
    %3165 = vmatpush1.bf16.msra.mxu0 %v3038
    %3166 = vmatprep.subr.bf16.mxu0 0
    %3167 = vmatpush1.bf16.msra.mxu0 %v3039
    %3168 = vmatprep.mubr.bf16.mxu0 %v2019
    %3169 = vmatmul.mubr.bf16.gmra.mrb[0].mxu0 %v2018
    %v3170 = vpop.f32.mrb[0].mxu0
    %v3171 = vadd.f32 %v2798, %v3170
    %v3172 = vpop.f32.mrb[0].mxu0
    %v3173 = vpop.f32.mrb[0].mxu0
    %v3174 = vpop.f32.mrb[0].mxu0
    %3175 = vdwg.mxu0
    %3176 = vmatprep.subr.bf16.mxu0 0
    %3177 = vmatpush1.bf16.msra.mxu0 %v3040
    %3178 = vmatprep.subr.bf16.mxu0 0
    %3179 = vmatpush1.bf16.msra.mxu0 %v3041
    %3180 = vmatprep.subr.bf16.mxu0 0
    %3181 = vmatpush1.bf16.msra.mxu0 %v3042
    %3182 = vmatprep.subr.bf16.mxu0 0
    %3183 = vmatpush1.bf16.msra.mxu0 %v3043
    %3184 = vmatprep.subr.bf16.mxu0 0
    %3185 = vmatpush1.bf16.msra.mxu0 %v3044
    %3186 = vmatprep.subr.bf16.mxu0 0
    %3187 = vmatpush1.bf16.msra.mxu0 %v3045
    %3188 = vmatprep.subr.bf16.mxu0 0
    %3189 = vmatpush1.bf16.msra.mxu0 %v3046
    %3190 = vmatprep.subr.bf16.mxu0 0
    %3191 = vmatpush1.bf16.msra.mxu0 %v3047
    %3192 = vmatprep.subr.bf16.mxu0 0
    %3193 = vmatpush1.bf16.msra.mxu0 %v3048
    %3194 = vmatprep.subr.bf16.mxu0 0
    %3195 = vmatpush1.bf16.msra.mxu0 %v3049
    %3196 = vmatprep.subr.bf16.mxu0 0
    %3197 = vmatpush1.bf16.msra.mxu0 %v3050
    %3198 = vmatprep.subr.bf16.mxu0 0
    %3199 = vmatpush1.bf16.msra.mxu0 %v3051
    %3200 = vmatprep.subr.bf16.mxu0 0
    %3201 = vmatpush1.bf16.msra.mxu0 %v3052
    %3202 = vmatprep.subr.bf16.mxu0 0
    %3203 = vmatpush1.bf16.msra.mxu0 %v3053
    %3204 = vmatprep.subr.bf16.mxu0 0
    %3205 = vmatpush1.bf16.msra.mxu0 %v3054
    %3206 = vmatprep.subr.bf16.mxu0 0
    %3207 = vmatpush1.bf16.msra.mxu0 %v3055
    %3208 = vmatprep.mubr.bf16.mxu0 %v2021
    %3209 = vmatmul.mubr.bf16.gmra.mrb[0].mxu0 %v2020
    %v3210 = vpop.f32.mrb[0].mxu0
    %v3211 = vadd.f32 %v3171, %v3210
    %v3212 = vpop.f32.mrb[0].mxu0
    %v3213 = vpop.f32.mrb[0].mxu0
    %v3214 = vpop.f32.mrb[0].mxu0
    %3215 = vdwg.mxu0
    %3216 = vmatprep.subr.bf16.mxu0 0
    %3217 = vmatpush1.bf16.msra.mxu0 %v3056
    %3218 = vmatprep.subr.bf16.mxu0 0
    %3219 = vmatpush1.bf16.msra.mxu0 %v3057
    %3220 = vmatprep.subr.bf16.mxu0 0
    %3221 = vmatpush1.bf16.msra.mxu0 %v3058
    %3222 = vmatprep.subr.bf16.mxu0 0
    %3223 = vmatpush1.bf16.msra.mxu0 %v3059
    %3224 = vmatprep.subr.bf16.mxu0 0
    %3225 = vmatpush1.bf16.msra.mxu0 %v3060
    %3226 = vmatprep.subr.bf16.mxu0 0
    %3227 = vmatpush1.bf16.msra.mxu0 %v3061
    %3228 = vmatprep.subr.bf16.mxu0 0
    %3229 = vmatpush1.bf16.msra.mxu0 %v3062
    %3230 = vmatprep.subr.bf16.mxu0 0
    %3231 = vmatpush1.bf16.msra.mxu0 %v3063
    %3232 = vmatprep.subr.bf16.mxu0 0
    %3233 = vmatpush1.bf16.msra.mxu0 %v3064
    %3234 = vmatprep.subr.bf16.mxu0 0
    %3235 = vmatpush1.bf16.msra.mxu0 %v3065
    %3236 = vmatprep.subr.bf16.mxu0 0
    %3237 = vmatpush1.bf16.msra.mxu0 %v3066
    %3238 = vmatprep.subr.bf16.mxu0 0
    %3239 = vmatpush1.bf16.msra.mxu0 %v3067
    %3240 = vmatprep.subr.bf16.mxu0 0
    %3241 = vmatpush1.bf16.msra.mxu0 %v3068
    %3242 = vmatprep.subr.bf16.mxu0 0
    %3243 = vmatpush1.bf16.msra.mxu0 %v3069
    %3244 = vmatprep.subr.bf16.mxu0 0
    %3245 = vmatpush1.bf16.msra.mxu0 %v3070
    %3246 = vmatprep.subr.bf16.mxu0 0
    %3247 = vmatpush1.bf16.msra.mxu0 %v3071
    %3248 = vmatprep.mubr.bf16.mxu0 %v2503
    %3249 = vmatmul.mubr.bf16.gmra.mrb[0].mxu0 %v2502
    %v3250 = vpop.f32.mrb[0].mxu0
    %v3251 = vadd.f32 %v3211, %v3250
    %v3252 = vpop.f32.mrb[0].mxu0
    %v3253 = vpop.f32.mrb[0].mxu0
    %v3254 = vpop.f32.mrb[0].mxu0
    %3255 = vdwg.mxu0
    %3256 = vmatprep.subr.bf16.mxu0 0
    %3257 = vmatpush1.bf16.msra.mxu0 %v3072
    %3258 = vmatprep.subr.bf16.mxu0 0
    %3259 = vmatpush1.bf16.msra.mxu0 %v3073
    %3260 = vmatprep.subr.bf16.mxu0 0
    %3261 = vmatpush1.bf16.msra.mxu0 %v3074
    %3262 = vmatprep.subr.bf16.mxu0 0
    %3263 = vmatpush1.bf16.msra.mxu0 %v3075
    %3264 = vmatprep.subr.bf16.mxu0 0
    %3265 = vmatpush1.bf16.msra.mxu0 %v3076
    %3266 = vmatprep.subr.bf16.mxu0 0
    %3267 = vmatpush1.bf16.msra.mxu0 %v3077
    %3268 = vmatprep.subr.bf16.mxu0 0
    %3269 = vmatpush1.bf16.msra.mxu0 %v3078
    %3270 = vmatprep.subr.bf16.mxu0 0
    %3271 = vmatpush1.bf16.msra.mxu0 %v3079
    %3272 = vmatprep.subr.bf16.mxu0 0
    %3273 = vmatpush1.bf16.msra.mxu0 0
    %3274 = vmatprep.subr.bf16.mxu0 0
    %3275 = vmatpush1.bf16.msra.mxu0 0
    %3276 = vmatprep.subr.bf16.mxu0 0
    %3277 = vmatpush1.bf16.msra.mxu0 0
    %3278 = vmatprep.subr.bf16.mxu0 0
    %3279 = vmatpush1.bf16.msra.mxu0 0
    %3280 = vmatprep.subr.bf16.mxu0 0
    %3281 = vmatpush1.bf16.msra.mxu0 0
    %3282 = vmatprep.subr.bf16.mxu0 0
    %3283 = vmatpush1.bf16.msra.mxu0 0
    %3284 = vmatprep.subr.bf16.mxu0 0
    %3285 = vmatpush1.bf16.msra.mxu0 0
    %3286 = vmatprep.subr.bf16.mxu0 0
    %3287 = vmatpush1.bf16.msra.mxu0 0
    %3288 = vmatprep.mubr.bf16.mxu0 0
    %3289 = vmatmul.mubr.bf16.gmra.mrb[0].mxu0 %v2680
    %v3290 = vpop.f32.mrb[0].mxu0
    %v3291 = vadd.f32 %v3251, %v3290
    %v3292 = vpop.f32.mrb[0].mxu0
    %v3293 = vpop.f32.mrb[0].mxu0
    %v3294 = vpop.f32.mrb[0].mxu0
    %3295 = vdwg.mxu0
    %v3296 = vmax.f32 %v3291, 0.0
    %3297 = vst [vmem:[#allocation9] sm:$0x3] %v3296
    %v3298 = vld [vmem:[#allocation6] sm:$0xf]
    %v3299 = vld [vmem:[#allocation6 + $0x4] sm:$0xf]
    %v3300 = vld [vmem:[#allocation6 + $0x8] sm:$0xf]
    %v3301 = vld [vmem:[#allocation6 + $0xc] sm:$0xf]
    %v3302 = vld [vmem:[#allocation6 + $0x10] sm:$0xf]
    %v3303 = vld [vmem:[#allocation6 + $0x14] sm:$0xf]
    %v3304 = vld [vmem:[#allocation6 + $0x18] sm:$0xf]
    %v3305 = vld [vmem:[#allocation6 + $0x1c] sm:$0xf]
    %v3306 = vld [vmem:[#allocation6 + $0x20] sm:$0xf]
    %v3307 = vld [vmem:[#allocation6 + $0x24] sm:$0xf]
    %v3308 = vld [vmem:[#allocation6 + $0x28] sm:$0xf]
    %v3309 = vld [vmem:[#allocation6 + $0x2c] sm:$0xf]
    %v3310 = vld [vmem:[#allocation6 + $0x30] sm:$0xf]
    %v3311 = vld [vmem:[#allocation6 + $0x34] sm:$0xf]
    %v3312 = vld [vmem:[#allocation6 + $0x38] sm:$0xf]
    %v3313 = vld [vmem:[#allocation6 + $0x3c] sm:$0xf]
    %v3314 = vld [vmem:[#allocation6 + $0x40] sm:$0xf]
    %v3315 = vld [vmem:[#allocation6 + $0x44] sm:$0xf]
    %v3316 = vld [vmem:[#allocation6 + $0x48] sm:$0xf]
    %v3317 = vld [vmem:[#allocation6 + $0x4c] sm:$0xf]
    %v3318 = vld [vmem:[#allocation6 + $0x50] sm:$0xf]
    %v3319 = vld [vmem:[#allocation6 + $0x54] sm:$0xf]
    %v3320 = vld [vmem:[#allocation6 + $0x58] sm:$0xf]
    %v3321 = vld [vmem:[#allocation6 + $0x5c] sm:$0xf]
    %v3322 = vld [vmem:[#allocation6 + $0x60] sm:$0xf]
    %v3323 = vld [vmem:[#allocation6 + $0x64] sm:$0xf]
    %v3324 = vld [vmem:[#allocation6 + $0x68] sm:$0xf]
    %v3325 = vld [vmem:[#allocation6 + $0x6c] sm:$0xf]
    %v3326 = vld [vmem:[#allocation6 + $0x70] sm:$0xf]
    %v3327 = vld [vmem:[#allocation6 + $0x74] sm:$0xf]
    %v3328 = vld [vmem:[#allocation6 + $0x78] sm:$0xf]
    %v3329 = vld [vmem:[#allocation6 + $0x7c] sm:$0xf]
    %v3330 = vld [vmem:[#allocation6 + $0x80] sm:$0xf]
    %v3331 = vld [vmem:[#allocation6 + $0x84] sm:$0xf]
    %v3332 = vld [vmem:[#allocation6 + $0x88] sm:$0xf]
    %v3333 = vld [vmem:[#allocation6 + $0x8c] sm:$0xf]
    %v3334 = vld [vmem:[#allocation6 + $0x90] sm:$0xf]
    %v3335 = vld [vmem:[#allocation6 + $0x94] sm:$0xf]
    %v3336 = vld [vmem:[#allocation6 + $0x98] sm:$0xf]
    %v3337 = vld [vmem:[#allocation6 + $0x9c] sm:$0xf]
    %v3338 = vld [vmem:[#allocation6 + $0xa0] sm:$0xf]
    %v3339 = vld [vmem:[#allocation6 + $0xa4] sm:$0xf]
    %v3340 = vld [vmem:[#allocation6 + $0xa8] sm:$0xf]
    %v3341 = vld [vmem:[#allocation6 + $0xac] sm:$0xf]
    %v3342 = vld [vmem:[#allocation6 + $0xb0] sm:$0xf]
    %v3343 = vld [vmem:[#allocation6 + $0xb4] sm:$0xf]
    %v3344 = vld [vmem:[#allocation6 + $0xb8] sm:$0xf]
    %v3345 = vld [vmem:[#allocation6 + $0xbc] sm:$0xf]
    %v3346 = vld [vmem:[#allocation6 + $0xc0] sm:$0xf]
    %v3347 = vld [vmem:[#allocation6 + $0xc4] sm:$0xf]
    %v3348 = vld [vmem:[#allocation6 + $0xc8] sm:$0xf]
    %v3349 = vld [vmem:[#allocation6 + $0xcc] sm:$0xf]
    %v3350 = vld [vmem:[#allocation6 + $0xd0] sm:$0xf]
    %v3351 = vld [vmem:[#allocation6 + $0xd4] sm:$0xf]
    %v3352 = vld [vmem:[#allocation6 + $0xd8] sm:$0xf]
    %v3353 = vld [vmem:[#allocation6 + $0xdc] sm:$0xf]
    %v3354 = vld [vmem:[#allocation6 + $0xe0] sm:$0xf]
    %v3355 = vld [vmem:[#allocation6 + $0xe4] sm:$0xf]
    %v3356 = vld [vmem:[#allocation6 + $0xe8] sm:$0xf]
    %v3357 = vld [vmem:[#allocation6 + $0xec] sm:$0xf]
    %v3358 = vld [vmem:[#allocation6 + $0xf0] sm:$0xf]
    %v3359 = vld [vmem:[#allocation6 + $0xf4] sm:$0xf]
    %v3360 = vld [vmem:[#allocation6 + $0xf8] sm:$0xf]
    %v3361 = vld [vmem:[#allocation6 + $0xfc] sm:$0xf]
    %v3362 = vld [vmem:[#allocation6 + $0x100] sm:$0xf]
    %v3363 = vld [vmem:[#allocation6 + $0x104] sm:$0xf]
    %v3364 = vld [vmem:[#allocation6 + $0x108] sm:$0xf]
    %v3365 = vld [vmem:[#allocation6 + $0x10c] sm:$0xf]
    %v3366 = vld [vmem:[#allocation6 + $0x110] sm:$0xf]
    %v3367 = vld [vmem:[#allocation6 + $0x114] sm:$0xf]
    %v3368 = vld [vmem:[#allocation6 + $0x118] sm:$0xf]
    %v3369 = vld [vmem:[#allocation6 + $0x11c] sm:$0xf]
    %v3370 = vld [vmem:[#allocation6 + $0x120] sm:$0xf]
    %v3371 = vld [vmem:[#allocation6 + $0x124] sm:$0xf]
    %v3372 = vld [vmem:[#allocation6 + $0x128] sm:$0xf]
    %v3373 = vld [vmem:[#allocation6 + $0x12c] sm:$0xf]
    %v3374 = vld [vmem:[#allocation6 + $0x130] sm:$0xf]
    %v3375 = vld [vmem:[#allocation6 + $0x134] sm:$0xf]
    %v3376 = vld [vmem:[#allocation6 + $0x138] sm:$0xf]
    %v3377 = vld [vmem:[#allocation6 + $0x13c] sm:$0xf]
    %v3378 = vld [vmem:[#allocation6 + $0x140] sm:$0xf]
    %v3379 = vld [vmem:[#allocation6 + $0x144] sm:$0xf]
    %v3380 = vld [vmem:[#allocation6 + $0x148] sm:$0xf]
    %v3381 = vld [vmem:[#allocation6 + $0x14c] sm:$0xf]
    %v3382 = vld [vmem:[#allocation6 + $0x150] sm:$0xf]
    %v3383 = vld [vmem:[#allocation6 + $0x154] sm:$0xf]
    %v3384 = vld [vmem:[#allocation6 + $0x158] sm:$0xf]
    %v3385 = vld [vmem:[#allocation6 + $0x15c] sm:$0xf]
    %v3386 = vld [vmem:[#allocation6 + $0x160] sm:$0xf]
    %v3387 = vld [vmem:[#allocation6 + $0x164] sm:$0xf]
    %v3388 = vld [vmem:[#allocation6 + $0x168] sm:$0xf]
    %v3389 = vld [vmem:[#allocation6 + $0x16c] sm:$0xf]
    %v3390 = vld [vmem:[#allocation6 + $0x170] sm:$0xf]
    %v3391 = vld [vmem:[#allocation6 + $0x174] sm:$0xf]
    %v3392 = vld [vmem:[#allocation6 + $0x178] sm:$0xf]
    %v3393 = vld [vmem:[#allocation6 + $0x17c] sm:$0xf]
    %v3394 = vld [vmem:[#allocation6 + $0x180] sm:$0xf]
    %v3395 = vld [vmem:[#allocation6 + $0x184] sm:$0xf]
    %v3396 = vld [vmem:[#allocation6 + $0x188] sm:$0xf]
    %v3397 = vld [vmem:[#allocation6 + $0x18c] sm:$0xf]
    %v3398 = vld [vmem:[#allocation6 + $0x190] sm:$0xf]
    %v3399 = vld [vmem:[#allocation6 + $0x194] sm:$0xf]
    %v3400 = vld [vmem:[#allocation6 + $0x198] sm:$0xf]
    %v3401 = vld [vmem:[#allocation6 + $0x19c] sm:$0xf]
    %v3402 = vld [vmem:[#allocation6 + $0x1a0] sm:$0xf]
    %v3403 = vld [vmem:[#allocation6 + $0x1a4] sm:$0xf]
    %v3404 = vld [vmem:[#allocation6 + $0x1a8] sm:$0xf]
    %v3405 = vld [vmem:[#allocation6 + $0x1ac] sm:$0xf]
    %v3406 = vld [vmem:[#allocation6 + $0x1b0] sm:$0xf]
    %v3407 = vld [vmem:[#allocation6 + $0x1b4] sm:$0xf]
    %v3408 = vld [vmem:[#allocation6 + $0x1b8] sm:$0xf]
    %v3409 = vld [vmem:[#allocation6 + $0x1bc] sm:$0xf]
    %v3410 = vld [vmem:[%s11] sm:$0x1]
    %v3412 = vlaneseq
    %v3413 = vshrl.u32 %v3412, 7
    %v3414 = vsub.s32 0, %v3413
    %v3415 = vrot.slane %v3410, %v3414
    %v3529 = vunpack.c.l.b16 %v3298
    %v3530 = vunpack.c.l.b16 %v3299
    %v3531 = vunpack.c.l.b16 %v3300
    %v3532 = vunpack.c.l.b16 %v3301
    %v3533 = vunpack.c.l.b16 %v3302
    %v3534 = vunpack.c.l.b16 %v3303
    %v3535 = vunpack.c.l.b16 %v3304
    %v3536 = vunpack.c.l.b16 %v3305
    %v3537 = vunpack.c.l.b16 %v3306
    %v3538 = vunpack.c.l.b16 %v3307
    %v3539 = vunpack.c.l.b16 %v3308
    %v3540 = vunpack.c.l.b16 %v3309
    %v3541 = vunpack.c.l.b16 %v3310
    %v3542 = vunpack.c.l.b16 %v3311
    %v3543 = vunpack.c.l.b16 %v3312
    %v3544 = vunpack.c.l.b16 %v3313
    %v3545 = vunpack.c.l.b16 %v3314
    %v3546 = vunpack.c.l.b16 %v3315
    %v3547 = vunpack.c.l.b16 %v3316
    %v3548 = vunpack.c.l.b16 %v3317
    %v3549 = vunpack.c.l.b16 %v3318
    %v3550 = vunpack.c.l.b16 %v3319
    %v3551 = vunpack.c.l.b16 %v3320
    %v3552 = vunpack.c.l.b16 %v3321
    %v3553 = vunpack.c.l.b16 %v3322
    %v3554 = vunpack.c.l.b16 %v3323
    %v3555 = vunpack.c.l.b16 %v3324
    %v3556 = vunpack.c.l.b16 %v3325
    %v3557 = vunpack.c.l.b16 %v3326
    %v3558 = vunpack.c.l.b16 %v3327
    %v3559 = vunpack.c.l.b16 %v3328
    %v3560 = vunpack.c.l.b16 %v3329
    %v3561 = vunpack.c.l.b16 %v3330
    %v3562 = vunpack.c.l.b16 %v3331
    %v3563 = vunpack.c.l.b16 %v3332
    %v3564 = vunpack.c.l.b16 %v3333
    %v3565 = vunpack.c.l.b16 %v3334
    %v3566 = vunpack.c.l.b16 %v3335
    %v3567 = vunpack.c.l.b16 %v3336
    %v3568 = vunpack.c.l.b16 %v3337
    %v3569 = vunpack.c.l.b16 %v3338
    %v3570 = vunpack.c.l.b16 %v3339
    %v3571 = vunpack.c.l.b16 %v3340
    %v3572 = vunpack.c.l.b16 %v3341
    %v3573 = vunpack.c.l.b16 %v3342
    %v3574 = vunpack.c.l.b16 %v3343
    %v3575 = vunpack.c.l.b16 %v3344
    %v3576 = vunpack.c.l.b16 %v3345
    %v3577 = vunpack.c.l.b16 %v3346
    %v3578 = vunpack.c.l.b16 %v3347
    %v3579 = vunpack.c.l.b16 %v3348
    %v3580 = vunpack.c.l.b16 %v3349
    %v3581 = vunpack.c.l.b16 %v3350
    %v3582 = vunpack.c.l.b16 %v3351
    %v3583 = vunpack.c.l.b16 %v3352
    %v3584 = vunpack.c.l.b16 %v3353
    %v3585 = vunpack.c.l.b16 %v3354
    %v3586 = vunpack.c.l.b16 %v3355
    %v3587 = vunpack.c.l.b16 %v3356
    %v3588 = vunpack.c.l.b16 %v3357
    %v3589 = vunpack.c.l.b16 %v3358
    %v3590 = vunpack.c.l.b16 %v3359
    %v3591 = vunpack.c.l.b16 %v3360
    %v3592 = vunpack.c.l.b16 %v3361
    %v3593 = vunpack.c.l.b16 %v3362
    %v3594 = vunpack.c.l.b16 %v3363
    %v3595 = vunpack.c.l.b16 %v3364
    %v3596 = vunpack.c.l.b16 %v3365
    %v3597 = vunpack.c.l.b16 %v3366
    %v3598 = vunpack.c.l.b16 %v3367
    %v3599 = vunpack.c.l.b16 %v3368
    %v3600 = vunpack.c.l.b16 %v3369
    %v3601 = vunpack.c.l.b16 %v3370
    %v3602 = vunpack.c.l.b16 %v3371
    %v3603 = vunpack.c.l.b16 %v3372
    %v3604 = vunpack.c.l.b16 %v3373
    %v3605 = vunpack.c.l.b16 %v3374
    %v3606 = vunpack.c.l.b16 %v3375
    %v3607 = vunpack.c.l.b16 %v3376
    %v3608 = vunpack.c.l.b16 %v3377
    %v3609 = vunpack.c.l.b16 %v3378
    %v3610 = vunpack.c.l.b16 %v3379
    %v3611 = vunpack.c.l.b16 %v3380
    %v3612 = vunpack.c.l.b16 %v3381
    %v3613 = vunpack.c.l.b16 %v3382
    %v3614 = vunpack.c.l.b16 %v3383
    %v3615 = vunpack.c.l.b16 %v3384
    %v3616 = vunpack.c.l.b16 %v3385
    %v3617 = vunpack.c.l.b16 %v3386
    %v3618 = vunpack.c.l.b16 %v3387
    %v3619 = vunpack.c.l.b16 %v3388
    %v3620 = vunpack.c.l.b16 %v3389
    %v3621 = vunpack.c.l.b16 %v3390
    %v3622 = vunpack.c.l.b16 %v3391
    %v3623 = vunpack.c.l.b16 %v3392
    %v3624 = vunpack.c.l.b16 %v3393
    %v3625 = vunpack.c.l.b16 %v3394
    %v3626 = vunpack.c.l.b16 %v3395
    %v3627 = vunpack.c.l.b16 %v3396
    %v3628 = vunpack.c.l.b16 %v3397
    %v3629 = vunpack.c.l.b16 %v3398
    %v3630 = vunpack.c.l.b16 %v3399
    %v3631 = vunpack.c.l.b16 %v3400
    %v3632 = vunpack.c.l.b16 %v3401
    %v3633 = vunpack.c.l.b16 %v3402
    %v3634 = vunpack.c.l.b16 %v3403
    %v3635 = vunpack.c.l.b16 %v3404
    %v3636 = vunpack.c.l.b16 %v3405
    %v3637 = vunpack.c.l.b16 %v3406
    %v3638 = vunpack.c.l.b16 %v3407
    %v3639 = vunpack.c.l.b16 %v3408
    %v3640 = vunpack.c.l.b16 %v3409
    %v3641 = vpack.c.b16 %v3530, %v3529
    %v3642 = vpack.c.b16 %v3532, %v3531
    %v3643 = vpack.c.b16 %v3534, %v3533
    %v3644 = vpack.c.b16 %v3536, %v3535
    %v3645 = vpack.c.b16 %v3538, %v3537
    %v3646 = vpack.c.b16 %v3540, %v3539
    %v3647 = vpack.c.b16 %v3542, %v3541
    %v3648 = vpack.c.b16 %v3544, %v3543
    %v3649 = vpack.c.b16 %v3546, %v3545
    %v3650 = vpack.c.b16 %v3548, %v3547
    %v3651 = vpack.c.b16 %v3550, %v3549
    %v3652 = vpack.c.b16 %v3552, %v3551
    %v3653 = vpack.c.b16 %v3554, %v3553
    %v3654 = vpack.c.b16 %v3556, %v3555
    %v3655 = vpack.c.b16 %v3558, %v3557
    %v3656 = vpack.c.b16 %v3560, %v3559
    %v3657 = vpack.c.b16 %v3562, %v3561
    %v3658 = vpack.c.b16 %v3564, %v3563
    %v3659 = vpack.c.b16 %v3566, %v3565
    %v3660 = vpack.c.b16 %v3568, %v3567
    %v3661 = vpack.c.b16 %v3570, %v3569
    %v3662 = vpack.c.b16 %v3572, %v3571
    %v3663 = vpack.c.b16 %v3574, %v3573
    %v3664 = vpack.c.b16 %v3576, %v3575
    %v3665 = vpack.c.b16 %v3578, %v3577
    %v3666 = vpack.c.b16 %v3580, %v3579
    %v3667 = vpack.c.b16 %v3582, %v3581
    %v3668 = vpack.c.b16 %v3584, %v3583
    %v3669 = vpack.c.b16 %v3586, %v3585
    %v3670 = vpack.c.b16 %v3588, %v3587
    %v3671 = vpack.c.b16 %v3590, %v3589
    %v3672 = vpack.c.b16 %v3592, %v3591
    %v3673 = vpack.c.b16 %v3594, %v3593
    %v3674 = vpack.c.b16 %v3596, %v3595
    %v3675 = vpack.c.b16 %v3598, %v3597
    %v3676 = vpack.c.b16 %v3600, %v3599
    %v3677 = vpack.c.b16 %v3602, %v3601
    %v3678 = vpack.c.b16 %v3604, %v3603
    %v3679 = vpack.c.b16 %v3606, %v3605
    %v3680 = vpack.c.b16 %v3608, %v3607
    %v3681 = vpack.c.b16 %v3610, %v3609
    %v3682 = vpack.c.b16 %v3612, %v3611
    %v3683 = vpack.c.b16 %v3614, %v3613
    %v3684 = vpack.c.b16 %v3616, %v3615
    %v3685 = vpack.c.b16 %v3618, %v3617
    %v3686 = vpack.c.b16 %v3620, %v3619
    %v3687 = vpack.c.b16 %v3622, %v3621
    %v3688 = vpack.c.b16 %v3624, %v3623
    %v3689 = vpack.c.b16 %v3626, %v3625
    %v3690 = vpack.c.b16 %v3628, %v3627
    %v3691 = vpack.c.b16 %v3630, %v3629
    %v3692 = vpack.c.b16 %v3632, %v3631
    %v3693 = vpack.c.b16 %v3634, %v3633
    %v3694 = vpack.c.b16 %v3636, %v3635
    %v3695 = vpack.c.b16 %v3638, %v3637
    %v3696 = vpack.c.b16 %v3640, %v3639
    %3753 = vmatprep.subr.bf16.mxu0 0
    %3754 = vmatpush1.bf16.msra.mxu0 %v3641
    %3755 = vmatprep.subr.bf16.mxu0 0
    %3756 = vmatpush1.bf16.msra.mxu0 %v3642
    %3757 = vmatprep.subr.bf16.mxu0 0
    %3758 = vmatpush1.bf16.msra.mxu0 %v3643
    %3759 = vmatprep.subr.bf16.mxu0 0
    %3760 = vmatpush1.bf16.msra.mxu0 %v3644
    %3761 = vmatprep.subr.bf16.mxu0 0
    %3762 = vmatpush1.bf16.msra.mxu0 %v3645
    %3763 = vmatprep.subr.bf16.mxu0 0
    %3764 = vmatpush1.bf16.msra.mxu0 %v3646
    %3765 = vmatprep.subr.bf16.mxu0 0
    %3766 = vmatpush1.bf16.msra.mxu0 %v3647
    %3767 = vmatprep.subr.bf16.mxu0 0
    %3768 = vmatpush1.bf16.msra.mxu0 %v3648
    %3769 = vmatprep.subr.bf16.mxu0 0
    %3770 = vmatpush1.bf16.msra.mxu0 %v3649
    %3771 = vmatprep.subr.bf16.mxu0 0
    %3772 = vmatpush1.bf16.msra.mxu0 %v3650
    %3773 = vmatprep.subr.bf16.mxu0 0
    %3774 = vmatpush1.bf16.msra.mxu0 %v3651
    %3775 = vmatprep.subr.bf16.mxu0 0
    %3776 = vmatpush1.bf16.msra.mxu0 %v3652
    %3777 = vmatprep.subr.bf16.mxu0 0
    %3778 = vmatpush1.bf16.msra.mxu0 %v3653
    %3779 = vmatprep.subr.bf16.mxu0 0
    %3780 = vmatpush1.bf16.msra.mxu0 %v3654
    %3781 = vmatprep.subr.bf16.mxu0 0
    %3782 = vmatpush1.bf16.msra.mxu0 %v3655
    %3783 = vmatprep.subr.bf16.mxu0 0
    %3784 = vmatpush1.bf16.msra.mxu0 %v3656
    %3785 = vmatprep.mubr.bf16.mxu0 %v2019
    %3786 = vmatmul.mubr.bf16.gmra.mrb[0].mxu0 %v2018
    %v3787 = vpop.f32.mrb[0].mxu0
    %v3788 = vadd.f32 %v3415, %v3787
    %v3789 = vpop.f32.mrb[0].mxu0
    %v3790 = vpop.f32.mrb[0].mxu0
    %v3791 = vpop.f32.mrb[0].mxu0
    %3792 = vdwg.mxu0
    %3793 = vmatprep.subr.bf16.mxu0 0
    %3794 = vmatpush1.bf16.msra.mxu0 %v3657
    %3795 = vmatprep.subr.bf16.mxu0 0
    %3796 = vmatpush1.bf16.msra.mxu0 %v3658
    %3797 = vmatprep.subr.bf16.mxu0 0
    %3798 = vmatpush1.bf16.msra.mxu0 %v3659
    %3799 = vmatprep.subr.bf16.mxu0 0
    %3800 = vmatpush1.bf16.msra.mxu0 %v3660
    %3801 = vmatprep.subr.bf16.mxu0 0
    %3802 = vmatpush1.bf16.msra.mxu0 %v3661
    %3803 = vmatprep.subr.bf16.mxu0 0
    %3804 = vmatpush1.bf16.msra.mxu0 %v3662
    %3805 = vmatprep.subr.bf16.mxu0 0
    %3806 = vmatpush1.bf16.msra.mxu0 %v3663
    %3807 = vmatprep.subr.bf16.mxu0 0
    %3808 = vmatpush1.bf16.msra.mxu0 %v3664
    %3809 = vmatprep.subr.bf16.mxu0 0
    %3810 = vmatpush1.bf16.msra.mxu0 %v3665
    %3811 = vmatprep.subr.bf16.mxu0 0
    %3812 = vmatpush1.bf16.msra.mxu0 %v3666
    %3813 = vmatprep.subr.bf16.mxu0 0
    %3814 = vmatpush1.bf16.msra.mxu0 %v3667
    %3815 = vmatprep.subr.bf16.mxu0 0
    %3816 = vmatpush1.bf16.msra.mxu0 %v3668
    %3817 = vmatprep.subr.bf16.mxu0 0
    %3818 = vmatpush1.bf16.msra.mxu0 %v3669
    %3819 = vmatprep.subr.bf16.mxu0 0
    %3820 = vmatpush1.bf16.msra.mxu0 %v3670
    %3821 = vmatprep.subr.bf16.mxu0 0
    %3822 = vmatpush1.bf16.msra.mxu0 %v3671
    %3823 = vmatprep.subr.bf16.mxu0 0
    %3824 = vmatpush1.bf16.msra.mxu0 %v3672
    %3825 = vmatprep.mubr.bf16.mxu0 %v2021
    %3826 = vmatmul.mubr.bf16.gmra.mrb[0].mxu0 %v2020
    %v3827 = vpop.f32.mrb[0].mxu0
    %v3828 = vadd.f32 %v3788, %v3827
    %v3829 = vpop.f32.mrb[0].mxu0
    %v3830 = vpop.f32.mrb[0].mxu0
    %v3831 = vpop.f32.mrb[0].mxu0
    %3832 = vdwg.mxu0
    %3833 = vmatprep.subr.bf16.mxu0 0
    %3834 = vmatpush1.bf16.msra.mxu0 %v3673
    %3835 = vmatprep.subr.bf16.mxu0 0
    %3836 = vmatpush1.bf16.msra.mxu0 %v3674
    %3837 = vmatprep.subr.bf16.mxu0 0
    %3838 = vmatpush1.bf16.msra.mxu0 %v3675
    %3839 = vmatprep.subr.bf16.mxu0 0
    %3840 = vmatpush1.bf16.msra.mxu0 %v3676
    %3841 = vmatprep.subr.bf16.mxu0 0
    %3842 = vmatpush1.bf16.msra.mxu0 %v3677
    %3843 = vmatprep.subr.bf16.mxu0 0
    %3844 = vmatpush1.bf16.msra.mxu0 %v3678
    %3845 = vmatprep.subr.bf16.mxu0 0
    %3846 = vmatpush1.bf16.msra.mxu0 %v3679
    %3847 = vmatprep.subr.bf16.mxu0 0
    %3848 = vmatpush1.bf16.msra.mxu0 %v3680
    %3849 = vmatprep.subr.bf16.mxu0 0
    %3850 = vmatpush1.bf16.msra.mxu0 %v3681
    %3851 = vmatprep.subr.bf16.mxu0 0
    %3852 = vmatpush1.bf16.msra.mxu0 %v3682
    %3853 = vmatprep.subr.bf16.mxu0 0
    %3854 = vmatpush1.bf16.msra.mxu0 %v3683
    %3855 = vmatprep.subr.bf16.mxu0 0
    %3856 = vmatpush1.bf16.msra.mxu0 %v3684
    %3857 = vmatprep.subr.bf16.mxu0 0
    %3858 = vmatpush1.bf16.msra.mxu0 %v3685
    %3859 = vmatprep.subr.bf16.mxu0 0
    %3860 = vmatpush1.bf16.msra.mxu0 %v3686
    %3861 = vmatprep.subr.bf16.mxu0 0
    %3862 = vmatpush1.bf16.msra.mxu0 %v3687
    %3863 = vmatprep.subr.bf16.mxu0 0
    %3864 = vmatpush1.bf16.msra.mxu0 %v3688
    %3865 = vmatprep.mubr.bf16.mxu0 %v2503
    %3866 = vmatmul.mubr.bf16.gmra.mrb[0].mxu0 %v2502
    %v3867 = vpop.f32.mrb[0].mxu0
    %v3868 = vadd.f32 %v3828, %v3867
    %v3869 = vpop.f32.mrb[0].mxu0
    %v3870 = vpop.f32.mrb[0].mxu0
    %v3871 = vpop.f32.mrb[0].mxu0
    %3872 = vdwg.mxu0
    %3873 = vmatprep.subr.bf16.mxu0 0
    %3874 = vmatpush1.bf16.msra.mxu0 %v3689
    %3875 = vmatprep.subr.bf16.mxu0 0
    %3876 = vmatpush1.bf16.msra.mxu0 %v3690
    %3877 = vmatprep.subr.bf16.mxu0 0
    %3878 = vmatpush1.bf16.msra.mxu0 %v3691
    %3879 = vmatprep.subr.bf16.mxu0 0
    %3880 = vmatpush1.bf16.msra.mxu0 %v3692
    %3881 = vmatprep.subr.bf16.mxu0 0
    %3882 = vmatpush1.bf16.msra.mxu0 %v3693
    %3883 = vmatprep.subr.bf16.mxu0 0
    %3884 = vmatpush1.bf16.msra.mxu0 %v3694
    %3885 = vmatprep.subr.bf16.mxu0 0
    %3886 = vmatpush1.bf16.msra.mxu0 %v3695
    %3887 = vmatprep.subr.bf16.mxu0 0
    %3888 = vmatpush1.bf16.msra.mxu0 %v3696
    %3889 = vmatprep.subr.bf16.mxu0 0
    %3890 = vmatpush1.bf16.msra.mxu0 0
    %3891 = vmatprep.subr.bf16.mxu0 0
    %3892 = vmatpush1.bf16.msra.mxu0 0
    %3893 = vmatprep.subr.bf16.mxu0 0
    %3894 = vmatpush1.bf16.msra.mxu0 0
    %3895 = vmatprep.subr.bf16.mxu0 0
    %3896 = vmatpush1.bf16.msra.mxu0 0
    %3897 = vmatprep.subr.bf16.mxu0 0
    %3898 = vmatpush1.bf16.msra.mxu0 0
    %3899 = vmatprep.subr.bf16.mxu0 0
    %3900 = vmatpush1.bf16.msra.mxu0 0
    %3901 = vmatprep.subr.bf16.mxu0 0
    %3902 = vmatpush1.bf16.msra.mxu0 0
    %3903 = vmatprep.subr.bf16.mxu0 0
    %3904 = vmatpush1.bf16.msra.mxu0 0
    %3905 = vmatprep.mubr.bf16.mxu0 0
    %3906 = vmatmul.mubr.bf16.gmra.mrb[0].mxu0 %v2680
    %v3907 = vpop.f32.mrb[0].mxu0
    %v3908 = vadd.f32 %v3868, %v3907
    %v3909 = vpop.f32.mrb[0].mxu0
    %v3910 = vpop.f32.mrb[0].mxu0
    %v3911 = vpop.f32.mrb[0].mxu0
    %3912 = vdwg.mxu0
    %v3913 = vld [vmem:[%s1] sm:$0x3]
    %v3914 = vsub.f32 %v3908, %v3913
    %v3915 = vmul.f32 %v3914, %v3914
    %vm3916 = vcmask 1041408
    %v3917 = vsel %vm3916, %v3915, 0.0
    %3918 = vadd.xlane.f32.xlu0 %v3917
    %v3919 = vpop.xlane.xlu0 %3918
    %v3920 = vrot.slane %v3919, 4
    %v3921 = vadd.f32 %v3919, %v3920
    %v3922 = vrot.slane %v3921, 2
    %v3923 = vadd.f32 %v3921, %v3922
    %v3924 = vrot.slane %v3923, 1
    %v3925 = vadd.f32 %v3923, %v3924
    %s3926 = vtos %v3925
    %s3927 = smul.f32 %s3926, 0.05
    %s3928 = scalar_lea.smem [#allocation8], 0
    %3929 = sst [smem:[%s3928]] %s3927
    // Predicated region
    $region58: #{one_stage_d_forward.1} parent=1 // pred_check
      _
    $region59: #{one_stage_d_forward.1} parent=1 // pred_check_branch
      %3931 = sbr.rel (0) target = $region61
    $region60: #{one_stage_d_forward.1} parent=1 // pred_region
      %s3933 = ssub.s32 16, 16
      %3934 = vsyncadd [#allocation5], %s3933
      %3937 = dma.smem_to_hbm [#allocation8], 16, %s12, [#allocation5]
    $region61: #{one_stage_d_forward.1} parent=1 // pred_fallthru
      _
    // Predicated region
    $region62: #{one_stage_d_forward.1} parent=1 // pred_check
      _
    $region63: #{one_stage_d_forward.1} parent=1 // pred_check_branch
      %3939 = sbr.rel (0) target = $region65
    $region64: #{one_stage_d_forward.1} parent=1 // pred_region
      %s3941 = ssub.s32 32, 32
      %3942 = vsyncadd [#allocation4], %s3941
      %s3944 = sshll.u32 [#allocation9], 4
      %s3945 = int_to_ptr.vmem [resolvable:$true] %s3944
      %3947 = dma.vmem_to_hbm [thread:$0]  %s3945, 32, %s13, [#allocation4]
    $region65: #{one_stage_d_forward.1} parent=1 // pred_fallthru
      _
    // Predicated region
    $region66: #{one_stage_d_forward.1} parent=1 // pred_check
      _
    $region67: #{one_stage_d_forward.1} parent=1 // pred_check_branch
      %3949 = sbr.rel (0) target = $region69
    $region68: #{one_stage_d_forward.1} parent=1 // pred_region
      %3950 = dma.done [#allocation5], 16
    $region69: #{one_stage_d_forward.1} parent=1 // pred_fallthru
      _
    // Predicated region
    $region70: #{one_stage_d_forward.1} parent=1 // pred_check
      _
    $region71: #{one_stage_d_forward.1} parent=1 // pred_check_branch
      %3952 = sbr.rel (0) target = $region73
    $region72: #{one_stage_d_forward.1} parent=1 // pred_region
      %3953 = dma.done [#allocation4], 32
    $region73: #{one_stage_d_forward.1} parent=1 // pred_fallthru
      _
    %3954 = sfence
    %3955 = vsyncpa [#allocation3], 1
    %3956 = vsyncpa [#allocation7], 1
    %3957 = vsyncpa [#allocation4], 1
    %3958 = vsyncpa [#allocation5], 1

</llo_original>
